<compile_context>
chip_gen: v5e
topology: v5e:2x2
jax: 0.10.0
libtpu: 0.0.40
codegen_flags: <defaults>
</compile_context>

<pallas_src>
import functools

import numpy as np
import jax
import jax.numpy as jnp
from jax import lax
from jax.experimental import pallas as pl
from jax.experimental.pallas import tpu as pltpu


def _round_up(v, mult):
    return ((v + mult - 1) // mult) * mult


def _cdiv(a, b):
    return -(-a // b)


# ---------------------------------------------------------------------------
# Parameter packing (hoisted out of forward; do this once at init time)
# ---------------------------------------------------------------------------
def pack_tt_cores(cores, voc_quant, emb_quant, dtype=jnp.bfloat16):
    """Pack TT cores into the kernel layout.

    cores[k]: (r_k, n_k, m_k, r_{k+1})  ->  (n_k_pad, r_k * m_k * r_{k+1})
    rows enumerate the vocab digit i_k (zero-padded to a sublane multiple),
    columns are ordered (r_k slow, j_k, r_{k+1} fast).
    """
    d = len(cores)
    assert d >= 2, "TT embedding needs at least two cores"
    n = [int(v) for v in voc_quant]
    m = [int(v) for v in emb_quant]
    ranks = [int(c.shape[0]) for c in cores] + [int(cores[-1].shape[-1])]
    assert ranks[0] == 1 and ranks[-1] == 1, "boundary TT ranks must be 1"
    n_pad = [_round_up(v, 8) for v in n]

    cores_p = []
    for k in range(d):
        c = jnp.asarray(cores[k], dtype=dtype)
        cp = jnp.transpose(c, (1, 0, 2, 3)).reshape(n[k], ranks[k] * m[k] * ranks[k + 1])
        if n_pad[k] != n[k]:
            pad = jnp.zeros((n_pad[k] - n[k], cp.shape[1]), dtype)
            cp = jnp.concatenate([cp, pad], axis=0)
        cores_p.append(cp)

    return dict(cores_p=cores_p, d=d, n=tuple(n), n_pad=tuple(n_pad), m=tuple(m),
                ranks=tuple(ranks), voc=int(np.prod(n)), emb=int(np.prod(m)))


# ---------------------------------------------------------------------------
# Fused TT-embedding gather kernel
# ---------------------------------------------------------------------------
def _tt_gather_kernel(digits_ref, *refs, d, n_pad, m, ranks):
    """refs = (core_0, ..., core_{d-1}, out).

    digits_ref: (block_b, d) int32 vocab digits (last digit poisoned for pad/OOR).
    Running tensor t: (block_b, prefix * r_k), lanes ordered (j_0..j_{k-1}, r_k).
    Each core: one-hot over n_k (MXU) -> gsel (block_b, r_k*m_k*r_{k+1}), then a
    short unrolled VPU multiply-add chain contracts the TT rank and grows the
    embedding prefix in the lane dim.  Output is one dense (block_b, emb) block.
    """
    core_refs = refs[:d]
    out_ref = refs[d]
    f32 = jnp.float32
    block_b = digits_ref.shape[0]

    def select(k):
        cmat = core_refs[k][...]
        dig = digits_ref[:, k:k + 1]                                    # (block_b, 1)
        col = lax.broadcasted_iota(jnp.int32, (block_b, n_pad[k]), 1)
        oh = (col == dig).astype(cmat.dtype)                            # exact 0/1
        return jnp.dot(oh, cmat, preferred_element_type=f32)            # MXU, f32 acc

    # core 0: t lanes = (j_0, r_1)
    t = select(0)                                                        # (block_b, m0*r1)
    prefix = m[0]

    # cores 1..d-1: gsel lanes = (r_k, j_k, r_{k+1})
    for k in range(1, d):
        gsel = select(k)                                                 # (block_b, r_k*m_k*r_{k+1})
        r_in = ranks[k]
        q = m[k] * ranks[k + 1]
        pieces = []
        for p in range(prefix):
            base = p * r_in
            acc = t[:, base:base + 1] * gsel[:, 0:q]
            for r in range(1, r_in):
                acc = acc + t[:, base + r:base + r + 1] * gsel[:, r * q:(r + 1) * q]
            pieces.append(acc)                                           # (block_b, q)
        t = pieces[0] if len(pieces) == 1 else jnp.concatenate(pieces, axis=1)
        prefix *= m[k]

    out_ref[...] = t.astype(out_ref.dtype)                               # (block_b, emb)


# ---------------------------------------------------------------------------
# Simple VMEM model: pick block_b / vmem_limit per the actual footprint
# ---------------------------------------------------------------------------
def _vmem_model(params):
    csize = jnp.dtype(params["cores_p"][0].dtype).itemsize
    d, n_pad, m, ranks = params["d"], params["n_pad"], params["m"], params["ranks"]
    emb = params["emb"]
    cores_bytes = sum(int(np.prod(c.shape)) * csize for c in params["cores_p"])
    per_row = 4 * d + 2 * 4 * emb                      # digit block + 2x out block
    prefix = 1
    for k in range(d):
        per_row += csize * n_pad[k]                    # one-hot
        per_row += 4 * ranks[k] * m[k] * ranks[k + 1]  # gsel (f32 after the dot)
        per_row += 4 * prefix * ranks[k]               # incoming t
        prefix *= m[k]
        per_row += 4 * prefix * ranks[k + 1]           # outgoing t / pieces
    return cores_bytes, per_row


def _auto_block_b(batch, params, budget_bytes=40 * 2**20):
    cores_bytes, per_row = _vmem_model(params)
    budget = budget_bytes - 2 * cores_bytes            # conservative: cores may double-buffer
    cap = max(budget // max(per_row, 1), 8)
    block_b = int(min(1024, cap, _round_up(max(batch, 1), 8)))
    block_b = max(8, (block_b // 8) * 8)
    # keep >= 2 grid steps so the "parallel" axis can use both v7x TensorCores
    if batch > 8 and _cdiv(batch, block_b) < 2:
        block_b = max(8, _round_up(_cdiv(batch, 2), 8))
    return block_b


# ---------------------------------------------------------------------------
# Wrapper: TTEmbedding.forward (masks=None path)
# ---------------------------------------------------------------------------
def tt_embedding_forward(x, params, padding_idx=None, block_b=None):
    d, n, m = params["d"], params["n"], params["m"]
    ranks, voc, emb = params["ranks"], params["voc"], params["emb"]
    cores_p = params["cores_p"]

    xshape = list(x.shape)
    x_flat = jnp.reshape(x, (-1,)).astype(jnp.int32)
    batch = int(x_flat.shape[0])

    if block_b is None:
        block_b = _auto_block_b(batch, params)
    block_b = max(8, _round_up(int(block_b), 8))
    bp = _round_up(max(batch, 1), block_b)
    if bp != batch:
        # pad with an out-of-range index -> poisoned -> zero rows (sliced off below)
        x_flat = jnp.concatenate([x_flat, jnp.full((bp - batch,), voc, jnp.int32)])

    # tiny index plumbing: (bp, d) int32 vocab digits; poisoned last digit -> zero row
    strides = [int(np.prod(n[k + 1:])) for k in range(d)]
    digit_cols = [(x_flat // strides[k]) % n[k] for k in range(d)]
    bad = (x_flat < 0) | (x_flat >= voc)
    if padding_idx is not None:
        bad = bad | (x_flat == int(padding_idx))
    digit_cols[d - 1] = jnp.where(bad, jnp.int32(n[d - 1]), digit_cols[d - 1])
    digits = jnp.stack(digit_cols, axis=1).astype(jnp.int32)            # (bp, d)

    cores_bytes, per_row = _vmem_model(params)
    est = 2 * cores_bytes + block_b * per_row + (2 << 20)
    vmem_limit = int(min(max(2 * est, 32 * 2**20), 60 * 2**20))         # <= v7x physical VMEM

    kernel = functools.partial(_tt_gather_kernel, d=d, n_pad=params["n_pad"],
                               m=m, ranks=ranks)
    grid = (bp // block_b,)
    digit_spec = pl.BlockSpec((block_b, d), lambda g: (g, 0))
    out_spec = pl.BlockSpec((block_b, emb), lambda g: (g, 0))
    cparams = pltpu.CompilerParams(dimension_semantics=("parallel",),
                                   vmem_limit_bytes=vmem_limit)

    def run(core_pipeline_mode):
        core_specs = []
        for cp_arr in cores_p:
            if core_pipeline_mode is None:
                core_specs.append(pl.BlockSpec(cp_arr.shape, lambda g: (0, 0)))
            else:
                core_specs.append(pl.BlockSpec(cp_arr.shape, lambda g: (0, 0),
                                               pipeline_mode=core_pipeline_mode))
        fn = pl.pallas_call(
            kernel,
            out_shape=jax.ShapeDtypeStruct((bp, emb), jnp.float32),
            grid=grid,
            in_specs=[digit_spec] + core_specs,
            out_specs=out_spec,
            compiler_params=cparams,
        )
        return jax.block_until_ready(fn(digits, *cores_p))

    try:
        # resident cores (constant index_map): single-buffer them to save VMEM
        out = run(pl.Buffered(1))
    except Exception:
        # fallback if this Pallas build rejects single-buffered block specs
        out = run(None)

    rows = out[:batch]
    return rows.reshape(xshape + [emb])


# ---------------------------------------------------------------------------
# Deterministic parameter init (glorot-like, mirrors t3.glorot_initializer shapes)
# ---------------------------------------------------------------------------
def init_tt_cores(key, voc_quant, emb_quant, tt_rank):
    d = len(voc_quant)
    ranks = [1] + [tt_rank] * (d - 1) + [1]
    voc = int(np.prod(voc_quant))
    emb = int(np.prod(emb_quant))
    lamb = 2.0 / (voc + emb)
    core_std = lamb ** (0.5 / d)
    cores = []
    for k in range(d):
        key, sub = jax.random.split(key)
        shape = (ranks[k], voc_quant[k], emb_quant[k], ranks[k + 1])
        cores.append(core_std * jax.random.normal(sub, shape, dtype=jnp.float32))
    return cores


# ---------------------------------------------------------------------------
# Pure-JAX reference (same math as masked_full + full[x] + padding mask)
# ---------------------------------------------------------------------------
def _reference_rows(x, cores, voc_quant, emb_quant, padding_idx=None):
    d = len(cores)
    ranks = [c.shape[0] for c in cores] + [1]
    res = cores[0].reshape(-1, ranks[1])
    for i in range(1, d):
        res = res.reshape(-1, ranks[i]) @ cores[i].reshape(ranks[i], -1)
    inter = []
    for k in range(d):
        inter += [voc_quant[k], emb_quant[k]]
    res = res.reshape(inter)
    perm = list(range(0, 2 * d, 2)) + list(range(1, 2 * d, 2))
    voc = int(np.prod(voc_quant))
    emb = int(np.prod(emb_quant))
    full = jnp.transpose(res, perm).reshape(voc, emb)
    x_flat = x.reshape(-1)
    rows = full[x_flat]
    if padding_idx is not None:
        rows = jnp.where(x_flat[:, None] != padding_idx, rows, jnp.zeros_like(rows))
    return rows.reshape(list(x.shape) + [emb])


# ---------------------------------------------------------------------------
if __name__ == "__main__":
    # TTEmbedding(voc_size=64, emb_size=32, shape=[[4,4,4],[2,4,4]], d=3, tt_rank=8)
    voc_quant = [4, 4, 4]   # voc_size = 64
    emb_quant = [2, 4, 4]   # emb_size = 32
    tt_rank = 8
    voc_size = int(np.prod(voc_quant))
    emb_size = int(np.prod(emb_quant))

    key = jax.random.PRNGKey(0)
    k_cores, k_idx = jax.random.split(key)
    cores = init_tt_cores(k_cores, voc_quant, emb_quant, tt_rank)
    x = jax.random.randint(k_idx, (2, 8), 0, voc_size, dtype=jnp.int32)

    # f32 cores: exact one-hot selection, tight check against the reference
    params_f32 = pack_tt_cores(cores, voc_quant, emb_quant, dtype=jnp.float32)
    out = jax.block_until_ready(tt_embedding_forward(x, params_f32, padding_idx=None))
    assert out.shape == (2, 8, emb_size), out.shape
    ref = _reference_rows(x, cores, voc_quant, emb_quant, padding_idx=None)
    np.testing.assert_allclose(np.asarray(out), np.asarray(ref), rtol=1e-5, atol=1e-5)

    # padding_idx path (rows zeroed like torch), still f32 / tight
    pad = int(np.asarray(x)[0, 0])
    out_p = jax.block_until_ready(tt_embedding_forward(x, params_f32, padding_idx=pad))
    ref_p = _reference_rows(x, cores, voc_quant, emb_quant, padding_idx=pad)
    np.testing.assert_allclose(np.asarray(out_p), np.asarray(ref_p), rtol=1e-5, atol=1e-5)

    # bf16 MXU path (weight downcast is an accuracy tradeoff -> looser tolerance)
    params_bf16 = pack_tt_cores(cores, voc_quant, emb_quant, dtype=jnp.bfloat16)
    out_b = jax.block_until_ready(tt_embedding_forward(x, params_bf16, padding_idx=pad))
    np.testing.assert_allclose(np.asarray(out_b), np.asarray(ref_p), rtol=3e-2, atol=3e-2)

    print("KERNEL_OK")
</pallas_src>

<mosaic_0001>
module attributes {stable_mosaic.version = 11 : i64} {
  func.func @_tt_gather_kernel(%arg0: i32, %arg1: memref<8x3xi32, #tpu.memory_space<vmem>>, %arg2: memref<8x16xf32, #tpu.memory_space<vmem>>, %arg3: memref<8x256xf32, #tpu.memory_space<vmem>>, %arg4: memref<8x32xf32, #tpu.memory_space<vmem>>, %arg5: memref<8x32xf32, #tpu.memory_space<vmem>>) attributes {dimension_semantics = [#tpu.dimension_semantics<parallel>], iteration_bounds = array<i64: 2>, scalar_prefetch = 0 : i64, scratch_operands = 0 : i64, tpu.core_type = #tpu.core_type<tc>, window_params = [{transform_indices = @transform_0, window_bounds = array<i64: 8, 3>}, {pipeline_mode = #tpu.pipeline_mode<synchronous>, transform_indices = @transform_1, window_bounds = array<i64: 8, 16>}, {pipeline_mode = #tpu.pipeline_mode<synchronous>, transform_indices = @transform_2, window_bounds = array<i64: 8, 256>}, {pipeline_mode = #tpu.pipeline_mode<synchronous>, transform_indices = @transform_3, window_bounds = array<i64: 8, 32>}, {transform_indices = @transform_4, window_bounds = array<i64: 8, 32>}]} {
    %c0 = arith.constant 0 : index
    %c0_0 = arith.constant 0 : index
    %0 = vector.load %arg2[%c0, %c0_0] : memref<8x16xf32, #tpu.memory_space<vmem>>, vector<8x16xf32>
    %c0_1 = arith.constant 0 : index
    %c0_2 = arith.constant 0 : index
    %1 = vector.load %arg1[%c0_1, %c0_2] : memref<8x3xi32, #tpu.memory_space<vmem>>, vector<8x1xi32>
    %2 = tpu.iota {dimensions = array<i32: 1>} : vector<8x8xi32>
    %3 = vector.broadcast %1 : vector<8x1xi32> to vector<8x8xi32>
    %4 = arith.cmpi eq, %2, %3 : vector<8x8xi32>
    %5 = arith.extui %4 : vector<8x8xi1> to vector<8x8xi32>
    %6 = arith.sitofp %5 : vector<8x8xi32> to vector<8x8xf32>
    %cst = arith.constant dense<0.000000e+00> : vector<8x16xf32>
    %7 = tpu.matmul %6, %0, %cst {dimension_numbers = #tpu.dot_dimension_numbers<[1], [0], [0], [1], [0, 0, 1, 1], [], []>} : vector<8x8xf32>, vector<8x16xf32>, vector<8x16xf32> -> vector<8x16xf32>
    %c0_3 = arith.constant 0 : index
    %c0_4 = arith.constant 0 : index
    %8 = vector.load %arg3[%c0_3, %c0_4] : memref<8x256xf32, #tpu.memory_space<vmem>>, vector<8x256xf32>
    %c0_5 = arith.constant 0 : index
    %c1 = arith.constant 1 : index
    %9 = vector.load %arg1[%c0_5, %c1] : memref<8x3xi32, #tpu.memory_space<vmem>>, vector<8x1xi32>
    %10 = tpu.iota {dimensions = array<i32: 1>} : vector<8x8xi32>
    %11 = vector.broadcast %9 : vector<8x1xi32> to vector<8x8xi32>
    %12 = arith.cmpi eq, %10, %11 : vector<8x8xi32>
    %13 = arith.extui %12 : vector<8x8xi1> to vector<8x8xi32>
    %14 = arith.sitofp %13 : vector<8x8xi32> to vector<8x8xf32>
    %cst_6 = arith.constant dense<0.000000e+00> : vector<8x256xf32>
    %15 = tpu.matmul %14, %8, %cst_6 {dimension_numbers = #tpu.dot_dimension_numbers<[1], [0], [0], [1], [0, 0, 1, 1], [], []>} : vector<8x8xf32>, vector<8x256xf32>, vector<8x256xf32> -> vector<8x256xf32>
    %16 = vector.extract_strided_slice %7 {offsets = [0, 0], sizes = [8, 1], strides = [1, 1]} : vector<8x16xf32> to vector<8x1xf32>
    %17 = vector.extract_strided_slice %15 {offsets = [0, 0], sizes = [8, 32], strides = [1, 1]} : vector<8x256xf32> to vector<8x32xf32>
    %18 = vector.broadcast %16 : vector<8x1xf32> to vector<8x32xf32>
    %19 = arith.mulf %18, %17 : vector<8x32xf32>
    %20 = vector.extract_strided_slice %7 {offsets = [0, 1], sizes = [8, 1], strides = [1, 1]} : vector<8x16xf32> to vector<8x1xf32>
    %21 = vector.extract_strided_slice %15 {offsets = [0, 32], sizes = [8, 32], strides = [1, 1]} : vector<8x256xf32> to vector<8x32xf32>
    %22 = vector.broadcast %20 : vector<8x1xf32> to vector<8x32xf32>
    %23 = arith.mulf %22, %21 : vector<8x32xf32>
    %24 = arith.addf %19, %23 : vector<8x32xf32>
    %25 = vector.extract_strided_slice %7 {offsets = [0, 2], sizes = [8, 1], strides = [1, 1]} : vector<8x16xf32> to vector<8x1xf32>
    %26 = vector.extract_strided_slice %15 {offsets = [0, 64], sizes = [8, 32], strides = [1, 1]} : vector<8x256xf32> to vector<8x32xf32>
    %27 = vector.broadcast %25 : vector<8x1xf32> to vector<8x32xf32>
    %28 = arith.mulf %27, %26 : vector<8x32xf32>
    %29 = arith.addf %24, %28 : vector<8x32xf32>
    %30 = vector.extract_strided_slice %7 {offsets = [0, 3], sizes = [8, 1], strides = [1, 1]} : vector<8x16xf32> to vector<8x1xf32>
    %31 = vector.extract_strided_slice %15 {offsets = [0, 96], sizes = [8, 32], strides = [1, 1]} : vector<8x256xf32> to vector<8x32xf32>
    %32 = vector.broadcast %30 : vector<8x1xf32> to vector<8x32xf32>
    %33 = arith.mulf %32, %31 : vector<8x32xf32>
    %34 = arith.addf %29, %33 : vector<8x32xf32>
    %35 = vector.extract_strided_slice %7 {offsets = [0, 4], sizes = [8, 1], strides = [1, 1]} : vector<8x16xf32> to vector<8x1xf32>
    %36 = vector.extract_strided_slice %15 {offsets = [0, 128], sizes = [8, 32], strides = [1, 1]} : vector<8x256xf32> to vector<8x32xf32>
    %37 = vector.broadcast %35 : vector<8x1xf32> to vector<8x32xf32>
    %38 = arith.mulf %37, %36 : vector<8x32xf32>
    %39 = arith.addf %34, %38 : vector<8x32xf32>
    %40 = vector.extract_strided_slice %7 {offsets = [0, 5], sizes = [8, 1], strides = [1, 1]} : vector<8x16xf32> to vector<8x1xf32>
    %41 = vector.extract_strided_slice %15 {offsets = [0, 160], sizes = [8, 32], strides = [1, 1]} : vector<8x256xf32> to vector<8x32xf32>
    %42 = vector.broadcast %40 : vector<8x1xf32> to vector<8x32xf32>
    %43 = arith.mulf %42, %41 : vector<8x32xf32>
    %44 = arith.addf %39, %43 : vector<8x32xf32>
    %45 = vector.extract_strided_slice %7 {offsets = [0, 6], sizes = [8, 1], strides = [1, 1]} : vector<8x16xf32> to vector<8x1xf32>
    %46 = vector.extract_strided_slice %15 {offsets = [0, 192], sizes = [8, 32], strides = [1, 1]} : vector<8x256xf32> to vector<8x32xf32>
    %47 = vector.broadcast %45 : vector<8x1xf32> to vector<8x32xf32>
    %48 = arith.mulf %47, %46 : vector<8x32xf32>
    %49 = arith.addf %44, %48 : vector<8x32xf32>
    %50 = vector.extract_strided_slice %7 {offsets = [0, 7], sizes = [8, 1], strides = [1, 1]} : vector<8x16xf32> to vector<8x1xf32>
    %51 = vector.extract_strided_slice %15 {offsets = [0, 224], sizes = [8, 32], strides = [1, 1]} : vector<8x256xf32> to vector<8x32xf32>
    %52 = vector.broadcast %50 : vector<8x1xf32> to vector<8x32xf32>
    %53 = arith.mulf %52, %51 : vector<8x32xf32>
    %54 = arith.addf %49, %53 : vector<8x32xf32>
    %55 = vector.extract_strided_slice %7 {offsets = [0, 8], sizes = [8, 1], strides = [1, 1]} : vector<8x16xf32> to vector<8x1xf32>
    %56 = vector.extract_strided_slice %15 {offsets = [0, 0], sizes = [8, 32], strides = [1, 1]} : vector<8x256xf32> to vector<8x32xf32>
    %57 = vector.broadcast %55 : vector<8x1xf32> to vector<8x32xf32>
    %58 = arith.mulf %57, %56 : vector<8x32xf32>
    %59 = vector.extract_strided_slice %7 {offsets = [0, 9], sizes = [8, 1], strides = [1, 1]} : vector<8x16xf32> to vector<8x1xf32>
    %60 = vector.extract_strided_slice %15 {offsets = [0, 32], sizes = [8, 32], strides = [1, 1]} : vector<8x256xf32> to vector<8x32xf32>
    %61 = vector.broadcast %59 : vector<8x1xf32> to vector<8x32xf32>
    %62 = arith.mulf %61, %60 : vector<8x32xf32>
    %63 = arith.addf %58, %62 : vector<8x32xf32>
    %64 = vector.extract_strided_slice %7 {offsets = [0, 10], sizes = [8, 1], strides = [1, 1]} : vector<8x16xf32> to vector<8x1xf32>
    %65 = vector.extract_strided_slice %15 {offsets = [0, 64], sizes = [8, 32], strides = [1, 1]} : vector<8x256xf32> to vector<8x32xf32>
    %66 = vector.broadcast %64 : vector<8x1xf32> to vector<8x32xf32>
    %67 = arith.mulf %66, %65 : vector<8x32xf32>
    %68 = arith.addf %63, %67 : vector<8x32xf32>
    %69 = vector.extract_strided_slice %7 {offsets = [0, 11], sizes = [8, 1], strides = [1, 1]} : vector<8x16xf32> to vector<8x1xf32>
    %70 = vector.extract_strided_slice %15 {offsets = [0, 96], sizes = [8, 32], strides = [1, 1]} : vector<8x256xf32> to vector<8x32xf32>
    %71 = vector.broadcast %69 : vector<8x1xf32> to vector<8x32xf32>
    %72 = arith.mulf %71, %70 : vector<8x32xf32>
    %73 = arith.addf %68, %72 : vector<8x32xf32>
    %74 = vector.extract_strided_slice %7 {offsets = [0, 12], sizes = [8, 1], strides = [1, 1]} : vector<8x16xf32> to vector<8x1xf32>
    %75 = vector.extract_strided_slice %15 {offsets = [0, 128], sizes = [8, 32], strides = [1, 1]} : vector<8x256xf32> to vector<8x32xf32>
    %76 = vector.broadcast %74 : vector<8x1xf32> to vector<8x32xf32>
    %77 = arith.mulf %76, %75 : vector<8x32xf32>
    %78 = arith.addf %73, %77 : vector<8x32xf32>
    %79 = vector.extract_strided_slice %7 {offsets = [0, 13], sizes = [8, 1], strides = [1, 1]} : vector<8x16xf32> to vector<8x1xf32>
    %80 = vector.extract_strided_slice %15 {offsets = [0, 160], sizes = [8, 32], strides = [1, 1]} : vector<8x256xf32> to vector<8x32xf32>
    %81 = vector.broadcast %79 : vector<8x1xf32> to vector<8x32xf32>
    %82 = arith.mulf %81, %80 : vector<8x32xf32>
    %83 = arith.addf %78, %82 : vector<8x32xf32>
    %84 = vector.extract_strided_slice %7 {offsets = [0, 14], sizes = [8, 1], strides = [1, 1]} : vector<8x16xf32> to vector<8x1xf32>
    %85 = vector.extract_strided_slice %15 {offsets = [0, 192], sizes = [8, 32], strides = [1, 1]} : vector<8x256xf32> to vector<8x32xf32>
    %86 = vector.broadcast %84 : vector<8x1xf32> to vector<8x32xf32>
    %87 = arith.mulf %86, %85 : vector<8x32xf32>
    %88 = arith.addf %83, %87 : vector<8x32xf32>
    %89 = vector.extract_strided_slice %7 {offsets = [0, 15], sizes = [8, 1], strides = [1, 1]} : vector<8x16xf32> to vector<8x1xf32>
    %90 = vector.extract_strided_slice %15 {offsets = [0, 224], sizes = [8, 32], strides = [1, 1]} : vector<8x256xf32> to vector<8x32xf32>
    %91 = vector.broadcast %89 : vector<8x1xf32> to vector<8x32xf32>
    %92 = arith.mulf %91, %90 : vector<8x32xf32>
    %93 = arith.addf %88, %92 : vector<8x32xf32>
    %94 = tpu.concatenate %54, %93 in 1 : vector<8x32xf32>, vector<8x32xf32> -> vector<8x64xf32>
    %c0_7 = arith.constant 0 : index
    %c0_8 = arith.constant 0 : index
    %95 = vector.load %arg4[%c0_7, %c0_8] : memref<8x32xf32, #tpu.memory_space<vmem>>, vector<8x32xf32>
    %c0_9 = arith.constant 0 : index
    %c2 = arith.constant 2 : index
    %96 = vector.load %arg1[%c0_9, %c2] : memref<8x3xi32, #tpu.memory_space<vmem>>, vector<8x1xi32>
    %97 = tpu.iota {dimensions = array<i32: 1>} : vector<8x8xi32>
    %98 = vector.broadcast %96 : vector<8x1xi32> to vector<8x8xi32>
    %99 = arith.cmpi eq, %97, %98 : vector<8x8xi32>
    %100 = arith.extui %99 : vector<8x8xi1> to vector<8x8xi32>
    %101 = arith.sitofp %100 : vector<8x8xi32> to vector<8x8xf32>
    %cst_10 = arith.constant dense<0.000000e+00> : vector<8x32xf32>
    %102 = tpu.matmul %101, %95, %cst_10 {dimension_numbers = #tpu.dot_dimension_numbers<[1], [0], [0], [1], [0, 0, 1, 1], [], []>} : vector<8x8xf32>, vector<8x32xf32>, vector<8x32xf32> -> vector<8x32xf32>
    %103 = vector.extract_strided_slice %94 {offsets = [0, 0], sizes = [8, 1], strides = [1, 1]} : vector<8x64xf32> to vector<8x1xf32>
    %104 = vector.extract_strided_slice %102 {offsets = [0, 0], sizes = [8, 4], strides = [1, 1]} : vector<8x32xf32> to vector<8x4xf32>
    %105 = vector.broadcast %103 : vector<8x1xf32> to vector<8x4xf32>
    %106 = arith.mulf %105, %104 : vector<8x4xf32>
    %107 = vector.extract_strided_slice %94 {offsets = [0, 1], sizes = [8, 1], strides = [1, 1]} : vector<8x64xf32> to vector<8x1xf32>
    %108 = vector.extract_strided_slice %102 {offsets = [0, 4], sizes = [8, 4], strides = [1, 1]} : vector<8x32xf32> to vector<8x4xf32>
    %109 = vector.broadcast %107 : vector<8x1xf32> to vector<8x4xf32>
    %110 = arith.mulf %109, %108 : vector<8x4xf32>
    %111 = arith.addf %106, %110 : vector<8x4xf32>
    %112 = vector.extract_strided_slice %94 {offsets = [0, 2], sizes = [8, 1], strides = [1, 1]} : vector<8x64xf32> to vector<8x1xf32>
    %113 = vector.extract_strided_slice %102 {offsets = [0, 8], sizes = [8, 4], strides = [1, 1]} : vector<8x32xf32> to vector<8x4xf32>
    %114 = vector.broadcast %112 : vector<8x1xf32> to vector<8x4xf32>
    %115 = arith.mulf %114, %113 : vector<8x4xf32>
    %116 = arith.addf %111, %115 : vector<8x4xf32>
    %117 = vector.extract_strided_slice %94 {offsets = [0, 3], sizes = [8, 1], strides = [1, 1]} : vector<8x64xf32> to vector<8x1xf32>
    %118 = vector.extract_strided_slice %102 {offsets = [0, 12], sizes = [8, 4], strides = [1, 1]} : vector<8x32xf32> to vector<8x4xf32>
    %119 = vector.broadcast %117 : vector<8x1xf32> to vector<8x4xf32>
    %120 = arith.mulf %119, %118 : vector<8x4xf32>
    %121 = arith.addf %116, %120 : vector<8x4xf32>
    %122 = vector.extract_strided_slice %94 {offsets = [0, 4], sizes = [8, 1], strides = [1, 1]} : vector<8x64xf32> to vector<8x1xf32>
    %123 = vector.extract_strided_slice %102 {offsets = [0, 16], sizes = [8, 4], strides = [1, 1]} : vector<8x32xf32> to vector<8x4xf32>
    %124 = vector.broadcast %122 : vector<8x1xf32> to vector<8x4xf32>
    %125 = arith.mulf %124, %123 : vector<8x4xf32>
    %126 = arith.addf %121, %125 : vector<8x4xf32>
    %127 = vector.extract_strided_slice %94 {offsets = [0, 5], sizes = [8, 1], strides = [1, 1]} : vector<8x64xf32> to vector<8x1xf32>
    %128 = vector.extract_strided_slice %102 {offsets = [0, 20], sizes = [8, 4], strides = [1, 1]} : vector<8x32xf32> to vector<8x4xf32>
    %129 = vector.broadcast %127 : vector<8x1xf32> to vector<8x4xf32>
    %130 = arith.mulf %129, %128 : vector<8x4xf32>
    %131 = arith.addf %126, %130 : vector<8x4xf32>
    %132 = vector.extract_strided_slice %94 {offsets = [0, 6], sizes = [8, 1], strides = [1, 1]} : vector<8x64xf32> to vector<8x1xf32>
    %133 = vector.extract_strided_slice %102 {offsets = [0, 24], sizes = [8, 4], strides = [1, 1]} : vector<8x32xf32> to vector<8x4xf32>
    %134 = vector.broadcast %132 : vector<8x1xf32> to vector<8x4xf32>
    %135 = arith.mulf %134, %133 : vector<8x4xf32>
    %136 = arith.addf %131, %135 : vector<8x4xf32>
    %137 = vector.extract_strided_slice %94 {offsets = [0, 7], sizes = [8, 1], strides = [1, 1]} : vector<8x64xf32> to vector<8x1xf32>
    %138 = vector.extract_strided_slice %102 {offsets = [0, 28], sizes = [8, 4], strides = [1, 1]} : vector<8x32xf32> to vector<8x4xf32>
    %139 = vector.broadcast %137 : vector<8x1xf32> to vector<8x4xf32>
    %140 = arith.mulf %139, %138 : vector<8x4xf32>
    %141 = arith.addf %136, %140 : vector<8x4xf32>
    %142 = vector.extract_strided_slice %94 {offsets = [0, 8], sizes = [8, 1], strides = [1, 1]} : vector<8x64xf32> to vector<8x1xf32>
    %143 = vector.extract_strided_slice %102 {offsets = [0, 0], sizes = [8, 4], strides = [1, 1]} : vector<8x32xf32> to vector<8x4xf32>
    %144 = vector.broadcast %142 : vector<8x1xf32> to vector<8x4xf32>
    %145 = arith.mulf %144, %143 : vector<8x4xf32>
    %146 = vector.extract_strided_slice %94 {offsets = [0, 9], sizes = [8, 1], strides = [1, 1]} : vector<8x64xf32> to vector<8x1xf32>
    %147 = vector.extract_strided_slice %102 {offsets = [0, 4], sizes = [8, 4], strides = [1, 1]} : vector<8x32xf32> to vector<8x4xf32>
    %148 = vector.broadcast %146 : vector<8x1xf32> to vector<8x4xf32>
    %149 = arith.mulf %148, %147 : vector<8x4xf32>
    %150 = arith.addf %145, %149 : vector<8x4xf32>
    %151 = vector.extract_strided_slice %94 {offsets = [0, 10], sizes = [8, 1], strides = [1, 1]} : vector<8x64xf32> to vector<8x1xf32>
    %152 = vector.extract_strided_slice %102 {offsets = [0, 8], sizes = [8, 4], strides = [1, 1]} : vector<8x32xf32> to vector<8x4xf32>
    %153 = vector.broadcast %151 : vector<8x1xf32> to vector<8x4xf32>
    %154 = arith.mulf %153, %152 : vector<8x4xf32>
    %155 = arith.addf %150, %154 : vector<8x4xf32>
    %156 = vector.extract_strided_slice %94 {offsets = [0, 11], sizes = [8, 1], strides = [1, 1]} : vector<8x64xf32> to vector<8x1xf32>
    %157 = vector.extract_strided_slice %102 {offsets = [0, 12], sizes = [8, 4], strides = [1, 1]} : vector<8x32xf32> to vector<8x4xf32>
    %158 = vector.broadcast %156 : vector<8x1xf32> to vector<8x4xf32>
    %159 = arith.mulf %158, %157 : vector<8x4xf32>
    %160 = arith.addf %155, %159 : vector<8x4xf32>
    %161 = vector.extract_strided_slice %94 {offsets = [0, 12], sizes = [8, 1], strides = [1, 1]} : vector<8x64xf32> to vector<8x1xf32>
    %162 = vector.extract_strided_slice %102 {offsets = [0, 16], sizes = [8, 4], strides = [1, 1]} : vector<8x32xf32> to vector<8x4xf32>
    %163 = vector.broadcast %161 : vector<8x1xf32> to vector<8x4xf32>
    %164 = arith.mulf %163, %162 : vector<8x4xf32>
    %165 = arith.addf %160, %164 : vector<8x4xf32>
    %166 = vector.extract_strided_slice %94 {offsets = [0, 13], sizes = [8, 1], strides = [1, 1]} : vector<8x64xf32> to vector<8x1xf32>
    %167 = vector.extract_strided_slice %102 {offsets = [0, 20], sizes = [8, 4], strides = [1, 1]} : vector<8x32xf32> to vector<8x4xf32>
    %168 = vector.broadcast %166 : vector<8x1xf32> to vector<8x4xf32>
    %169 = arith.mulf %168, %167 : vector<8x4xf32>
    %170 = arith.addf %165, %169 : vector<8x4xf32>
    %171 = vector.extract_strided_slice %94 {offsets = [0, 14], sizes = [8, 1], strides = [1, 1]} : vector<8x64xf32> to vector<8x1xf32>
    %172 = vector.extract_strided_slice %102 {offsets = [0, 24], sizes = [8, 4], strides = [1, 1]} : vector<8x32xf32> to vector<8x4xf32>
    %173 = vector.broadcast %171 : vector<8x1xf32> to vector<8x4xf32>
    %174 = arith.mulf %173, %172 : vector<8x4xf32>
    %175 = arith.addf %170, %174 : vector<8x4xf32>
    %176 = vector.extract_strided_slice %94 {offsets = [0, 15], sizes = [8, 1], strides = [1, 1]} : vector<8x64xf32> to vector<8x1xf32>
    %177 = vector.extract_strided_slice %102 {offsets = [0, 28], sizes = [8, 4], strides = [1, 1]} : vector<8x32xf32> to vector<8x4xf32>
    %178 = vector.broadcast %176 : vector<8x1xf32> to vector<8x4xf32>
    %179 = arith.mulf %178, %177 : vector<8x4xf32>
    %180 = arith.addf %175, %179 : vector<8x4xf32>
    %181 = vector.extract_strided_slice %94 {offsets = [0, 16], sizes = [8, 1], strides = [1, 1]} : vector<8x64xf32> to vector<8x1xf32>
    %182 = vector.extract_strided_slice %102 {offsets = [0, 0], sizes = [8, 4], strides = [1, 1]} : vector<8x32xf32> to vector<8x4xf32>
    %183 = vector.broadcast %181 : vector<8x1xf32> to vector<8x4xf32>
    %184 = arith.mulf %183, %182 : vector<8x4xf32>
    %185 = vector.extract_strided_slice %94 {offsets = [0, 17], sizes = [8, 1], strides = [1, 1]} : vector<8x64xf32> to vector<8x1xf32>
    %186 = vector.extract_strided_slice %102 {offsets = [0, 4], sizes = [8, 4], strides = [1, 1]} : vector<8x32xf32> to vector<8x4xf32>
    %187 = vector.broadcast %185 : vector<8x1xf32> to vector<8x4xf32>
    %188 = arith.mulf %187, %186 : vector<8x4xf32>
    %189 = arith.addf %184, %188 : vector<8x4xf32>
    %190 = vector.extract_strided_slice %94 {offsets = [0, 18], sizes = [8, 1], strides = [1, 1]} : vector<8x64xf32> to vector<8x1xf32>
    %191 = vector.extract_strided_slice %102 {offsets = [0, 8], sizes = [8, 4], strides = [1, 1]} : vector<8x32xf32> to vector<8x4xf32>
    %192 = vector.broadcast %190 : vector<8x1xf32> to vector<8x4xf32>
    %193 = arith.mulf %192, %191 : vector<8x4xf32>
    %194 = arith.addf %189, %193 : vector<8x4xf32>
    %195 = vector.extract_strided_slice %94 {offsets = [0, 19], sizes = [8, 1], strides = [1, 1]} : vector<8x64xf32> to vector<8x1xf32>
    %196 = vector.extract_strided_slice %102 {offsets = [0, 12], sizes = [8, 4], strides = [1, 1]} : vector<8x32xf32> to vector<8x4xf32>
    %197 = vector.broadcast %195 : vector<8x1xf32> to vector<8x4xf32>
    %198 = arith.mulf %197, %196 : vector<8x4xf32>
    %199 = arith.addf %194, %198 : vector<8x4xf32>
    %200 = vector.extract_strided_slice %94 {offsets = [0, 20], sizes = [8, 1], strides = [1, 1]} : vector<8x64xf32> to vector<8x1xf32>
    %201 = vector.extract_strided_slice %102 {offsets = [0, 16], sizes = [8, 4], strides = [1, 1]} : vector<8x32xf32> to vector<8x4xf32>
    %202 = vector.broadcast %200 : vector<8x1xf32> to vector<8x4xf32>
    %203 = arith.mulf %202, %201 : vector<8x4xf32>
    %204 = arith.addf %199, %203 : vector<8x4xf32>
    %205 = vector.extract_strided_slice %94 {offsets = [0, 21], sizes = [8, 1], strides = [1, 1]} : vector<8x64xf32> to vector<8x1xf32>
    %206 = vector.extract_strided_slice %102 {offsets = [0, 20], sizes = [8, 4], strides = [1, 1]} : vector<8x32xf32> to vector<8x4xf32>
    %207 = vector.broadcast %205 : vector<8x1xf32> to vector<8x4xf32>
    %208 = arith.mulf %207, %206 : vector<8x4xf32>
    %209 = arith.addf %204, %208 : vector<8x4xf32>
    %210 = vector.extract_strided_slice %94 {offsets = [0, 22], sizes = [8, 1], strides = [1, 1]} : vector<8x64xf32> to vector<8x1xf32>
    %211 = vector.extract_strided_slice %102 {offsets = [0, 24], sizes = [8, 4], strides = [1, 1]} : vector<8x32xf32> to vector<8x4xf32>
    %212 = vector.broadcast %210 : vector<8x1xf32> to vector<8x4xf32>
    %213 = arith.mulf %212, %211 : vector<8x4xf32>
    %214 = arith.addf %209, %213 : vector<8x4xf32>
    %215 = vector.extract_strided_slice %94 {offsets = [0, 23], sizes = [8, 1], strides = [1, 1]} : vector<8x64xf32> to vector<8x1xf32>
    %216 = vector.extract_strided_slice %102 {offsets = [0, 28], sizes = [8, 4], strides = [1, 1]} : vector<8x32xf32> to vector<8x4xf32>
    %217 = vector.broadcast %215 : vector<8x1xf32> to vector<8x4xf32>
    %218 = arith.mulf %217, %216 : vector<8x4xf32>
    %219 = arith.addf %214, %218 : vector<8x4xf32>
    %220 = vector.extract_strided_slice %94 {offsets = [0, 24], sizes = [8, 1], strides = [1, 1]} : vector<8x64xf32> to vector<8x1xf32>
    %221 = vector.extract_strided_slice %102 {offsets = [0, 0], sizes = [8, 4], strides = [1, 1]} : vector<8x32xf32> to vector<8x4xf32>
    %222 = vector.broadcast %220 : vector<8x1xf32> to vector<8x4xf32>
    %223 = arith.mulf %222, %221 : vector<8x4xf32>
    %224 = vector.extract_strided_slice %94 {offsets = [0, 25], sizes = [8, 1], strides = [1, 1]} : vector<8x64xf32> to vector<8x1xf32>
    %225 = vector.extract_strided_slice %102 {offsets = [0, 4], sizes = [8, 4], strides = [1, 1]} : vector<8x32xf32> to vector<8x4xf32>
    %226 = vector.broadcast %224 : vector<8x1xf32> to vector<8x4xf32>
    %227 = arith.mulf %226, %225 : vector<8x4xf32>
    %228 = arith.addf %223, %227 : vector<8x4xf32>
    %229 = vector.extract_strided_slice %94 {offsets = [0, 26], sizes = [8, 1], strides = [1, 1]} : vector<8x64xf32> to vector<8x1xf32>
    %230 = vector.extract_strided_slice %102 {offsets = [0, 8], sizes = [8, 4], strides = [1, 1]} : vector<8x32xf32> to vector<8x4xf32>
    %231 = vector.broadcast %229 : vector<8x1xf32> to vector<8x4xf32>
    %232 = arith.mulf %231, %230 : vector<8x4xf32>
    %233 = arith.addf %228, %232 : vector<8x4xf32>
    %234 = vector.extract_strided_slice %94 {offsets = [0, 27], sizes = [8, 1], strides = [1, 1]} : vector<8x64xf32> to vector<8x1xf32>
    %235 = vector.extract_strided_slice %102 {offsets = [0, 12], sizes = [8, 4], strides = [1, 1]} : vector<8x32xf32> to vector<8x4xf32>
    %236 = vector.broadcast %234 : vector<8x1xf32> to vector<8x4xf32>
    %237 = arith.mulf %236, %235 : vector<8x4xf32>
    %238 = arith.addf %233, %237 : vector<8x4xf32>
    %239 = vector.extract_strided_slice %94 {offsets = [0, 28], sizes = [8, 1], strides = [1, 1]} : vector<8x64xf32> to vector<8x1xf32>
    %240 = vector.extract_strided_slice %102 {offsets = [0, 16], sizes = [8, 4], strides = [1, 1]} : vector<8x32xf32> to vector<8x4xf32>
    %241 = vector.broadcast %239 : vector<8x1xf32> to vector<8x4xf32>
    %242 = arith.mulf %241, %240 : vector<8x4xf32>
    %243 = arith.addf %238, %242 : vector<8x4xf32>
    %244 = vector.extract_strided_slice %94 {offsets = [0, 29], sizes = [8, 1], strides = [1, 1]} : vector<8x64xf32> to vector<8x1xf32>
    %245 = vector.extract_strided_slice %102 {offsets = [0, 20], sizes = [8, 4], strides = [1, 1]} : vector<8x32xf32> to vector<8x4xf32>
    %246 = vector.broadcast %244 : vector<8x1xf32> to vector<8x4xf32>
    %247 = arith.mulf %246, %245 : vector<8x4xf32>
    %248 = arith.addf %243, %247 : vector<8x4xf32>
    %249 = vector.extract_strided_slice %94 {offsets = [0, 30], sizes = [8, 1], strides = [1, 1]} : vector<8x64xf32> to vector<8x1xf32>
    %250 = vector.extract_strided_slice %102 {offsets = [0, 24], sizes = [8, 4], strides = [1, 1]} : vector<8x32xf32> to vector<8x4xf32>
    %251 = vector.broadcast %249 : vector<8x1xf32> to vector<8x4xf32>
    %252 = arith.mulf %251, %250 : vector<8x4xf32>
    %253 = arith.addf %248, %252 : vector<8x4xf32>
    %254 = vector.extract_strided_slice %94 {offsets = [0, 31], sizes = [8, 1], strides = [1, 1]} : vector<8x64xf32> to vector<8x1xf32>
    %255 = vector.extract_strided_slice %102 {offsets = [0, 28], sizes = [8, 4], strides = [1, 1]} : vector<8x32xf32> to vector<8x4xf32>
    %256 = vector.broadcast %254 : vector<8x1xf32> to vector<8x4xf32>
    %257 = arith.mulf %256, %255 : vector<8x4xf32>
    %258 = arith.addf %253, %257 : vector<8x4xf32>
    %259 = vector.extract_strided_slice %94 {offsets = [0, 32], sizes = [8, 1], strides = [1, 1]} : vector<8x64xf32> to vector<8x1xf32>
    %260 = vector.extract_strided_slice %102 {offsets = [0, 0], sizes = [8, 4], strides = [1, 1]} : vector<8x32xf32> to vector<8x4xf32>
    %261 = vector.broadcast %259 : vector<8x1xf32> to vector<8x4xf32>
    %262 = arith.mulf %261, %260 : vector<8x4xf32>
    %263 = vector.extract_strided_slice %94 {offsets = [0, 33], sizes = [8, 1], strides = [1, 1]} : vector<8x64xf32> to vector<8x1xf32>
    %264 = vector.extract_strided_slice %102 {offsets = [0, 4], sizes = [8, 4], strides = [1, 1]} : vector<8x32xf32> to vector<8x4xf32>
    %265 = vector.broadcast %263 : vector<8x1xf32> to vector<8x4xf32>
    %266 = arith.mulf %265, %264 : vector<8x4xf32>
    %267 = arith.addf %262, %266 : vector<8x4xf32>
    %268 = vector.extract_strided_slice %94 {offsets = [0, 34], sizes = [8, 1], strides = [1, 1]} : vector<8x64xf32> to vector<8x1xf32>
    %269 = vector.extract_strided_slice %102 {offsets = [0, 8], sizes = [8, 4], strides = [1, 1]} : vector<8x32xf32> to vector<8x4xf32>
    %270 = vector.broadcast %268 : vector<8x1xf32> to vector<8x4xf32>
    %271 = arith.mulf %270, %269 : vector<8x4xf32>
    %272 = arith.addf %267, %271 : vector<8x4xf32>
    %273 = vector.extract_strided_slice %94 {offsets = [0, 35], sizes = [8, 1], strides = [1, 1]} : vector<8x64xf32> to vector<8x1xf32>
    %274 = vector.extract_strided_slice %102 {offsets = [0, 12], sizes = [8, 4], strides = [1, 1]} : vector<8x32xf32> to vector<8x4xf32>
    %275 = vector.broadcast %273 : vector<8x1xf32> to vector<8x4xf32>
    %276 = arith.mulf %275, %274 : vector<8x4xf32>
    %277 = arith.addf %272, %276 : vector<8x4xf32>
    %278 = vector.extract_strided_slice %94 {offsets = [0, 36], sizes = [8, 1], strides = [1, 1]} : vector<8x64xf32> to vector<8x1xf32>
    %279 = vector.extract_strided_slice %102 {offsets = [0, 16], sizes = [8, 4], strides = [1, 1]} : vector<8x32xf32> to vector<8x4xf32>
    %280 = vector.broadcast %278 : vector<8x1xf32> to vector<8x4xf32>
    %281 = arith.mulf %280, %279 : vector<8x4xf32>
    %282 = arith.addf %277, %281 : vector<8x4xf32>
    %283 = vector.extract_strided_slice %94 {offsets = [0, 37], sizes = [8, 1], strides = [1, 1]} : vector<8x64xf32> to vector<8x1xf32>
    %284 = vector.extract_strided_slice %102 {offsets = [0, 20], sizes = [8, 4], strides = [1, 1]} : vector<8x32xf32> to vector<8x4xf32>
    %285 = vector.broadcast %283 : vector<8x1xf32> to vector<8x4xf32>
    %286 = arith.mulf %285, %284 : vector<8x4xf32>
    %287 = arith.addf %282, %286 : vector<8x4xf32>
    %288 = vector.extract_strided_slice %94 {offsets = [0, 38], sizes = [8, 1], strides = [1, 1]} : vector<8x64xf32> to vector<8x1xf32>
    %289 = vector.extract_strided_slice %102 {offsets = [0, 24], sizes = [8, 4], strides = [1, 1]} : vector<8x32xf32> to vector<8x4xf32>
    %290 = vector.broadcast %288 : vector<8x1xf32> to vector<8x4xf32>
    %291 = arith.mulf %290, %289 : vector<8x4xf32>
    %292 = arith.addf %287, %291 : vector<8x4xf32>
    %293 = vector.extract_strided_slice %94 {offsets = [0, 39], sizes = [8, 1], strides = [1, 1]} : vector<8x64xf32> to vector<8x1xf32>
    %294 = vector.extract_strided_slice %102 {offsets = [0, 28], sizes = [8, 4], strides = [1, 1]} : vector<8x32xf32> to vector<8x4xf32>
    %295 = vector.broadcast %293 : vector<8x1xf32> to vector<8x4xf32>
    %296 = arith.mulf %295, %294 : vector<8x4xf32>
    %297 = arith.addf %292, %296 : vector<8x4xf32>
    %298 = vector.extract_strided_slice %94 {offsets = [0, 40], sizes = [8, 1], strides = [1, 1]} : vector<8x64xf32> to vector<8x1xf32>
    %299 = vector.extract_strided_slice %102 {offsets = [0, 0], sizes = [8, 4], strides = [1, 1]} : vector<8x32xf32> to vector<8x4xf32>
    %300 = vector.broadcast %298 : vector<8x1xf32> to vector<8x4xf32>
    %301 = arith.mulf %300, %299 : vector<8x4xf32>
    %302 = vector.extract_strided_slice %94 {offsets = [0, 41], sizes = [8, 1], strides = [1, 1]} : vector<8x64xf32> to vector<8x1xf32>
    %303 = vector.extract_strided_slice %102 {offsets = [0, 4], sizes = [8, 4], strides = [1, 1]} : vector<8x32xf32> to vector<8x4xf32>
    %304 = vector.broadcast %302 : vector<8x1xf32> to vector<8x4xf32>
    %305 = arith.mulf %304, %303 : vector<8x4xf32>
    %306 = arith.addf %301, %305 : vector<8x4xf32>
    %307 = vector.extract_strided_slice %94 {offsets = [0, 42], sizes = [8, 1], strides = [1, 1]} : vector<8x64xf32> to vector<8x1xf32>
    %308 = vector.extract_strided_slice %102 {offsets = [0, 8], sizes = [8, 4], strides = [1, 1]} : vector<8x32xf32> to vector<8x4xf32>
    %309 = vector.broadcast %307 : vector<8x1xf32> to vector<8x4xf32>
    %310 = arith.mulf %309, %308 : vector<8x4xf32>
    %311 = arith.addf %306, %310 : vector<8x4xf32>
    %312 = vector.extract_strided_slice %94 {offsets = [0, 43], sizes = [8, 1], strides = [1, 1]} : vector<8x64xf32> to vector<8x1xf32>
    %313 = vector.extract_strided_slice %102 {offsets = [0, 12], sizes = [8, 4], strides = [1, 1]} : vector<8x32xf32> to vector<8x4xf32>
    %314 = vector.broadcast %312 : vector<8x1xf32> to vector<8x4xf32>
    %315 = arith.mulf %314, %313 : vector<8x4xf32>
    %316 = arith.addf %311, %315 : vector<8x4xf32>
    %317 = vector.extract_strided_slice %94 {offsets = [0, 44], sizes = [8, 1], strides = [1, 1]} : vector<8x64xf32> to vector<8x1xf32>
    %318 = vector.extract_strided_slice %102 {offsets = [0, 16], sizes = [8, 4], strides = [1, 1]} : vector<8x32xf32> to vector<8x4xf32>
    %319 = vector.broadcast %317 : vector<8x1xf32> to vector<8x4xf32>
    %320 = arith.mulf %319, %318 : vector<8x4xf32>
    %321 = arith.addf %316, %320 : vector<8x4xf32>
    %322 = vector.extract_strided_slice %94 {offsets = [0, 45], sizes = [8, 1], strides = [1, 1]} : vector<8x64xf32> to vector<8x1xf32>
    %323 = vector.extract_strided_slice %102 {offsets = [0, 20], sizes = [8, 4], strides = [1, 1]} : vector<8x32xf32> to vector<8x4xf32>
    %324 = vector.broadcast %322 : vector<8x1xf32> to vector<8x4xf32>
    %325 = arith.mulf %324, %323 : vector<8x4xf32>
    %326 = arith.addf %321, %325 : vector<8x4xf32>
    %327 = vector.extract_strided_slice %94 {offsets = [0, 46], sizes = [8, 1], strides = [1, 1]} : vector<8x64xf32> to vector<8x1xf32>
    %328 = vector.extract_strided_slice %102 {offsets = [0, 24], sizes = [8, 4], strides = [1, 1]} : vector<8x32xf32> to vector<8x4xf32>
    %329 = vector.broadcast %327 : vector<8x1xf32> to vector<8x4xf32>
    %330 = arith.mulf %329, %328 : vector<8x4xf32>
    %331 = arith.addf %326, %330 : vector<8x4xf32>
    %332 = vector.extract_strided_slice %94 {offsets = [0, 47], sizes = [8, 1], strides = [1, 1]} : vector<8x64xf32> to vector<8x1xf32>
    %333 = vector.extract_strided_slice %102 {offsets = [0, 28], sizes = [8, 4], strides = [1, 1]} : vector<8x32xf32> to vector<8x4xf32>
    %334 = vector.broadcast %332 : vector<8x1xf32> to vector<8x4xf32>
    %335 = arith.mulf %334, %333 : vector<8x4xf32>
    %336 = arith.addf %331, %335 : vector<8x4xf32>
    %337 = vector.extract_strided_slice %94 {offsets = [0, 48], sizes = [8, 1], strides = [1, 1]} : vector<8x64xf32> to vector<8x1xf32>
    %338 = vector.extract_strided_slice %102 {offsets = [0, 0], sizes = [8, 4], strides = [1, 1]} : vector<8x32xf32> to vector<8x4xf32>
    %339 = vector.broadcast %337 : vector<8x1xf32> to vector<8x4xf32>
    %340 = arith.mulf %339, %338 : vector<8x4xf32>
    %341 = vector.extract_strided_slice %94 {offsets = [0, 49], sizes = [8, 1], strides = [1, 1]} : vector<8x64xf32> to vector<8x1xf32>
    %342 = vector.extract_strided_slice %102 {offsets = [0, 4], sizes = [8, 4], strides = [1, 1]} : vector<8x32xf32> to vector<8x4xf32>
    %343 = vector.broadcast %341 : vector<8x1xf32> to vector<8x4xf32>
    %344 = arith.mulf %343, %342 : vector<8x4xf32>
    %345 = arith.addf %340, %344 : vector<8x4xf32>
    %346 = vector.extract_strided_slice %94 {offsets = [0, 50], sizes = [8, 1], strides = [1, 1]} : vector<8x64xf32> to vector<8x1xf32>
    %347 = vector.extract_strided_slice %102 {offsets = [0, 8], sizes = [8, 4], strides = [1, 1]} : vector<8x32xf32> to vector<8x4xf32>
    %348 = vector.broadcast %346 : vector<8x1xf32> to vector<8x4xf32>
    %349 = arith.mulf %348, %347 : vector<8x4xf32>
    %350 = arith.addf %345, %349 : vector<8x4xf32>
    %351 = vector.extract_strided_slice %94 {offsets = [0, 51], sizes = [8, 1], strides = [1, 1]} : vector<8x64xf32> to vector<8x1xf32>
    %352 = vector.extract_strided_slice %102 {offsets = [0, 12], sizes = [8, 4], strides = [1, 1]} : vector<8x32xf32> to vector<8x4xf32>
    %353 = vector.broadcast %351 : vector<8x1xf32> to vector<8x4xf32>
    %354 = arith.mulf %353, %352 : vector<8x4xf32>
    %355 = arith.addf %350, %354 : vector<8x4xf32>
    %356 = vector.extract_strided_slice %94 {offsets = [0, 52], sizes = [8, 1], strides = [1, 1]} : vector<8x64xf32> to vector<8x1xf32>
    %357 = vector.extract_strided_slice %102 {offsets = [0, 16], sizes = [8, 4], strides = [1, 1]} : vector<8x32xf32> to vector<8x4xf32>
    %358 = vector.broadcast %356 : vector<8x1xf32> to vector<8x4xf32>
    %359 = arith.mulf %358, %357 : vector<8x4xf32>
    %360 = arith.addf %355, %359 : vector<8x4xf32>
    %361 = vector.extract_strided_slice %94 {offsets = [0, 53], sizes = [8, 1], strides = [1, 1]} : vector<8x64xf32> to vector<8x1xf32>
    %362 = vector.extract_strided_slice %102 {offsets = [0, 20], sizes = [8, 4], strides = [1, 1]} : vector<8x32xf32> to vector<8x4xf32>
    %363 = vector.broadcast %361 : vector<8x1xf32> to vector<8x4xf32>
    %364 = arith.mulf %363, %362 : vector<8x4xf32>
    %365 = arith.addf %360, %364 : vector<8x4xf32>
    %366 = vector.extract_strided_slice %94 {offsets = [0, 54], sizes = [8, 1], strides = [1, 1]} : vector<8x64xf32> to vector<8x1xf32>
    %367 = vector.extract_strided_slice %102 {offsets = [0, 24], sizes = [8, 4], strides = [1, 1]} : vector<8x32xf32> to vector<8x4xf32>
    %368 = vector.broadcast %366 : vector<8x1xf32> to vector<8x4xf32>
    %369 = arith.mulf %368, %367 : vector<8x4xf32>
    %370 = arith.addf %365, %369 : vector<8x4xf32>
    %371 = vector.extract_strided_slice %94 {offsets = [0, 55], sizes = [8, 1], strides = [1, 1]} : vector<8x64xf32> to vector<8x1xf32>
    %372 = vector.extract_strided_slice %102 {offsets = [0, 28], sizes = [8, 4], strides = [1, 1]} : vector<8x32xf32> to vector<8x4xf32>
    %373 = vector.broadcast %371 : vector<8x1xf32> to vector<8x4xf32>
    %374 = arith.mulf %373, %372 : vector<8x4xf32>
    %375 = arith.addf %370, %374 : vector<8x4xf32>
    %376 = vector.extract_strided_slice %94 {offsets = [0, 56], sizes = [8, 1], strides = [1, 1]} : vector<8x64xf32> to vector<8x1xf32>
    %377 = vector.extract_strided_slice %102 {offsets = [0, 0], sizes = [8, 4], strides = [1, 1]} : vector<8x32xf32> to vector<8x4xf32>
    %378 = vector.broadcast %376 : vector<8x1xf32> to vector<8x4xf32>
    %379 = arith.mulf %378, %377 : vector<8x4xf32>
    %380 = vector.extract_strided_slice %94 {offsets = [0, 57], sizes = [8, 1], strides = [1, 1]} : vector<8x64xf32> to vector<8x1xf32>
    %381 = vector.extract_strided_slice %102 {offsets = [0, 4], sizes = [8, 4], strides = [1, 1]} : vector<8x32xf32> to vector<8x4xf32>
    %382 = vector.broadcast %380 : vector<8x1xf32> to vector<8x4xf32>
    %383 = arith.mulf %382, %381 : vector<8x4xf32>
    %384 = arith.addf %379, %383 : vector<8x4xf32>
    %385 = vector.extract_strided_slice %94 {offsets = [0, 58], sizes = [8, 1], strides = [1, 1]} : vector<8x64xf32> to vector<8x1xf32>
    %386 = vector.extract_strided_slice %102 {offsets = [0, 8], sizes = [8, 4], strides = [1, 1]} : vector<8x32xf32> to vector<8x4xf32>
    %387 = vector.broadcast %385 : vector<8x1xf32> to vector<8x4xf32>
    %388 = arith.mulf %387, %386 : vector<8x4xf32>
    %389 = arith.addf %384, %388 : vector<8x4xf32>
    %390 = vector.extract_strided_slice %94 {offsets = [0, 59], sizes = [8, 1], strides = [1, 1]} : vector<8x64xf32> to vector<8x1xf32>
    %391 = vector.extract_strided_slice %102 {offsets = [0, 12], sizes = [8, 4], strides = [1, 1]} : vector<8x32xf32> to vector<8x4xf32>
    %392 = vector.broadcast %390 : vector<8x1xf32> to vector<8x4xf32>
    %393 = arith.mulf %392, %391 : vector<8x4xf32>
    %394 = arith.addf %389, %393 : vector<8x4xf32>
    %395 = vector.extract_strided_slice %94 {offsets = [0, 60], sizes = [8, 1], strides = [1, 1]} : vector<8x64xf32> to vector<8x1xf32>
    %396 = vector.extract_strided_slice %102 {offsets = [0, 16], sizes = [8, 4], strides = [1, 1]} : vector<8x32xf32> to vector<8x4xf32>
    %397 = vector.broadcast %395 : vector<8x1xf32> to vector<8x4xf32>
    %398 = arith.mulf %397, %396 : vector<8x4xf32>
    %399 = arith.addf %394, %398 : vector<8x4xf32>
    %400 = vector.extract_strided_slice %94 {offsets = [0, 61], sizes = [8, 1], strides = [1, 1]} : vector<8x64xf32> to vector<8x1xf32>
    %401 = vector.extract_strided_slice %102 {offsets = [0, 20], sizes = [8, 4], strides = [1, 1]} : vector<8x32xf32> to vector<8x4xf32>
    %402 = vector.broadcast %400 : vector<8x1xf32> to vector<8x4xf32>
    %403 = arith.mulf %402, %401 : vector<8x4xf32>
    %404 = arith.addf %399, %403 : vector<8x4xf32>
    %405 = vector.extract_strided_slice %94 {offsets = [0, 62], sizes = [8, 1], strides = [1, 1]} : vector<8x64xf32> to vector<8x1xf32>
    %406 = vector.extract_strided_slice %102 {offsets = [0, 24], sizes = [8, 4], strides = [1, 1]} : vector<8x32xf32> to vector<8x4xf32>
    %407 = vector.broadcast %405 : vector<8x1xf32> to vector<8x4xf32>
    %408 = arith.mulf %407, %406 : vector<8x4xf32>
    %409 = arith.addf %404, %408 : vector<8x4xf32>
    %410 = vector.extract_strided_slice %94 {offsets = [0, 63], sizes = [8, 1], strides = [1, 1]} : vector<8x64xf32> to vector<8x1xf32>
    %411 = vector.extract_strided_slice %102 {offsets = [0, 28], sizes = [8, 4], strides = [1, 1]} : vector<8x32xf32> to vector<8x4xf32>
    %412 = vector.broadcast %410 : vector<8x1xf32> to vector<8x4xf32>
    %413 = arith.mulf %412, %411 : vector<8x4xf32>
    %414 = arith.addf %409, %413 : vector<8x4xf32>
    %415 = tpu.concatenate %141, %180, %219, %258, %297, %336, %375, %414 in 1 : vector<8x4xf32>, vector<8x4xf32>, vector<8x4xf32>, vector<8x4xf32>, vector<8x4xf32>, vector<8x4xf32>, vector<8x4xf32>, vector<8x4xf32> -> vector<8x32xf32>
    %c0_11 = arith.constant 0 : index
    %c0_12 = arith.constant 0 : index
    %416 = vector.load %arg5[%c0_11, %c0_12] : memref<8x32xf32, #tpu.memory_space<vmem>>, vector<8x32xf32>
    tpu.vector_store %arg5[%c0_11, %c0_12], %415 {strides = array<i32>} : memref<8x32xf32, #tpu.memory_space<vmem>>, vector<8x32xf32>,
    return
  }
  func.func @transform_0(%arg0: i32) -> (i32, i32) {
    %c0_i32 = arith.constant 0 : i32
    %c0_i32_0 = arith.constant 0 : i32
    return %arg0, %c0_i32 : i32, i32
  }
  func.func @transform_1(%arg0: i32) -> (i32, i32) {
    %c0_i32 = arith.constant 0 : i32
    %c0_i32_0 = arith.constant 0 : i32
    %c0_i32_1 = arith.constant 0 : i32
    return %c0_i32, %c0_i32_0 : i32, i32
  }
  func.func @transform_2(%arg0: i32) -> (i32, i32) {
    %c0_i32 = arith.constant 0 : i32
    %c0_i32_0 = arith.constant 0 : i32
    %c0_i32_1 = arith.constant 0 : i32
    return %c0_i32, %c0_i32_0 : i32, i32
  }
  func.func @transform_3(%arg0: i32) -> (i32, i32) {
    %c0_i32 = arith.constant 0 : i32
    %c0_i32_0 = arith.constant 0 : i32
    %c0_i32_1 = arith.constant 0 : i32
    return %c0_i32, %c0_i32_0 : i32, i32
  }
  func.func @transform_4(%arg0: i32) -> (i32, i32) {
    %c0_i32 = arith.constant 0 : i32
    %c0_i32_0 = arith.constant 0 : i32
    return %arg0, %c0_i32 : i32, i32
  }
}

module attributes {stable_mosaic.version = 11 : i64} {
  func.func @_tt_gather_kernel(%arg0: i32, %arg1: memref<8x3xi32, #tpu.memory_space<vmem>>, %arg2: memref<8x16xf32, #tpu.memory_space<vmem>>, %arg3: memref<8x256xf32, #tpu.memory_space<vmem>>, %arg4: memref<8x32xf32, #tpu.memory_space<vmem>>, %arg5: memref<8x32xf32, #tpu.memory_space<vmem>>) attributes {dimension_semantics = [#tpu.dimension_semantics<parallel>], iteration_bounds = array<i64: 2>, scalar_prefetch = 0 : i64, scratch_operands = 0 : i64, tpu.core_type = #tpu.core_type<tc>, window_params = [{transform_indices = @transform_0, window_bounds = array<i64: 8, 3>}, {pipeline_mode = #tpu.pipeline_mode<synchronous>, transform_indices = @transform_1, window_bounds = array<i64: 8, 16>}, {pipeline_mode = #tpu.pipeline_mode<synchronous>, transform_indices = @transform_2, window_bounds = array<i64: 8, 256>}, {pipeline_mode = #tpu.pipeline_mode<synchronous>, transform_indices = @transform_3, window_bounds = array<i64: 8, 32>}, {transform_indices = @transform_4, window_bounds = array<i64: 8, 32>}]} {
    %c0 = arith.constant 0 : index
    %c0_0 = arith.constant 0 : index
    %0 = vector.load %arg2[%c0, %c0_0] : memref<8x16xf32, #tpu.memory_space<vmem>>, vector<8x16xf32>
    %c0_1 = arith.constant 0 : index
    %c0_2 = arith.constant 0 : index
    %1 = vector.load %arg1[%c0_1, %c0_2] : memref<8x3xi32, #tpu.memory_space<vmem>>, vector<8x1xi32>
    %2 = tpu.iota {dimensions = array<i32: 1>} : vector<8x8xi32>
    %3 = vector.broadcast %1 : vector<8x1xi32> to vector<8x8xi32>
    %4 = arith.cmpi eq, %2, %3 : vector<8x8xi32>
    %5 = arith.extui %4 : vector<8x8xi1> to vector<8x8xi32>
    %6 = arith.sitofp %5 : vector<8x8xi32> to vector<8x8xf32>
    %cst = arith.constant dense<0.000000e+00> : vector<8x16xf32>
    %7 = tpu.matmul %6, %0, %cst {dimension_numbers = #tpu.dot_dimension_numbers<[1], [0], [0], [1], [0, 0, 1, 1], [], []>} : vector<8x8xf32>, vector<8x16xf32>, vector<8x16xf32> -> vector<8x16xf32>
    %c0_3 = arith.constant 0 : index
    %c0_4 = arith.constant 0 : index
    %8 = vector.load %arg3[%c0_3, %c0_4] : memref<8x256xf32, #tpu.memory_space<vmem>>, vector<8x256xf32>
    %c0_5 = arith.constant 0 : index
    %c1 = arith.constant 1 : index
    %9 = vector.load %arg1[%c0_5, %c1] : memref<8x3xi32, #tpu.memory_space<vmem>>, vector<8x1xi32>
    %10 = tpu.iota {dimensions = array<i32: 1>} : vector<8x8xi32>
    %11 = vector.broadcast %9 : vector<8x1xi32> to vector<8x8xi32>
    %12 = arith.cmpi eq, %10, %11 : vector<8x8xi32>
    %13 = arith.extui %12 : vector<8x8xi1> to vector<8x8xi32>
    %14 = arith.sitofp %13 : vector<8x8xi32> to vector<8x8xf32>
    %cst_6 = arith.constant dense<0.000000e+00> : vector<8x256xf32>
    %15 = tpu.matmul %14, %8, %cst_6 {dimension_numbers = #tpu.dot_dimension_numbers<[1], [0], [0], [1], [0, 0, 1, 1], [], []>} : vector<8x8xf32>, vector<8x256xf32>, vector<8x256xf32> -> vector<8x256xf32>
    %16 = vector.extract_strided_slice %7 {offsets = [0, 0], sizes = [8, 1], strides = [1, 1]} : vector<8x16xf32> to vector<8x1xf32>
    %17 = vector.extract_strided_slice %15 {offsets = [0, 0], sizes = [8, 32], strides = [1, 1]} : vector<8x256xf32> to vector<8x32xf32>
    %18 = vector.broadcast %16 : vector<8x1xf32> to vector<8x32xf32>
    %19 = arith.mulf %18, %17 : vector<8x32xf32>
    %20 = vector.extract_strided_slice %7 {offsets = [0, 1], sizes = [8, 1], strides = [1, 1]} : vector<8x16xf32> to vector<8x1xf32>
    %21 = vector.extract_strided_slice %15 {offsets = [0, 32], sizes = [8, 32], strides = [1, 1]} : vector<8x256xf32> to vector<8x32xf32>
    %22 = vector.broadcast %20 : vector<8x1xf32> to vector<8x32xf32>
    %23 = arith.mulf %22, %21 : vector<8x32xf32>
    %24 = arith.addf %19, %23 : vector<8x32xf32>
    %25 = vector.extract_strided_slice %7 {offsets = [0, 2], sizes = [8, 1], strides = [1, 1]} : vector<8x16xf32> to vector<8x1xf32>
    %26 = vector.extract_strided_slice %15 {offsets = [0, 64], sizes = [8, 32], strides = [1, 1]} : vector<8x256xf32> to vector<8x32xf32>
    %27 = vector.broadcast %25 : vector<8x1xf32> to vector<8x32xf32>
    %28 = arith.mulf %27, %26 : vector<8x32xf32>
    %29 = arith.addf %24, %28 : vector<8x32xf32>
    %30 = vector.extract_strided_slice %7 {offsets = [0, 3], sizes = [8, 1], strides = [1, 1]} : vector<8x16xf32> to vector<8x1xf32>
    %31 = vector.extract_strided_slice %15 {offsets = [0, 96], sizes = [8, 32], strides = [1, 1]} : vector<8x256xf32> to vector<8x32xf32>
    %32 = vector.broadcast %30 : vector<8x1xf32> to vector<8x32xf32>
    %33 = arith.mulf %32, %31 : vector<8x32xf32>
    %34 = arith.addf %29, %33 : vector<8x32xf32>
    %35 = vector.extract_strided_slice %7 {offsets = [0, 4], sizes = [8, 1], strides = [1, 1]} : vector<8x16xf32> to vector<8x1xf32>
    %36 = vector.extract_strided_slice %15 {offsets = [0, 128], sizes = [8, 32], strides = [1, 1]} : vector<8x256xf32> to vector<8x32xf32>
    %37 = vector.broadcast %35 : vector<8x1xf32> to vector<8x32xf32>
    %38 = arith.mulf %37, %36 : vector<8x32xf32>
    %39 = arith.addf %34, %38 : vector<8x32xf32>
    %40 = vector.extract_strided_slice %7 {offsets = [0, 5], sizes = [8, 1], strides = [1, 1]} : vector<8x16xf32> to vector<8x1xf32>
    %41 = vector.extract_strided_slice %15 {offsets = [0, 160], sizes = [8, 32], strides = [1, 1]} : vector<8x256xf32> to vector<8x32xf32>
    %42 = vector.broadcast %40 : vector<8x1xf32> to vector<8x32xf32>
    %43 = arith.mulf %42, %41 : vector<8x32xf32>
    %44 = arith.addf %39, %43 : vector<8x32xf32>
    %45 = vector.extract_strided_slice %7 {offsets = [0, 6], sizes = [8, 1], strides = [1, 1]} : vector<8x16xf32> to vector<8x1xf32>
    %46 = vector.extract_strided_slice %15 {offsets = [0, 192], sizes = [8, 32], strides = [1, 1]} : vector<8x256xf32> to vector<8x32xf32>
    %47 = vector.broadcast %45 : vector<8x1xf32> to vector<8x32xf32>
    %48 = arith.mulf %47, %46 : vector<8x32xf32>
    %49 = arith.addf %44, %48 : vector<8x32xf32>
    %50 = vector.extract_strided_slice %7 {offsets = [0, 7], sizes = [8, 1], strides = [1, 1]} : vector<8x16xf32> to vector<8x1xf32>
    %51 = vector.extract_strided_slice %15 {offsets = [0, 224], sizes = [8, 32], strides = [1, 1]} : vector<8x256xf32> to vector<8x32xf32>
    %52 = vector.broadcast %50 : vector<8x1xf32> to vector<8x32xf32>
    %53 = arith.mulf %52, %51 : vector<8x32xf32>
    %54 = arith.addf %49, %53 : vector<8x32xf32>
    %55 = vector.extract_strided_slice %7 {offsets = [0, 8], sizes = [8, 1], strides = [1, 1]} : vector<8x16xf32> to vector<8x1xf32>
    %56 = vector.extract_strided_slice %15 {offsets = [0, 0], sizes = [8, 32], strides = [1, 1]} : vector<8x256xf32> to vector<8x32xf32>
    %57 = vector.broadcast %55 : vector<8x1xf32> to vector<8x32xf32>
    %58 = arith.mulf %57, %56 : vector<8x32xf32>
    %59 = vector.extract_strided_slice %7 {offsets = [0, 9], sizes = [8, 1], strides = [1, 1]} : vector<8x16xf32> to vector<8x1xf32>
    %60 = vector.extract_strided_slice %15 {offsets = [0, 32], sizes = [8, 32], strides = [1, 1]} : vector<8x256xf32> to vector<8x32xf32>
    %61 = vector.broadcast %59 : vector<8x1xf32> to vector<8x32xf32>
    %62 = arith.mulf %61, %60 : vector<8x32xf32>
    %63 = arith.addf %58, %62 : vector<8x32xf32>
    %64 = vector.extract_strided_slice %7 {offsets = [0, 10], sizes = [8, 1], strides = [1, 1]} : vector<8x16xf32> to vector<8x1xf32>
    %65 = vector.extract_strided_slice %15 {offsets = [0, 64], sizes = [8, 32], strides = [1, 1]} : vector<8x256xf32> to vector<8x32xf32>
    %66 = vector.broadcast %64 : vector<8x1xf32> to vector<8x32xf32>
    %67 = arith.mulf %66, %65 : vector<8x32xf32>
    %68 = arith.addf %63, %67 : vector<8x32xf32>
    %69 = vector.extract_strided_slice %7 {offsets = [0, 11], sizes = [8, 1], strides = [1, 1]} : vector<8x16xf32> to vector<8x1xf32>
    %70 = vector.extract_strided_slice %15 {offsets = [0, 96], sizes = [8, 32], strides = [1, 1]} : vector<8x256xf32> to vector<8x32xf32>
    %71 = vector.broadcast %69 : vector<8x1xf32> to vector<8x32xf32>
    %72 = arith.mulf %71, %70 : vector<8x32xf32>
    %73 = arith.addf %68, %72 : vector<8x32xf32>
    %74 = vector.extract_strided_slice %7 {offsets = [0, 12], sizes = [8, 1], strides = [1, 1]} : vector<8x16xf32> to vector<8x1xf32>
    %75 = vector.extract_strided_slice %15 {offsets = [0, 128], sizes = [8, 32], strides = [1, 1]} : vector<8x256xf32> to vector<8x32xf32>
    %76 = vector.broadcast %74 : vector<8x1xf32> to vector<8x32xf32>
    %77 = arith.mulf %76, %75 : vector<8x32xf32>
    %78 = arith.addf %73, %77 : vector<8x32xf32>
    %79 = vector.extract_strided_slice %7 {offsets = [0, 13], sizes = [8, 1], strides = [1, 1]} : vector<8x16xf32> to vector<8x1xf32>
    %80 = vector.extract_strided_slice %15 {offsets = [0, 160], sizes = [8, 32], strides = [1, 1]} : vector<8x256xf32> to vector<8x32xf32>
    %81 = vector.broadcast %79 : vector<8x1xf32> to vector<8x32xf32>
    %82 = arith.mulf %81, %80 : vector<8x32xf32>
    %83 = arith.addf %78, %82 : vector<8x32xf32>
    %84 = vector.extract_strided_slice %7 {offsets = [0, 14], sizes = [8, 1], strides = [1, 1]} : vector<8x16xf32> to vector<8x1xf32>
    %85 = vector.extract_strided_slice %15 {offsets = [0, 192], sizes = [8, 32], strides = [1, 1]} : vector<8x256xf32> to vector<8x32xf32>
    %86 = vector.broadcast %84 : vector<8x1xf32> to vector<8x32xf32>
    %87 = arith.mulf %86, %85 : vector<8x32xf32>
    %88 = arith.addf %83, %87 : vector<8x32xf32>
    %89 = vector.extract_strided_slice %7 {offsets = [0, 15], sizes = [8, 1], strides = [1, 1]} : vector<8x16xf32> to vector<8x1xf32>
    %90 = vector.extract_strided_slice %15 {offsets = [0, 224], sizes = [8, 32], strides = [1, 1]} : vector<8x256xf32> to vector<8x32xf32>
    %91 = vector.broadcast %89 : vector<8x1xf32> to vector<8x32xf32>
    %92 = arith.mulf %91, %90 : vector<8x32xf32>
    %93 = arith.addf %88, %92 : vector<8x32xf32>
    %94 = tpu.concatenate %54, %93 in 1 : vector<8x32xf32>, vector<8x32xf32> -> vector<8x64xf32>
    %c0_7 = arith.constant 0 : index
    %c0_8 = arith.constant 0 : index
    %95 = vector.load %arg4[%c0_7, %c0_8] : memref<8x32xf32, #tpu.memory_space<vmem>>, vector<8x32xf32>
    %c0_9 = arith.constant 0 : index
    %c2 = arith.constant 2 : index
    %96 = vector.load %arg1[%c0_9, %c2] : memref<8x3xi32, #tpu.memory_space<vmem>>, vector<8x1xi32>
    %97 = tpu.iota {dimensions = array<i32: 1>} : vector<8x8xi32>
    %98 = vector.broadcast %96 : vector<8x1xi32> to vector<8x8xi32>
    %99 = arith.cmpi eq, %97, %98 : vector<8x8xi32>
    %100 = arith.extui %99 : vector<8x8xi1> to vector<8x8xi32>
    %101 = arith.sitofp %100 : vector<8x8xi32> to vector<8x8xf32>
    %cst_10 = arith.constant dense<0.000000e+00> : vector<8x32xf32>
    %102 = tpu.matmul %101, %95, %cst_10 {dimension_numbers = #tpu.dot_dimension_numbers<[1], [0], [0], [1], [0, 0, 1, 1], [], []>} : vector<8x8xf32>, vector<8x32xf32>, vector<8x32xf32> -> vector<8x32xf32>
    %103 = vector.extract_strided_slice %94 {offsets = [0, 0], sizes = [8, 1], strides = [1, 1]} : vector<8x64xf32> to vector<8x1xf32>
    %104 = vector.extract_strided_slice %102 {offsets = [0, 0], sizes = [8, 4], strides = [1, 1]} : vector<8x32xf32> to vector<8x4xf32>
    %105 = vector.broadcast %103 : vector<8x1xf32> to vector<8x4xf32>
    %106 = arith.mulf %105, %104 : vector<8x4xf32>
    %107 = vector.extract_strided_slice %94 {offsets = [0, 1], sizes = [8, 1], strides = [1, 1]} : vector<8x64xf32> to vector<8x1xf32>
    %108 = vector.extract_strided_slice %102 {offsets = [0, 4], sizes = [8, 4], strides = [1, 1]} : vector<8x32xf32> to vector<8x4xf32>
    %109 = vector.broadcast %107 : vector<8x1xf32> to vector<8x4xf32>
    %110 = arith.mulf %109, %108 : vector<8x4xf32>
    %111 = arith.addf %106, %110 : vector<8x4xf32>
    %112 = vector.extract_strided_slice %94 {offsets = [0, 2], sizes = [8, 1], strides = [1, 1]} : vector<8x64xf32> to vector<8x1xf32>
    %113 = vector.extract_strided_slice %102 {offsets = [0, 8], sizes = [8, 4], strides = [1, 1]} : vector<8x32xf32> to vector<8x4xf32>
    %114 = vector.broadcast %112 : vector<8x1xf32> to vector<8x4xf32>
    %115 = arith.mulf %114, %113 : vector<8x4xf32>
    %116 = arith.addf %111, %115 : vector<8x4xf32>
    %117 = vector.extract_strided_slice %94 {offsets = [0, 3], sizes = [8, 1], strides = [1, 1]} : vector<8x64xf32> to vector<8x1xf32>
    %118 = vector.extract_strided_slice %102 {offsets = [0, 12], sizes = [8, 4], strides = [1, 1]} : vector<8x32xf32> to vector<8x4xf32>
    %119 = vector.broadcast %117 : vector<8x1xf32> to vector<8x4xf32>
    %120 = arith.mulf %119, %118 : vector<8x4xf32>
    %121 = arith.addf %116, %120 : vector<8x4xf32>
    %122 = vector.extract_strided_slice %94 {offsets = [0, 4], sizes = [8, 1], strides = [1, 1]} : vector<8x64xf32> to vector<8x1xf32>
    %123 = vector.extract_strided_slice %102 {offsets = [0, 16], sizes = [8, 4], strides = [1, 1]} : vector<8x32xf32> to vector<8x4xf32>
    %124 = vector.broadcast %122 : vector<8x1xf32> to vector<8x4xf32>
    %125 = arith.mulf %124, %123 : vector<8x4xf32>
    %126 = arith.addf %121, %125 : vector<8x4xf32>
    %127 = vector.extract_strided_slice %94 {offsets = [0, 5], sizes = [8, 1], strides = [1, 1]} : vector<8x64xf32> to vector<8x1xf32>
    %128 = vector.extract_strided_slice %102 {offsets = [0, 20], sizes = [8, 4], strides = [1, 1]} : vector<8x32xf32> to vector<8x4xf32>
    %129 = vector.broadcast %127 : vector<8x1xf32> to vector<8x4xf32>
    %130 = arith.mulf %129, %128 : vector<8x4xf32>
    %131 = arith.addf %126, %130 : vector<8x4xf32>
    %132 = vector.extract_strided_slice %94 {offsets = [0, 6], sizes = [8, 1], strides = [1, 1]} : vector<8x64xf32> to vector<8x1xf32>
    %133 = vector.extract_strided_slice %102 {offsets = [0, 24], sizes = [8, 4], strides = [1, 1]} : vector<8x32xf32> to vector<8x4xf32>
    %134 = vector.broadcast %132 : vector<8x1xf32> to vector<8x4xf32>
    %135 = arith.mulf %134, %133 : vector<8x4xf32>
    %136 = arith.addf %131, %135 : vector<8x4xf32>
    %137 = vector.extract_strided_slice %94 {offsets = [0, 7], sizes = [8, 1], strides = [1, 1]} : vector<8x64xf32> to vector<8x1xf32>
    %138 = vector.extract_strided_slice %102 {offsets = [0, 28], sizes = [8, 4], strides = [1, 1]} : vector<8x32xf32> to vector<8x4xf32>
    %139 = vector.broadcast %137 : vector<8x1xf32> to vector<8x4xf32>
    %140 = arith.mulf %139, %138 : vector<8x4xf32>
    %141 = arith.addf %136, %140 : vector<8x4xf32>
    %142 = vector.extract_strided_slice %94 {offsets = [0, 8], sizes = [8, 1], strides = [1, 1]} : vector<8x64xf32> to vector<8x1xf32>
    %143 = vector.extract_strided_slice %102 {offsets = [0, 0], sizes = [8, 4], strides = [1, 1]} : vector<8x32xf32> to vector<8x4xf32>
    %144 = vector.broadcast %142 : vector<8x1xf32> to vector<8x4xf32>
    %145 = arith.mulf %144, %143 : vector<8x4xf32>
    %146 = vector.extract_strided_slice %94 {offsets = [0, 9], sizes = [8, 1], strides = [1, 1]} : vector<8x64xf32> to vector<8x1xf32>
    %147 = vector.extract_strided_slice %102 {offsets = [0, 4], sizes = [8, 4], strides = [1, 1]} : vector<8x32xf32> to vector<8x4xf32>
    %148 = vector.broadcast %146 : vector<8x1xf32> to vector<8x4xf32>
    %149 = arith.mulf %148, %147 : vector<8x4xf32>
    %150 = arith.addf %145, %149 : vector<8x4xf32>
    %151 = vector.extract_strided_slice %94 {offsets = [0, 10], sizes = [8, 1], strides = [1, 1]} : vector<8x64xf32> to vector<8x1xf32>
    %152 = vector.extract_strided_slice %102 {offsets = [0, 8], sizes = [8, 4], strides = [1, 1]} : vector<8x32xf32> to vector<8x4xf32>
    %153 = vector.broadcast %151 : vector<8x1xf32> to vector<8x4xf32>
    %154 = arith.mulf %153, %152 : vector<8x4xf32>
    %155 = arith.addf %150, %154 : vector<8x4xf32>
    %156 = vector.extract_strided_slice %94 {offsets = [0, 11], sizes = [8, 1], strides = [1, 1]} : vector<8x64xf32> to vector<8x1xf32>
    %157 = vector.extract_strided_slice %102 {offsets = [0, 12], sizes = [8, 4], strides = [1, 1]} : vector<8x32xf32> to vector<8x4xf32>
    %158 = vector.broadcast %156 : vector<8x1xf32> to vector<8x4xf32>
    %159 = arith.mulf %158, %157 : vector<8x4xf32>
    %160 = arith.addf %155, %159 : vector<8x4xf32>
    %161 = vector.extract_strided_slice %94 {offsets = [0, 12], sizes = [8, 1], strides = [1, 1]} : vector<8x64xf32> to vector<8x1xf32>
    %162 = vector.extract_strided_slice %102 {offsets = [0, 16], sizes = [8, 4], strides = [1, 1]} : vector<8x32xf32> to vector<8x4xf32>
    %163 = vector.broadcast %161 : vector<8x1xf32> to vector<8x4xf32>
    %164 = arith.mulf %163, %162 : vector<8x4xf32>
    %165 = arith.addf %160, %164 : vector<8x4xf32>
    %166 = vector.extract_strided_slice %94 {offsets = [0, 13], sizes = [8, 1], strides = [1, 1]} : vector<8x64xf32> to vector<8x1xf32>
    %167 = vector.extract_strided_slice %102 {offsets = [0, 20], sizes = [8, 4], strides = [1, 1]} : vector<8x32xf32> to vector<8x4xf32>
    %168 = vector.broadcast %166 : vector<8x1xf32> to vector<8x4xf32>
    %169 = arith.mulf %168, %167 : vector<8x4xf32>
    %170 = arith.addf %165, %169 : vector<8x4xf32>
    %171 = vector.extract_strided_slice %94 {offsets = [0, 14], sizes = [8, 1], strides = [1, 1]} : vector<8x64xf32> to vector<8x1xf32>
    %172 = vector.extract_strided_slice %102 {offsets = [0, 24], sizes = [8, 4], strides = [1, 1]} : vector<8x32xf32> to vector<8x4xf32>
    %173 = vector.broadcast %171 : vector<8x1xf32> to vector<8x4xf32>
    %174 = arith.mulf %173, %172 : vector<8x4xf32>
    %175 = arith.addf %170, %174 : vector<8x4xf32>
    %176 = vector.extract_strided_slice %94 {offsets = [0, 15], sizes = [8, 1], strides = [1, 1]} : vector<8x64xf32> to vector<8x1xf32>
    %177 = vector.extract_strided_slice %102 {offsets = [0, 28], sizes = [8, 4], strides = [1, 1]} : vector<8x32xf32> to vector<8x4xf32>
    %178 = vector.broadcast %176 : vector<8x1xf32> to vector<8x4xf32>
    %179 = arith.mulf %178, %177 : vector<8x4xf32>
    %180 = arith.addf %175, %179 : vector<8x4xf32>
    %181 = vector.extract_strided_slice %94 {offsets = [0, 16], sizes = [8, 1], strides = [1, 1]} : vector<8x64xf32> to vector<8x1xf32>
    %182 = vector.extract_strided_slice %102 {offsets = [0, 0], sizes = [8, 4], strides = [1, 1]} : vector<8x32xf32> to vector<8x4xf32>
    %183 = vector.broadcast %181 : vector<8x1xf32> to vector<8x4xf32>
    %184 = arith.mulf %183, %182 : vector<8x4xf32>
    %185 = vector.extract_strided_slice %94 {offsets = [0, 17], sizes = [8, 1], strides = [1, 1]} : vector<8x64xf32> to vector<8x1xf32>
    %186 = vector.extract_strided_slice %102 {offsets = [0, 4], sizes = [8, 4], strides = [1, 1]} : vector<8x32xf32> to vector<8x4xf32>
    %187 = vector.broadcast %185 : vector<8x1xf32> to vector<8x4xf32>
    %188 = arith.mulf %187, %186 : vector<8x4xf32>
    %189 = arith.addf %184, %188 : vector<8x4xf32>
    %190 = vector.extract_strided_slice %94 {offsets = [0, 18], sizes = [8, 1], strides = [1, 1]} : vector<8x64xf32> to vector<8x1xf32>
    %191 = vector.extract_strided_slice %102 {offsets = [0, 8], sizes = [8, 4], strides = [1, 1]} : vector<8x32xf32> to vector<8x4xf32>
    %192 = vector.broadcast %190 : vector<8x1xf32> to vector<8x4xf32>
    %193 = arith.mulf %192, %191 : vector<8x4xf32>
    %194 = arith.addf %189, %193 : vector<8x4xf32>
    %195 = vector.extract_strided_slice %94 {offsets = [0, 19], sizes = [8, 1], strides = [1, 1]} : vector<8x64xf32> to vector<8x1xf32>
    %196 = vector.extract_strided_slice %102 {offsets = [0, 12], sizes = [8, 4], strides = [1, 1]} : vector<8x32xf32> to vector<8x4xf32>
    %197 = vector.broadcast %195 : vector<8x1xf32> to vector<8x4xf32>
    %198 = arith.mulf %197, %196 : vector<8x4xf32>
    %199 = arith.addf %194, %198 : vector<8x4xf32>
    %200 = vector.extract_strided_slice %94 {offsets = [0, 20], sizes = [8, 1], strides = [1, 1]} : vector<8x64xf32> to vector<8x1xf32>
    %201 = vector.extract_strided_slice %102 {offsets = [0, 16], sizes = [8, 4], strides = [1, 1]} : vector<8x32xf32> to vector<8x4xf32>
    %202 = vector.broadcast %200 : vector<8x1xf32> to vector<8x4xf32>
    %203 = arith.mulf %202, %201 : vector<8x4xf32>
    %204 = arith.addf %199, %203 : vector<8x4xf32>
    %205 = vector.extract_strided_slice %94 {offsets = [0, 21], sizes = [8, 1], strides = [1, 1]} : vector<8x64xf32> to vector<8x1xf32>
    %206 = vector.extract_strided_slice %102 {offsets = [0, 20], sizes = [8, 4], strides = [1, 1]} : vector<8x32xf32> to vector<8x4xf32>
    %207 = vector.broadcast %205 : vector<8x1xf32> to vector<8x4xf32>
    %208 = arith.mulf %207, %206 : vector<8x4xf32>
    %209 = arith.addf %204, %208 : vector<8x4xf32>
    %210 = vector.extract_strided_slice %94 {offsets = [0, 22], sizes = [8, 1], strides = [1, 1]} : vector<8x64xf32> to vector<8x1xf32>
    %211 = vector.extract_strided_slice %102 {offsets = [0, 24], sizes = [8, 4], strides = [1, 1]} : vector<8x32xf32> to vector<8x4xf32>
    %212 = vector.broadcast %210 : vector<8x1xf32> to vector<8x4xf32>
    %213 = arith.mulf %212, %211 : vector<8x4xf32>
    %214 = arith.addf %209, %213 : vector<8x4xf32>
    %215 = vector.extract_strided_slice %94 {offsets = [0, 23], sizes = [8, 1], strides = [1, 1]} : vector<8x64xf32> to vector<8x1xf32>
    %216 = vector.extract_strided_slice %102 {offsets = [0, 28], sizes = [8, 4], strides = [1, 1]} : vector<8x32xf32> to vector<8x4xf32>
    %217 = vector.broadcast %215 : vector<8x1xf32> to vector<8x4xf32>
    %218 = arith.mulf %217, %216 : vector<8x4xf32>
    %219 = arith.addf %214, %218 : vector<8x4xf32>
    %220 = vector.extract_strided_slice %94 {offsets = [0, 24], sizes = [8, 1], strides = [1, 1]} : vector<8x64xf32> to vector<8x1xf32>
    %221 = vector.extract_strided_slice %102 {offsets = [0, 0], sizes = [8, 4], strides = [1, 1]} : vector<8x32xf32> to vector<8x4xf32>
    %222 = vector.broadcast %220 : vector<8x1xf32> to vector<8x4xf32>
    %223 = arith.mulf %222, %221 : vector<8x4xf32>
    %224 = vector.extract_strided_slice %94 {offsets = [0, 25], sizes = [8, 1], strides = [1, 1]} : vector<8x64xf32> to vector<8x1xf32>
    %225 = vector.extract_strided_slice %102 {offsets = [0, 4], sizes = [8, 4], strides = [1, 1]} : vector<8x32xf32> to vector<8x4xf32>
    %226 = vector.broadcast %224 : vector<8x1xf32> to vector<8x4xf32>
    %227 = arith.mulf %226, %225 : vector<8x4xf32>
    %228 = arith.addf %223, %227 : vector<8x4xf32>
    %229 = vector.extract_strided_slice %94 {offsets = [0, 26], sizes = [8, 1], strides = [1, 1]} : vector<8x64xf32> to vector<8x1xf32>
    %230 = vector.extract_strided_slice %102 {offsets = [0, 8], sizes = [8, 4], strides = [1, 1]} : vector<8x32xf32> to vector<8x4xf32>
    %231 = vector.broadcast %229 : vector<8x1xf32> to vector<8x4xf32>
    %232 = arith.mulf %231, %230 : vector<8x4xf32>
    %233 = arith.addf %228, %232 : vector<8x4xf32>
    %234 = vector.extract_strided_slice %94 {offsets = [0, 27], sizes = [8, 1], strides = [1, 1]} : vector<8x64xf32> to vector<8x1xf32>
    %235 = vector.extract_strided_slice %102 {offsets = [0, 12], sizes = [8, 4], strides = [1, 1]} : vector<8x32xf32> to vector<8x4xf32>
    %236 = vector.broadcast %234 : vector<8x1xf32> to vector<8x4xf32>
    %237 = arith.mulf %236, %235 : vector<8x4xf32>
    %238 = arith.addf %233, %237 : vector<8x4xf32>
    %239 = vector.extract_strided_slice %94 {offsets = [0, 28], sizes = [8, 1], strides = [1, 1]} : vector<8x64xf32> to vector<8x1xf32>
    %240 = vector.extract_strided_slice %102 {offsets = [0, 16], sizes = [8, 4], strides = [1, 1]} : vector<8x32xf32> to vector<8x4xf32>
    %241 = vector.broadcast %239 : vector<8x1xf32> to vector<8x4xf32>
    %242 = arith.mulf %241, %240 : vector<8x4xf32>
    %243 = arith.addf %238, %242 : vector<8x4xf32>
    %244 = vector.extract_strided_slice %94 {offsets = [0, 29], sizes = [8, 1], strides = [1, 1]} : vector<8x64xf32> to vector<8x1xf32>
    %245 = vector.extract_strided_slice %102 {offsets = [0, 20], sizes = [8, 4], strides = [1, 1]} : vector<8x32xf32> to vector<8x4xf32>
    %246 = vector.broadcast %244 : vector<8x1xf32> to vector<8x4xf32>
    %247 = arith.mulf %246, %245 : vector<8x4xf32>
    %248 = arith.addf %243, %247 : vector<8x4xf32>
    %249 = vector.extract_strided_slice %94 {offsets = [0, 30], sizes = [8, 1], strides = [1, 1]} : vector<8x64xf32> to vector<8x1xf32>
    %250 = vector.extract_strided_slice %102 {offsets = [0, 24], sizes = [8, 4], strides = [1, 1]} : vector<8x32xf32> to vector<8x4xf32>
    %251 = vector.broadcast %249 : vector<8x1xf32> to vector<8x4xf32>
    %252 = arith.mulf %251, %250 : vector<8x4xf32>
    %253 = arith.addf %248, %252 : vector<8x4xf32>
    %254 = vector.extract_strided_slice %94 {offsets = [0, 31], sizes = [8, 1], strides = [1, 1]} : vector<8x64xf32> to vector<8x1xf32>
    %255 = vector.extract_strided_slice %102 {offsets = [0, 28], sizes = [8, 4], strides = [1, 1]} : vector<8x32xf32> to vector<8x4xf32>
    %256 = vector.broadcast %254 : vector<8x1xf32> to vector<8x4xf32>
    %257 = arith.mulf %256, %255 : vector<8x4xf32>
    %258 = arith.addf %253, %257 : vector<8x4xf32>
    %259 = vector.extract_strided_slice %94 {offsets = [0, 32], sizes = [8, 1], strides = [1, 1]} : vector<8x64xf32> to vector<8x1xf32>
    %260 = vector.extract_strided_slice %102 {offsets = [0, 0], sizes = [8, 4], strides = [1, 1]} : vector<8x32xf32> to vector<8x4xf32>
    %261 = vector.broadcast %259 : vector<8x1xf32> to vector<8x4xf32>
    %262 = arith.mulf %261, %260 : vector<8x4xf32>
    %263 = vector.extract_strided_slice %94 {offsets = [0, 33], sizes = [8, 1], strides = [1, 1]} : vector<8x64xf32> to vector<8x1xf32>
    %264 = vector.extract_strided_slice %102 {offsets = [0, 4], sizes = [8, 4], strides = [1, 1]} : vector<8x32xf32> to vector<8x4xf32>
    %265 = vector.broadcast %263 : vector<8x1xf32> to vector<8x4xf32>
    %266 = arith.mulf %265, %264 : vector<8x4xf32>
    %267 = arith.addf %262, %266 : vector<8x4xf32>
    %268 = vector.extract_strided_slice %94 {offsets = [0, 34], sizes = [8, 1], strides = [1, 1]} : vector<8x64xf32> to vector<8x1xf32>
    %269 = vector.extract_strided_slice %102 {offsets = [0, 8], sizes = [8, 4], strides = [1, 1]} : vector<8x32xf32> to vector<8x4xf32>
    %270 = vector.broadcast %268 : vector<8x1xf32> to vector<8x4xf32>
    %271 = arith.mulf %270, %269 : vector<8x4xf32>
    %272 = arith.addf %267, %271 : vector<8x4xf32>
    %273 = vector.extract_strided_slice %94 {offsets = [0, 35], sizes = [8, 1], strides = [1, 1]} : vector<8x64xf32> to vector<8x1xf32>
    %274 = vector.extract_strided_slice %102 {offsets = [0, 12], sizes = [8, 4], strides = [1, 1]} : vector<8x32xf32> to vector<8x4xf32>
    %275 = vector.broadcast %273 : vector<8x1xf32> to vector<8x4xf32>
    %276 = arith.mulf %275, %274 : vector<8x4xf32>
    %277 = arith.addf %272, %276 : vector<8x4xf32>
    %278 = vector.extract_strided_slice %94 {offsets = [0, 36], sizes = [8, 1], strides = [1, 1]} : vector<8x64xf32> to vector<8x1xf32>
    %279 = vector.extract_strided_slice %102 {offsets = [0, 16], sizes = [8, 4], strides = [1, 1]} : vector<8x32xf32> to vector<8x4xf32>
    %280 = vector.broadcast %278 : vector<8x1xf32> to vector<8x4xf32>
    %281 = arith.mulf %280, %279 : vector<8x4xf32>
    %282 = arith.addf %277, %281 : vector<8x4xf32>
    %283 = vector.extract_strided_slice %94 {offsets = [0, 37], sizes = [8, 1], strides = [1, 1]} : vector<8x64xf32> to vector<8x1xf32>
    %284 = vector.extract_strided_slice %102 {offsets = [0, 20], sizes = [8, 4], strides = [1, 1]} : vector<8x32xf32> to vector<8x4xf32>
    %285 = vector.broadcast %283 : vector<8x1xf32> to vector<8x4xf32>
    %286 = arith.mulf %285, %284 : vector<8x4xf32>
    %287 = arith.addf %282, %286 : vector<8x4xf32>
    %288 = vector.extract_strided_slice %94 {offsets = [0, 38], sizes = [8, 1], strides = [1, 1]} : vector<8x64xf32> to vector<8x1xf32>
    %289 = vector.extract_strided_slice %102 {offsets = [0, 24], sizes = [8, 4], strides = [1, 1]} : vector<8x32xf32> to vector<8x4xf32>
    %290 = vector.broadcast %288 : vector<8x1xf32> to vector<8x4xf32>
    %291 = arith.mulf %290, %289 : vector<8x4xf32>
    %292 = arith.addf %287, %291 : vector<8x4xf32>
    %293 = vector.extract_strided_slice %94 {offsets = [0, 39], sizes = [8, 1], strides = [1, 1]} : vector<8x64xf32> to vector<8x1xf32>
    %294 = vector.extract_strided_slice %102 {offsets = [0, 28], sizes = [8, 4], strides = [1, 1]} : vector<8x32xf32> to vector<8x4xf32>
    %295 = vector.broadcast %293 : vector<8x1xf32> to vector<8x4xf32>
    %296 = arith.mulf %295, %294 : vector<8x4xf32>
    %297 = arith.addf %292, %296 : vector<8x4xf32>
    %298 = vector.extract_strided_slice %94 {offsets = [0, 40], sizes = [8, 1], strides = [1, 1]} : vector<8x64xf32> to vector<8x1xf32>
    %299 = vector.extract_strided_slice %102 {offsets = [0, 0], sizes = [8, 4], strides = [1, 1]} : vector<8x32xf32> to vector<8x4xf32>
    %300 = vector.broadcast %298 : vector<8x1xf32> to vector<8x4xf32>
    %301 = arith.mulf %300, %299 : vector<8x4xf32>
    %302 = vector.extract_strided_slice %94 {offsets = [0, 41], sizes = [8, 1], strides = [1, 1]} : vector<8x64xf32> to vector<8x1xf32>
    %303 = vector.extract_strided_slice %102 {offsets = [0, 4], sizes = [8, 4], strides = [1, 1]} : vector<8x32xf32> to vector<8x4xf32>
    %304 = vector.broadcast %302 : vector<8x1xf32> to vector<8x4xf32>
    %305 = arith.mulf %304, %303 : vector<8x4xf32>
    %306 = arith.addf %301, %305 : vector<8x4xf32>
    %307 = vector.extract_strided_slice %94 {offsets = [0, 42], sizes = [8, 1], strides = [1, 1]} : vector<8x64xf32> to vector<8x1xf32>
    %308 = vector.extract_strided_slice %102 {offsets = [0, 8], sizes = [8, 4], strides = [1, 1]} : vector<8x32xf32> to vector<8x4xf32>
    %309 = vector.broadcast %307 : vector<8x1xf32> to vector<8x4xf32>
    %310 = arith.mulf %309, %308 : vector<8x4xf32>
    %311 = arith.addf %306, %310 : vector<8x4xf32>
    %312 = vector.extract_strided_slice %94 {offsets = [0, 43], sizes = [8, 1], strides = [1, 1]} : vector<8x64xf32> to vector<8x1xf32>
    %313 = vector.extract_strided_slice %102 {offsets = [0, 12], sizes = [8, 4], strides = [1, 1]} : vector<8x32xf32> to vector<8x4xf32>
    %314 = vector.broadcast %312 : vector<8x1xf32> to vector<8x4xf32>
    %315 = arith.mulf %314, %313 : vector<8x4xf32>
    %316 = arith.addf %311, %315 : vector<8x4xf32>
    %317 = vector.extract_strided_slice %94 {offsets = [0, 44], sizes = [8, 1], strides = [1, 1]} : vector<8x64xf32> to vector<8x1xf32>
    %318 = vector.extract_strided_slice %102 {offsets = [0, 16], sizes = [8, 4], strides = [1, 1]} : vector<8x32xf32> to vector<8x4xf32>
    %319 = vector.broadcast %317 : vector<8x1xf32> to vector<8x4xf32>
    %320 = arith.mulf %319, %318 : vector<8x4xf32>
    %321 = arith.addf %316, %320 : vector<8x4xf32>
    %322 = vector.extract_strided_slice %94 {offsets = [0, 45], sizes = [8, 1], strides = [1, 1]} : vector<8x64xf32> to vector<8x1xf32>
    %323 = vector.extract_strided_slice %102 {offsets = [0, 20], sizes = [8, 4], strides = [1, 1]} : vector<8x32xf32> to vector<8x4xf32>
    %324 = vector.broadcast %322 : vector<8x1xf32> to vector<8x4xf32>
    %325 = arith.mulf %324, %323 : vector<8x4xf32>
    %326 = arith.addf %321, %325 : vector<8x4xf32>
    %327 = vector.extract_strided_slice %94 {offsets = [0, 46], sizes = [8, 1], strides = [1, 1]} : vector<8x64xf32> to vector<8x1xf32>
    %328 = vector.extract_strided_slice %102 {offsets = [0, 24], sizes = [8, 4], strides = [1, 1]} : vector<8x32xf32> to vector<8x4xf32>
    %329 = vector.broadcast %327 : vector<8x1xf32> to vector<8x4xf32>
    %330 = arith.mulf %329, %328 : vector<8x4xf32>
    %331 = arith.addf %326, %330 : vector<8x4xf32>
    %332 = vector.extract_strided_slice %94 {offsets = [0, 47], sizes = [8, 1], strides = [1, 1]} : vector<8x64xf32> to vector<8x1xf32>
    %333 = vector.extract_strided_slice %102 {offsets = [0, 28], sizes = [8, 4], strides = [1, 1]} : vector<8x32xf32> to vector<8x4xf32>
    %334 = vector.broadcast %332 : vector<8x1xf32> to vector<8x4xf32>
    %335 = arith.mulf %334, %333 : vector<8x4xf32>
    %336 = arith.addf %331, %335 : vector<8x4xf32>
    %337 = vector.extract_strided_slice %94 {offsets = [0, 48], sizes = [8, 1], strides = [1, 1]} : vector<8x64xf32> to vector<8x1xf32>
    %338 = vector.extract_strided_slice %102 {offsets = [0, 0], sizes = [8, 4], strides = [1, 1]} : vector<8x32xf32> to vector<8x4xf32>
    %339 = vector.broadcast %337 : vector<8x1xf32> to vector<8x4xf32>
    %340 = arith.mulf %339, %338 : vector<8x4xf32>
    %341 = vector.extract_strided_slice %94 {offsets = [0, 49], sizes = [8, 1], strides = [1, 1]} : vector<8x64xf32> to vector<8x1xf32>
    %342 = vector.extract_strided_slice %102 {offsets = [0, 4], sizes = [8, 4], strides = [1, 1]} : vector<8x32xf32> to vector<8x4xf32>
    %343 = vector.broadcast %341 : vector<8x1xf32> to vector<8x4xf32>
    %344 = arith.mulf %343, %342 : vector<8x4xf32>
    %345 = arith.addf %340, %344 : vector<8x4xf32>
    %346 = vector.extract_strided_slice %94 {offsets = [0, 50], sizes = [8, 1], strides = [1, 1]} : vector<8x64xf32> to vector<8x1xf32>
    %347 = vector.extract_strided_slice %102 {offsets = [0, 8], sizes = [8, 4], strides = [1, 1]} : vector<8x32xf32> to vector<8x4xf32>
    %348 = vector.broadcast %346 : vector<8x1xf32> to vector<8x4xf32>
    %349 = arith.mulf %348, %347 : vector<8x4xf32>
    %350 = arith.addf %345, %349 : vector<8x4xf32>
    %351 = vector.extract_strided_slice %94 {offsets = [0, 51], sizes = [8, 1], strides = [1, 1]} : vector<8x64xf32> to vector<8x1xf32>
    %352 = vector.extract_strided_slice %102 {offsets = [0, 12], sizes = [8, 4], strides = [1, 1]} : vector<8x32xf32> to vector<8x4xf32>
    %353 = vector.broadcast %351 : vector<8x1xf32> to vector<8x4xf32>
    %354 = arith.mulf %353, %352 : vector<8x4xf32>
    %355 = arith.addf %350, %354 : vector<8x4xf32>
    %356 = vector.extract_strided_slice %94 {offsets = [0, 52], sizes = [8, 1], strides = [1, 1]} : vector<8x64xf32> to vector<8x1xf32>
    %357 = vector.extract_strided_slice %102 {offsets = [0, 16], sizes = [8, 4], strides = [1, 1]} : vector<8x32xf32> to vector<8x4xf32>
    %358 = vector.broadcast %356 : vector<8x1xf32> to vector<8x4xf32>
    %359 = arith.mulf %358, %357 : vector<8x4xf32>
    %360 = arith.addf %355, %359 : vector<8x4xf32>
    %361 = vector.extract_strided_slice %94 {offsets = [0, 53], sizes = [8, 1], strides = [1, 1]} : vector<8x64xf32> to vector<8x1xf32>
    %362 = vector.extract_strided_slice %102 {offsets = [0, 20], sizes = [8, 4], strides = [1, 1]} : vector<8x32xf32> to vector<8x4xf32>
    %363 = vector.broadcast %361 : vector<8x1xf32> to vector<8x4xf32>
    %364 = arith.mulf %363, %362 : vector<8x4xf32>
    %365 = arith.addf %360, %364 : vector<8x4xf32>
    %366 = vector.extract_strided_slice %94 {offsets = [0, 54], sizes = [8, 1], strides = [1, 1]} : vector<8x64xf32> to vector<8x1xf32>
    %367 = vector.extract_strided_slice %102 {offsets = [0, 24], sizes = [8, 4], strides = [1, 1]} : vector<8x32xf32> to vector<8x4xf32>
    %368 = vector.broadcast %366 : vector<8x1xf32> to vector<8x4xf32>
    %369 = arith.mulf %368, %367 : vector<8x4xf32>
    %370 = arith.addf %365, %369 : vector<8x4xf32>
    %371 = vector.extract_strided_slice %94 {offsets = [0, 55], sizes = [8, 1], strides = [1, 1]} : vector<8x64xf32> to vector<8x1xf32>
    %372 = vector.extract_strided_slice %102 {offsets = [0, 28], sizes = [8, 4], strides = [1, 1]} : vector<8x32xf32> to vector<8x4xf32>
    %373 = vector.broadcast %371 : vector<8x1xf32> to vector<8x4xf32>
    %374 = arith.mulf %373, %372 : vector<8x4xf32>
    %375 = arith.addf %370, %374 : vector<8x4xf32>
    %376 = vector.extract_strided_slice %94 {offsets = [0, 56], sizes = [8, 1], strides = [1, 1]} : vector<8x64xf32> to vector<8x1xf32>
    %377 = vector.extract_strided_slice %102 {offsets = [0, 0], sizes = [8, 4], strides = [1, 1]} : vector<8x32xf32> to vector<8x4xf32>
    %378 = vector.broadcast %376 : vector<8x1xf32> to vector<8x4xf32>
    %379 = arith.mulf %378, %377 : vector<8x4xf32>
    %380 = vector.extract_strided_slice %94 {offsets = [0, 57], sizes = [8, 1], strides = [1, 1]} : vector<8x64xf32> to vector<8x1xf32>
    %381 = vector.extract_strided_slice %102 {offsets = [0, 4], sizes = [8, 4], strides = [1, 1]} : vector<8x32xf32> to vector<8x4xf32>
    %382 = vector.broadcast %380 : vector<8x1xf32> to vector<8x4xf32>
    %383 = arith.mulf %382, %381 : vector<8x4xf32>
    %384 = arith.addf %379, %383 : vector<8x4xf32>
    %385 = vector.extract_strided_slice %94 {offsets = [0, 58], sizes = [8, 1], strides = [1, 1]} : vector<8x64xf32> to vector<8x1xf32>
    %386 = vector.extract_strided_slice %102 {offsets = [0, 8], sizes = [8, 4], strides = [1, 1]} : vector<8x32xf32> to vector<8x4xf32>
    %387 = vector.broadcast %385 : vector<8x1xf32> to vector<8x4xf32>
    %388 = arith.mulf %387, %386 : vector<8x4xf32>
    %389 = arith.addf %384, %388 : vector<8x4xf32>
    %390 = vector.extract_strided_slice %94 {offsets = [0, 59], sizes = [8, 1], strides = [1, 1]} : vector<8x64xf32> to vector<8x1xf32>
    %391 = vector.extract_strided_slice %102 {offsets = [0, 12], sizes = [8, 4], strides = [1, 1]} : vector<8x32xf32> to vector<8x4xf32>
    %392 = vector.broadcast %390 : vector<8x1xf32> to vector<8x4xf32>
    %393 = arith.mulf %392, %391 : vector<8x4xf32>
    %394 = arith.addf %389, %393 : vector<8x4xf32>
    %395 = vector.extract_strided_slice %94 {offsets = [0, 60], sizes = [8, 1], strides = [1, 1]} : vector<8x64xf32> to vector<8x1xf32>
    %396 = vector.extract_strided_slice %102 {offsets = [0, 16], sizes = [8, 4], strides = [1, 1]} : vector<8x32xf32> to vector<8x4xf32>
    %397 = vector.broadcast %395 : vector<8x1xf32> to vector<8x4xf32>
    %398 = arith.mulf %397, %396 : vector<8x4xf32>
    %399 = arith.addf %394, %398 : vector<8x4xf32>
    %400 = vector.extract_strided_slice %94 {offsets = [0, 61], sizes = [8, 1], strides = [1, 1]} : vector<8x64xf32> to vector<8x1xf32>
    %401 = vector.extract_strided_slice %102 {offsets = [0, 20], sizes = [8, 4], strides = [1, 1]} : vector<8x32xf32> to vector<8x4xf32>
    %402 = vector.broadcast %400 : vector<8x1xf32> to vector<8x4xf32>
    %403 = arith.mulf %402, %401 : vector<8x4xf32>
    %404 = arith.addf %399, %403 : vector<8x4xf32>
    %405 = vector.extract_strided_slice %94 {offsets = [0, 62], sizes = [8, 1], strides = [1, 1]} : vector<8x64xf32> to vector<8x1xf32>
    %406 = vector.extract_strided_slice %102 {offsets = [0, 24], sizes = [8, 4], strides = [1, 1]} : vector<8x32xf32> to vector<8x4xf32>
    %407 = vector.broadcast %405 : vector<8x1xf32> to vector<8x4xf32>
    %408 = arith.mulf %407, %406 : vector<8x4xf32>
    %409 = arith.addf %404, %408 : vector<8x4xf32>
    %410 = vector.extract_strided_slice %94 {offsets = [0, 63], sizes = [8, 1], strides = [1, 1]} : vector<8x64xf32> to vector<8x1xf32>
    %411 = vector.extract_strided_slice %102 {offsets = [0, 28], sizes = [8, 4], strides = [1, 1]} : vector<8x32xf32> to vector<8x4xf32>
    %412 = vector.broadcast %410 : vector<8x1xf32> to vector<8x4xf32>
    %413 = arith.mulf %412, %411 : vector<8x4xf32>
    %414 = arith.addf %409, %413 : vector<8x4xf32>
    %415 = tpu.concatenate %141, %180, %219, %258, %297, %336, %375, %414 in 1 : vector<8x4xf32>, vector<8x4xf32>, vector<8x4xf32>, vector<8x4xf32>, vector<8x4xf32>, vector<8x4xf32>, vector<8x4xf32>, vector<8x4xf32> -> vector<8x32xf32>
    %c0_11 = arith.constant 0 : index
    %c0_12 = arith.constant 0 : index
    %416 = vector.load %arg5[%c0_11, %c0_12] : memref<8x32xf32, #tpu.memory_space<vmem>>, vector<8x32xf32>
    tpu.vector_store %arg5[%c0_11, %c0_12], %415 {strides = array<i32>} : memref<8x32xf32, #tpu.memory_space<vmem>>, vector<8x32xf32>,
    return
  }
  func.func @transform_0(%arg0: i32) -> (i32, i32) {
    %c0_i32 = arith.constant 0 : i32
    %c0_i32_0 = arith.constant 0 : i32
    return %arg0, %c0_i32 : i32, i32
  }
  func.func @transform_1(%arg0: i32) -> (i32, i32) {
    %c0_i32 = arith.constant 0 : i32
    %c0_i32_0 = arith.constant 0 : i32
    %c0_i32_1 = arith.constant 0 : i32
    return %c0_i32, %c0_i32_0 : i32, i32
  }
  func.func @transform_2(%arg0: i32) -> (i32, i32) {
    %c0_i32 = arith.constant 0 : i32
    %c0_i32_0 = arith.constant 0 : i32
    %c0_i32_1 = arith.constant 0 : i32
    return %c0_i32, %c0_i32_0 : i32, i32
  }
  func.func @transform_3(%arg0: i32) -> (i32, i32) {
    %c0_i32 = arith.constant 0 : i32
    %c0_i32_0 = arith.constant 0 : i32
    %c0_i32_1 = arith.constant 0 : i32
    return %c0_i32, %c0_i32_0 : i32, i32
  }
  func.func @transform_4(%arg0: i32) -> (i32, i32) {
    %c0_i32 = arith.constant 0 : i32
    %c0_i32_0 = arith.constant 0 : i32
    return %arg0, %c0_i32 : i32, i32
  }
}

</mosaic_0001>

<llo_original>
// kernel: tpu_custom_call.1
$region0: #{tpu_custom_call.1}
  #allocation0 [shape = 'u32[]', space=smem, size = 0x4, offset = 0x4, fixed_abs, tag = 'smem constant byte address 0x4 - core index']
  #allocation1 [shape = 'u32[72,128]{1,0:T(1,128)}', space=vmem, size = 0x9000, scoped, tag = 'internal scratch']
  %s0 = inlined_call_operand.vmem [shape: s32[16,3], index: 0, kind: input, shape index: {}]
  %s1 = inlined_call_operand.hbm [shape: f32[8,16], index: 1, kind: input, shape index: {}]
  %s2 = inlined_call_operand.vmem [shape: f32[8,256], index: 2, kind: input, shape index: {}]
  %s3 = inlined_call_operand.hbm [shape: f32[8,32], index: 3, kind: input, shape index: {}]
  %s4 = inlined_call_operand.hbm [shape: f32[16,32], index: 4, kind: output, shape index: {}]
  %s5 = sld [smem:[#allocation0]]
  $region57: #{tpu_custom_call.1} parent=0
    _
  %s7 = ssub.s32 1, %s5
  %s8 = scalar_select 0, %s7, %s5
  $region1: #{tpu_custom_call.1} parent=0
    #allocation2 [shape = 'u8[4096]{0}', space=vmem, size = 0x1000, scoped, tag = 'input window, operand 1, single buffered']
    #allocation3 [shape = 's32[2]{0}', space=sflag, size = 0x8, scoped, tag = 'scoped memory for tpu_custom_call.1']
    #allocation4 [shape = 's32[2]{0}', space=sflag, size = 0x8, scoped, tag = 'scoped memory for tpu_custom_call.1']
    #allocation5 [shape = 'u8[4096]{0}', space=vmem, size = 0x1000, scoped, tag = 'input window, operand 3, single buffered']
    #allocation6 [shape = 's32[1]{0}', space=sflag, size = 0x4, scoped, tag = 'scoped memory for tpu_custom_call.1']
    #allocation7 [shape = 'u8[8192]{0}', space=vmem, size = 0x2000, scoped, tag = 'output window, operand 0']
    %9 = vsyncpa [#allocation3], 0
    %10 = vsyncpa [#allocation6], 0
    %11 = vsyncpa [#allocation4], 0
    %s12 = scalar_lea.sflag [#allocation4], 1
    %13 = vsyncpa %s12, 0
    loop: start=0, step=1, limit=4
    $region2: #{tpu_custom_call.1} parent=1 // loop_pre_header
      _
    $region3: #{tpu_custom_call.1} parent=1 // loop_header
      %s15 = sphi 0, %s19
      %p16 = scmp.ge.s32.totalorder %s15, 4
      %s25 = sphi 0, %s27
      %s28 = sphi 0, %s25
      %s29 = sphi 0, %s28
      %s45 = sphi 0, %s29
      %s49 = sphi 0, %s49
      %s51 = sphi 0, %s49
      %s52 = sphi 0, %s51
      %s66 = sphi 0, %s52
      %s70 = sphi 0, %s70
      %s72 = sphi 0, %s70
      %s73 = sphi 0, %s72
      %s87 = sphi 0, %s73
      %s91 = sphi 0, %s91
      %s93 = sphi 0, %s91
      %s94 = sphi 0, %s93
      %s108 = sphi 0, %s94
      %s114 = sphi 0, %s116
      %s117 = sphi 0, %s114
      %s118 = sphi 0, %s117
      %s134 = sphi 0, %s118
    $region4: #{tpu_custom_call.1} parent=1 // loop_header_branch
      %18 = sbr.rel (%p16) target = $region8
    $region5: #{tpu_custom_call.1} parent=1 // loop_body
      %s20 = ssub.s32 %s15, 1
      %s21 = ssub.s32 %s15, 2
      %s22 = sadd.s32 %s15, 1
      %s23 = ssub.s32 %s15, %s22
      %p24 = scmp.eq.s32.totalorder %s23, 0
      %s26 = sadd.s32 %s25, 1
      %s27 = scalar_select %p24, %s25, %s26
      %p30 = pneg %p24
      %p31 = scmp.eq.s32.totalorder %s15, 1
      %p32 = por %p30, %p31
      %p33 = scmp.ne.s32.totalorder %s25, %s28
      %p34 = scmp.eq.s32.totalorder %s15, 0
      %p35 = por %p33, %p34
      %p36 = scmp.ne.s32.totalorder %s25, %s28
      %p37 = scmp.eq.s32.totalorder %s20, 1
      %p38 = por %p36, %p37
      %p39 = scmp.ne.s32.totalorder %s28, %s29
      %p40 = scmp.eq.s32.totalorder %s20, 0
      %p41 = por %p39, %p40
      %p42 = scmp.ne.s32.totalorder %s28, %s29
      %p43 = scmp.eq.s32.totalorder %s21, 1
      %p44 = por %p42, %p43
      %p46 = scmp.ne.s32.totalorder %s29, %s45
      %p47 = scmp.eq.s32.totalorder %s21, 0
      %p48 = por %p46, %p47
      %s50 = sadd.s32 %s49, 1
      %p53 = scmp.eq.s32.totalorder %s15, 1
      %p54 = scmp.ne.s32.totalorder %s49, %s51
      %p55 = scmp.eq.s32.totalorder %s15, 0
      %p56 = por %p54, %p55
      %p57 = scmp.ne.s32.totalorder %s49, %s51
      %p58 = scmp.eq.s32.totalorder %s20, 1
      %p59 = por %p57, %p58
      %p60 = scmp.ne.s32.totalorder %s51, %s52
      %p61 = scmp.eq.s32.totalorder %s20, 0
      %p62 = por %p60, %p61
      %p63 = scmp.ne.s32.totalorder %s51, %s52
      %p64 = scmp.eq.s32.totalorder %s21, 1
      %p65 = por %p63, %p64
      %p67 = scmp.ne.s32.totalorder %s52, %s66
      %p68 = scmp.eq.s32.totalorder %s21, 0
      %p69 = por %p67, %p68
      %s71 = sadd.s32 %s70, 1
      %p74 = scmp.eq.s32.totalorder %s15, 1
      %p75 = scmp.ne.s32.totalorder %s70, %s72
      %p76 = scmp.eq.s32.totalorder %s15, 0
      %p77 = por %p75, %p76
      %p78 = scmp.ne.s32.totalorder %s70, %s72
      %p79 = scmp.eq.s32.totalorder %s20, 1
      %p80 = por %p78, %p79
      %p81 = scmp.ne.s32.totalorder %s72, %s73
      %p82 = scmp.eq.s32.totalorder %s20, 0
      %p83 = por %p81, %p82
      %p84 = scmp.ne.s32.totalorder %s72, %s73
      %p85 = scmp.eq.s32.totalorder %s21, 1
      %p86 = por %p84, %p85
      %p88 = scmp.ne.s32.totalorder %s73, %s87
      %p89 = scmp.eq.s32.totalorder %s21, 0
      %p90 = por %p88, %p89
      %s92 = sadd.s32 %s91, 1
      %p95 = scmp.eq.s32.totalorder %s15, 1
      %p96 = scmp.ne.s32.totalorder %s91, %s93
      %p97 = scmp.eq.s32.totalorder %s15, 0
      %p98 = por %p96, %p97
      %p99 = scmp.ne.s32.totalorder %s91, %s93
      %p100 = scmp.eq.s32.totalorder %s20, 1
      %p101 = por %p99, %p100
      %p102 = scmp.ne.s32.totalorder %s93, %s94
      %p103 = scmp.eq.s32.totalorder %s20, 0
      %p104 = por %p102, %p103
      %p105 = scmp.ne.s32.totalorder %s93, %s94
      %p106 = scmp.eq.s32.totalorder %s21, 1
      %p107 = por %p105, %p106
      %p109 = scmp.ne.s32.totalorder %s94, %s108
      %p110 = scmp.eq.s32.totalorder %s21, 0
      %p111 = por %p109, %p110
      %s112 = ssub.s32 %s15, %s22
      %p113 = scmp.eq.s32.totalorder %s112, 0
      %s115 = sadd.s32 %s114, 1
      %s116 = scalar_select %p113, %s114, %s115
      %p119 = pneg %p113
      %p120 = scmp.eq.s32.totalorder %s15, 1
      %p121 = por %p119, %p120
      %p122 = scmp.ne.s32.totalorder %s114, %s117
      %p123 = scmp.eq.s32.totalorder %s15, 0
      %p124 = por %p122, %p123
      %p125 = scmp.ne.s32.totalorder %s114, %s117
      %p126 = scmp.eq.s32.totalorder %s20, 1
      %p127 = por %p125, %p126
      %p128 = scmp.ne.s32.totalorder %s117, %s118
      %p129 = scmp.eq.s32.totalorder %s20, 0
      %p130 = por %p128, %p129
      %p131 = scmp.ne.s32.totalorder %s117, %s118
      %p132 = scmp.eq.s32.totalorder %s21, 1
      %p133 = por %p131, %p132
      %p135 = scmp.ne.s32.totalorder %s118, %s134
      %p136 = scmp.eq.s32.totalorder %s21, 0
      %p137 = por %p135, %p136
      %p138 = scmp.le.s32.totalorder 1, %s15
      %p139 = scmp.lt.s32.totalorder %s15, 3
      %p140 = pnand %p138, %p139
      %p141 = pneg %p140
      // Predicated region
      $region9: #{tpu_custom_call.1} parent=5 // pred_check
        _
      $region10: #{tpu_custom_call.1} parent=5 // pred_check_branch
        %143 = sbr.rel (%p140) target = $region12
      $region11: #{tpu_custom_call.1} parent=5 // pred_region
        %s144 = ssub.s32 %s15, 1
        // Predicated region
        $region13: #{tpu_custom_call.1} parent=11 // pred_check
          %p145 = pneg %p62
        $region14: #{tpu_custom_call.1} parent=11 // pred_check_branch
          %147 = sbr.rel (%p145) target = $region16
        $region15: #{tpu_custom_call.1} parent=11 // pred_region
          %149 = vsyncadd [#allocation3], 0
          %s151 = sshll.u32 %s1, 4
          %s152 = int_to_ptr.hbm [resolvable:$true] %s151
          %s153 = sshll.u32 [#allocation2], 4
          %s154 = int_to_ptr.vmem [resolvable:$true] %s153
          %156 = dma.hbm_to_vmem [thread:$0]  %s152, 128, %s154, [#allocation3]
        $region16: #{tpu_custom_call.1} parent=11 // pred_fallthru
          _
        // Predicated region
        $region17: #{tpu_custom_call.1} parent=11 // pred_check
          %p157 = pneg %p83
        $region18: #{tpu_custom_call.1} parent=11 // pred_check_branch
          %159 = sbr.rel (%p157) target = $region20
        $region19: #{tpu_custom_call.1} parent=11 // pred_region
          _
        $region20: #{tpu_custom_call.1} parent=11 // pred_fallthru
          _
        // Predicated region
        $region21: #{tpu_custom_call.1} parent=11 // pred_check
          %p160 = pneg %p104
        $region22: #{tpu_custom_call.1} parent=11 // pred_check_branch
          %162 = sbr.rel (%p160) target = $region24
        $region23: #{tpu_custom_call.1} parent=11 // pred_region
          %164 = vsyncadd [#allocation6], 0
          %s166 = sshll.u32 %s3, 4
          %s167 = int_to_ptr.hbm [resolvable:$true] %s166
          %s168 = sshll.u32 [#allocation5], 4
          %s169 = int_to_ptr.vmem [resolvable:$true] %s168
          %171 = dma.hbm_to_vmem [thread:$0]  %s167, 128, %s169, [#allocation6]
        $region24: #{tpu_custom_call.1} parent=11 // pred_fallthru
          _
      $region12: #{tpu_custom_call.1} parent=5 // pred_fallthru
        _
      %p172 = scmp.lt.s32.totalorder %s15, 2
      // Predicated region
      $region25: #{tpu_custom_call.1} parent=5 // pred_check
        %p173 = pneg %p172
      $region26: #{tpu_custom_call.1} parent=5 // pred_check_branch
        %175 = sbr.rel (%p173) target = $region28
      $region27: #{tpu_custom_call.1} parent=5 // pred_region
        // Predicated region
        $region29: #{tpu_custom_call.1} parent=27 // pred_check
          %p176 = pneg %p35
        $region30: #{tpu_custom_call.1} parent=27 // pred_check_branch
          %178 = sbr.rel (%p176) target = $region32
        $region31: #{tpu_custom_call.1} parent=27 // pred_region
          %p179 = scmp.lt.s32.totalorder %s15, 1
          %s180 = scalar_select %p179, %s15, 1
          %s181 = smul.addr %s180, 8
          %s182 = scalar_lea.vmem %s0, %s181
        $region32: #{tpu_custom_call.1} parent=27 // pred_fallthru
          _
      $region28: #{tpu_custom_call.1} parent=5 // pred_fallthru
        _
      %p183 = scmp.le.s32.totalorder 1, %s15
      %p184 = scmp.lt.s32.totalorder %s15, 3
      %p185 = pnand %p183, %p184
      %p186 = pneg %p185
      // Predicated region
      $region33: #{tpu_custom_call.1} parent=5 // pred_check
        _
      $region34: #{tpu_custom_call.1} parent=5 // pred_check_branch
        %188 = sbr.rel (%p185) target = $region36
      $region35: #{tpu_custom_call.1} parent=5 // pred_region
        %s189 = ssub.s32 %s15, 1
        // Predicated region
        $region37: #{tpu_custom_call.1} parent=35 // pred_check
          %p190 = pneg %p62
        $region38: #{tpu_custom_call.1} parent=35 // pred_check_branch
          %192 = sbr.rel (%p190) target = $region40
        $region39: #{tpu_custom_call.1} parent=35 // pred_region
          %194 = dma.done [#allocation3], 128
        $region40: #{tpu_custom_call.1} parent=35 // pred_fallthru
          _
        // Predicated region
        $region41: #{tpu_custom_call.1} parent=35 // pred_check
          %p195 = pneg %p104
        $region42: #{tpu_custom_call.1} parent=35 // pred_check_branch
          %197 = sbr.rel (%p195) target = $region44
        $region43: #{tpu_custom_call.1} parent=35 // pred_region
          %199 = dma.done [#allocation6], 128
        $region44: #{tpu_custom_call.1} parent=35 // pred_fallthru
          _
        %p200 = scmp.lt.s32.totalorder %s20, 1
        %s201 = scalar_select %p200, %s20, 1
        %s202 = smul.addr %s201, 8
        %s203 = scalar_lea.vmem %s0, %s202
        %p204 = pneg %p41
        %p205 = pneg %p38
        %p206 = pneg %p62
        %p207 = pneg %p59
        %p208 = pneg %p83
        %p209 = pneg %p80
        %p210 = pneg %p104
        %p211 = pneg %p101
        %p212 = pneg %p130
        %p213 = pneg %p127
        %s214 = sand.u32 %s117, 1
        %s215 = scalar_lea.sflag [#allocation4], %s214
        %s216 = sand.u32 %s117, 1
        %s217 = smul.addr %s216, 8
        %s218 = scalar_lea.vmem [#allocation7], %s217
        %p219 = scmp.lt.s32.totalorder %s20, 1
        %s220 = scalar_select %p219, %s20, 1
        %s221 = smul.addr %s220, 8
        %s222 = scalar_lea.vmem %s0, %s221
        %v223 = vld [vmem:[#allocation2] sm:$0xff]
        %v224 = vld [vmem:[%s222] sm:$0xff]
        %v225 = vlaneseq
        %v226 = vand.u32 %v225, 127
        %227 = vset.pattern.permute.xlu0 0
        %228 = vperm.xlu0 %227, %v224
        %v229 = vpop.permute.xlu0 %228
        %vm230 = vcmp.eq.s32.totalorder %v226, %v229
        %v231 = vsel %vm230, 1, 0
        %v232 = vcvt.s32.f32 %v231
        %vm233 = vcmask 64512
        %v235 = vsel %vm233, %v232, 0
        %237 = vmatpush.msra.mxu0 0.0
        %238 = vmatpush.msra.mxu0 0.0
        %239 = vmatpush.msra.mxu0 0.0
        %240 = vmatpush.msra.mxu0 0.0
        %241 = vmatpush.msra.mxu0 0.0
        %242 = vmatpush.msra.mxu0 0.0
        %243 = vmatpush.msra.mxu0 0.0
        %244 = vmatpush.msra.mxu0 0.0
        %245 = vmatpush.msra.mxu0 0.0
        %246 = vmatpush.msra.mxu0 0.0
        %247 = vmatpush.msra.mxu0 0.0
        %248 = vmatpush.msra.mxu0 0.0
        %249 = vmatpush.msra.mxu0 0.0
        %250 = vmatpush.msra.mxu0 0.0
        %251 = vmatpush.msra.mxu0 0.0
        %252 = vmatpush.msra.mxu0 %v223
        %253 = vmatmul.f32.gmra.mxu0 %v235
        %v254 = vpop.f32.mrf.mxu0
        %v255 = vadd.f32 0.0, %v254
        %256 = vdwg.mxu0
        %v257 = vld [vmem:[%s2] sm:$0xff]
        %v258 = vld [vmem:[%s2 + $0x8] sm:$0xff]
        %259 = vset.pattern.permute.xlu0 1
        %260 = vperm.xlu0 %259, %v224
        %v261 = vpop.permute.xlu0 %260
        %vm262 = vcmp.eq.s32.totalorder %v226, %v261
        %v263 = vsel %vm262, 1, 0
        %v264 = vcvt.s32.f32 %v263
        %v266 = vsel %vm233, %v264, 0
        %268 = vmatpush.msra.mxu0 0.0
        %269 = vmatpush.msra.mxu0 0.0
        %270 = vmatpush.msra.mxu0 0.0
        %271 = vmatpush.msra.mxu0 0.0
        %272 = vmatpush.msra.mxu0 0.0
        %273 = vmatpush.msra.mxu0 0.0
        %274 = vmatpush.msra.mxu0 0.0
        %275 = vmatpush.msra.mxu0 0.0
        %276 = vmatpush.msra.mxu0 0.0
        %277 = vmatpush.msra.mxu0 0.0
        %278 = vmatpush.msra.mxu0 0.0
        %279 = vmatpush.msra.mxu0 0.0
        %280 = vmatpush.msra.mxu0 0.0
        %281 = vmatpush.msra.mxu0 0.0
        %282 = vmatpush.msra.mxu0 0.0
        %283 = vmatpush.msra.mxu0 %v257
        %284 = vmatmul.f32.gmra.mxu0 %v266
        %v285 = vpop.f32.mrf.mxu0
        %v286 = vadd.f32 0.0, %v285
        %287 = vdwg.mxu0
        %288 = vmatpush.msra.mxu0 0.0
        %289 = vmatpush.msra.mxu0 0.0
        %290 = vmatpush.msra.mxu0 0.0
        %291 = vmatpush.msra.mxu0 0.0
        %292 = vmatpush.msra.mxu0 0.0
        %293 = vmatpush.msra.mxu0 0.0
        %294 = vmatpush.msra.mxu0 0.0
        %295 = vmatpush.msra.mxu0 0.0
        %296 = vmatpush.msra.mxu0 0.0
        %297 = vmatpush.msra.mxu0 0.0
        %298 = vmatpush.msra.mxu0 0.0
        %299 = vmatpush.msra.mxu0 0.0
        %300 = vmatpush.msra.mxu0 0.0
        %301 = vmatpush.msra.mxu0 0.0
        %302 = vmatpush.msra.mxu0 0.0
        %303 = vmatpush.msra.mxu0 %v258
        %304 = vmatmul.f32.gmra.mxu0 %v266
        %v305 = vpop.f32.mrf.mxu0
        %v306 = vadd.f32 0.0, %v305
        %307 = vdwg.mxu0
        %309 = vset.pattern.permute.xlu0 0
        %310 = vperm.xlu0 %309, %v255
        %v311 = vpop.permute.xlu0 %310
        %v313 = vmul.f32 %v311, %v286
        %314 = vset.pattern.permute.xlu0 1
        %315 = vperm.xlu0 %314, %v255
        %v316 = vpop.permute.xlu0 %315
        %v318 = vmul.f32 %v316, %v286
        %320 = vrot.lane.b32.xlu0 %v318, 96
        %v321 = vpop.permute.xlu0 %320
        %v323 = vadd.f32 %v313, %v321
        %324 = vset.pattern.permute.xlu0 2
        %325 = vperm.xlu0 %324, %v255
        %v326 = vpop.permute.xlu0 %325
        %v328 = vmul.f32 %v326, %v286
        %330 = vrot.lane.b32.xlu0 %v328, 64
        %v331 = vpop.permute.xlu0 %330
        %v333 = vadd.f32 %v323, %v331
        %334 = vset.pattern.permute.xlu0 3
        %335 = vperm.xlu0 %334, %v255
        %v336 = vpop.permute.xlu0 %335
        %v338 = vmul.f32 %v336, %v286
        %340 = vrot.lane.b32.xlu0 %v338, 32
        %v341 = vpop.permute.xlu0 %340
        %v343 = vadd.f32 %v333, %v341
        %344 = vset.pattern.permute.xlu0 4
        %345 = vperm.xlu0 %344, %v255
        %v346 = vpop.permute.xlu0 %345
        %v348 = vmul.f32 %v346, %v306
        %v349 = vadd.f32 %v343, %v348
        %350 = vset.pattern.permute.xlu0 5
        %351 = vperm.xlu0 %350, %v255
        %v352 = vpop.permute.xlu0 %351
        %v354 = vmul.f32 %v352, %v306
        %356 = vrot.lane.b32.xlu0 %v354, 96
        %v357 = vpop.permute.xlu0 %356
        %v359 = vadd.f32 %v349, %v357
        %360 = vset.pattern.permute.xlu0 6
        %361 = vperm.xlu0 %360, %v255
        %v362 = vpop.permute.xlu0 %361
        %v364 = vmul.f32 %v362, %v306
        %366 = vrot.lane.b32.xlu0 %v364, 64
        %v367 = vpop.permute.xlu0 %366
        %v369 = vadd.f32 %v359, %v367
        %370 = vset.pattern.permute.xlu0 7
        %371 = vperm.xlu0 %370, %v255
        %v372 = vpop.permute.xlu0 %371
        %v374 = vmul.f32 %v372, %v306
        %376 = vrot.lane.b32.xlu0 %v374, 32
        %v377 = vpop.permute.xlu0 %376
        %v379 = vadd.f32 %v369, %v377
        %380 = vset.pattern.permute.xlu0 8
        %381 = vperm.xlu0 %380, %v255
        %v382 = vpop.permute.xlu0 %381
        %v384 = vmul.f32 %v382, %v286
        %385 = vset.pattern.permute.xlu0 9
        %386 = vperm.xlu0 %385, %v255
        %v387 = vpop.permute.xlu0 %386
        %v389 = vmul.f32 %v387, %v286
        %391 = vrot.lane.b32.xlu0 %v389, 96
        %v392 = vpop.permute.xlu0 %391
        %v394 = vadd.f32 %v384, %v392
        %395 = vset.pattern.permute.xlu0 10
        %396 = vperm.xlu0 %395, %v255
        %v397 = vpop.permute.xlu0 %396
        %v399 = vmul.f32 %v397, %v286
        %401 = vrot.lane.b32.xlu0 %v399, 64
        %v402 = vpop.permute.xlu0 %401
        %v404 = vadd.f32 %v394, %v402
        %405 = vset.pattern.permute.xlu0 11
        %406 = vperm.xlu0 %405, %v255
        %v407 = vpop.permute.xlu0 %406
        %v409 = vmul.f32 %v407, %v286
        %411 = vrot.lane.b32.xlu0 %v409, 32
        %v412 = vpop.permute.xlu0 %411
        %v414 = vadd.f32 %v404, %v412
        %415 = vset.pattern.permute.xlu0 12
        %416 = vperm.xlu0 %415, %v255
        %v417 = vpop.permute.xlu0 %416
        %v419 = vmul.f32 %v417, %v306
        %v420 = vadd.f32 %v414, %v419
        %421 = vset.pattern.permute.xlu0 13
        %422 = vperm.xlu0 %421, %v255
        %v423 = vpop.permute.xlu0 %422
        %v425 = vmul.f32 %v423, %v306
        %427 = vrot.lane.b32.xlu0 %v425, 96
        %v428 = vpop.permute.xlu0 %427
        %v430 = vadd.f32 %v420, %v428
        %431 = vset.pattern.permute.xlu0 14
        %432 = vperm.xlu0 %431, %v255
        %v433 = vpop.permute.xlu0 %432
        %v435 = vmul.f32 %v433, %v306
        %437 = vrot.lane.b32.xlu0 %v435, 64
        %v438 = vpop.permute.xlu0 %437
        %v440 = vadd.f32 %v430, %v438
        %441 = vset.pattern.permute.xlu0 15
        %442 = vperm.xlu0 %441, %v255
        %v443 = vpop.permute.xlu0 %442
        %v445 = vmul.f32 %v443, %v306
        %447 = vrot.lane.b32.xlu0 %v445, 32
        %v448 = vpop.permute.xlu0 %447
        %v450 = vadd.f32 %v440, %v448
        %452 = vrot.lane.b32.xlu0 %v450, 32
        %v453 = vpop.permute.xlu0 %452
        %vm455 = vcmask 261120
        %v456 = vsel %vm455, %v379, %v453
        %v457 = vld [vmem:[#allocation5] sm:$0xff]
        %458 = vset.pattern.permute.xlu0 2
        %459 = vperm.xlu0 %458, %v224
        %v460 = vpop.permute.xlu0 %459
        %vm461 = vcmp.eq.s32.totalorder %v226, %v460
        %v462 = vsel %vm461, 1, 0
        %v463 = vcvt.s32.f32 %v462
        %v465 = vsel %vm233, %v463, 0
        %467 = vmatpush.msra.mxu0 0.0
        %468 = vmatpush.msra.mxu0 0.0
        %469 = vmatpush.msra.mxu0 0.0
        %470 = vmatpush.msra.mxu0 0.0
        %471 = vmatpush.msra.mxu0 0.0
        %472 = vmatpush.msra.mxu0 0.0
        %473 = vmatpush.msra.mxu0 0.0
        %474 = vmatpush.msra.mxu0 0.0
        %475 = vmatpush.msra.mxu0 0.0
        %476 = vmatpush.msra.mxu0 0.0
        %477 = vmatpush.msra.mxu0 0.0
        %478 = vmatpush.msra.mxu0 0.0
        %479 = vmatpush.msra.mxu0 0.0
        %480 = vmatpush.msra.mxu0 0.0
        %481 = vmatpush.msra.mxu0 0.0
        %482 = vmatpush.msra.mxu0 %v457
        %483 = vmatmul.f32.gmra.mxu0 %v465
        %v484 = vpop.f32.mrf.mxu0
        %v485 = vadd.f32 0.0, %v484
        %486 = vdwg.mxu0
        %488 = vset.pattern.permute.xlu0 0
        %489 = vperm.xlu0 %488, %v456
        %v490 = vpop.permute.xlu0 %489
        %v492 = vmul.f32 %v490, %v485
        %493 = vset.pattern.permute.xlu0 1
        %494 = vperm.xlu0 %493, %v456
        %v495 = vpop.permute.xlu0 %494
        %v497 = vmul.f32 %v495, %v485
        %499 = vrot.lane.b32.xlu0 %v497, 124
        %v500 = vpop.permute.xlu0 %499
        %v502 = vadd.f32 %v492, %v500
        %503 = vset.pattern.permute.xlu0 2
        %504 = vperm.xlu0 %503, %v456
        %v505 = vpop.permute.xlu0 %504
        %v507 = vmul.f32 %v505, %v485
        %509 = vrot.lane.b32.xlu0 %v507, 120
        %v510 = vpop.permute.xlu0 %509
        %v512 = vadd.f32 %v502, %v510
        %513 = vset.pattern.permute.xlu0 3
        %514 = vperm.xlu0 %513, %v456
        %v515 = vpop.permute.xlu0 %514
        %v517 = vmul.f32 %v515, %v485
        %519 = vrot.lane.b32.xlu0 %v517, 116
        %v520 = vpop.permute.xlu0 %519
        %v522 = vadd.f32 %v512, %v520
        %523 = vset.pattern.permute.xlu0 4
        %524 = vperm.xlu0 %523, %v456
        %v525 = vpop.permute.xlu0 %524
        %v527 = vmul.f32 %v525, %v485
        %529 = vrot.lane.b32.xlu0 %v527, 112
        %v530 = vpop.permute.xlu0 %529
        %v532 = vadd.f32 %v522, %v530
        %533 = vset.pattern.permute.xlu0 5
        %534 = vperm.xlu0 %533, %v456
        %v535 = vpop.permute.xlu0 %534
        %v537 = vmul.f32 %v535, %v485
        %539 = vrot.lane.b32.xlu0 %v537, 108
        %v540 = vpop.permute.xlu0 %539
        %v542 = vadd.f32 %v532, %v540
        %543 = vset.pattern.permute.xlu0 6
        %544 = vperm.xlu0 %543, %v456
        %v545 = vpop.permute.xlu0 %544
        %v547 = vmul.f32 %v545, %v485
        %549 = vrot.lane.b32.xlu0 %v547, 104
        %v550 = vpop.permute.xlu0 %549
        %v552 = vadd.f32 %v542, %v550
        %553 = vset.pattern.permute.xlu0 7
        %554 = vperm.xlu0 %553, %v456
        %v555 = vpop.permute.xlu0 %554
        %v557 = vmul.f32 %v555, %v485
        %559 = vrot.lane.b32.xlu0 %v557, 100
        %v560 = vpop.permute.xlu0 %559
        %v562 = vadd.f32 %v552, %v560
        %563 = vset.pattern.permute.xlu0 8
        %564 = vperm.xlu0 %563, %v456
        %v565 = vpop.permute.xlu0 %564
        %v567 = vmul.f32 %v565, %v485
        %568 = vset.pattern.permute.xlu0 9
        %569 = vperm.xlu0 %568, %v456
        %v570 = vpop.permute.xlu0 %569
        %v572 = vmul.f32 %v570, %v485
        %574 = vrot.lane.b32.xlu0 %v572, 124
        %v575 = vpop.permute.xlu0 %574
        %v577 = vadd.f32 %v567, %v575
        %578 = vset.pattern.permute.xlu0 10
        %579 = vperm.xlu0 %578, %v456
        %v580 = vpop.permute.xlu0 %579
        %v582 = vmul.f32 %v580, %v485
        %584 = vrot.lane.b32.xlu0 %v582, 120
        %v585 = vpop.permute.xlu0 %584
        %v587 = vadd.f32 %v577, %v585
        %588 = vset.pattern.permute.xlu0 11
        %589 = vperm.xlu0 %588, %v456
        %v590 = vpop.permute.xlu0 %589
        %v592 = vmul.f32 %v590, %v485
        %594 = vrot.lane.b32.xlu0 %v592, 116
        %v595 = vpop.permute.xlu0 %594
        %v597 = vadd.f32 %v587, %v595
        %598 = vset.pattern.permute.xlu0 12
        %599 = vperm.xlu0 %598, %v456
        %v600 = vpop.permute.xlu0 %599
        %v602 = vmul.f32 %v600, %v485
        %604 = vrot.lane.b32.xlu0 %v602, 112
        %v605 = vpop.permute.xlu0 %604
        %v607 = vadd.f32 %v597, %v605
        %608 = vset.pattern.permute.xlu0 13
        %609 = vperm.xlu0 %608, %v456
        %v610 = vpop.permute.xlu0 %609
        %v612 = vmul.f32 %v610, %v485
        %614 = vrot.lane.b32.xlu0 %v612, 108
        %v615 = vpop.permute.xlu0 %614
        %v617 = vadd.f32 %v607, %v615
        %618 = vset.pattern.permute.xlu0 14
        %619 = vperm.xlu0 %618, %v456
        %v620 = vpop.permute.xlu0 %619
        %v622 = vmul.f32 %v620, %v485
        %624 = vrot.lane.b32.xlu0 %v622, 104
        %v625 = vpop.permute.xlu0 %624
        %v627 = vadd.f32 %v617, %v625
        %628 = vset.pattern.permute.xlu0 15
        %629 = vperm.xlu0 %628, %v456
        %v630 = vpop.permute.xlu0 %629
        %v632 = vmul.f32 %v630, %v485
        %634 = vrot.lane.b32.xlu0 %v632, 100
        %v635 = vpop.permute.xlu0 %634
        %v637 = vadd.f32 %v627, %v635
        %638 = vset.pattern.permute.xlu0 16
        %639 = vperm.xlu0 %638, %v456
        %v640 = vpop.permute.xlu0 %639
        %v642 = vmul.f32 %v640, %v485
        %643 = vset.pattern.permute.xlu0 17
        %644 = vperm.xlu0 %643, %v456
        %v645 = vpop.permute.xlu0 %644
        %v647 = vmul.f32 %v645, %v485
        %649 = vrot.lane.b32.xlu0 %v647, 124
        %v650 = vpop.permute.xlu0 %649
        %v652 = vadd.f32 %v642, %v650
        %653 = vset.pattern.permute.xlu0 18
        %654 = vperm.xlu0 %653, %v456
        %v655 = vpop.permute.xlu0 %654
        %v657 = vmul.f32 %v655, %v485
        %659 = vrot.lane.b32.xlu0 %v657, 120
        %v660 = vpop.permute.xlu0 %659
        %v662 = vadd.f32 %v652, %v660
        %663 = vset.pattern.permute.xlu0 19
        %664 = vperm.xlu0 %663, %v456
        %v665 = vpop.permute.xlu0 %664
        %v667 = vmul.f32 %v665, %v485
        %669 = vrot.lane.b32.xlu0 %v667, 116
        %v670 = vpop.permute.xlu0 %669
        %v672 = vadd.f32 %v662, %v670
        %673 = vset.pattern.permute.xlu0 20
        %674 = vperm.xlu0 %673, %v456
        %v675 = vpop.permute.xlu0 %674
        %v677 = vmul.f32 %v675, %v485
        %679 = vrot.lane.b32.xlu0 %v677, 112
        %v680 = vpop.permute.xlu0 %679
        %v682 = vadd.f32 %v672, %v680
        %683 = vset.pattern.permute.xlu0 21
        %684 = vperm.xlu0 %683, %v456
        %v685 = vpop.permute.xlu0 %684
        %v687 = vmul.f32 %v685, %v485
        %689 = vrot.lane.b32.xlu0 %v687, 108
        %v690 = vpop.permute.xlu0 %689
        %v692 = vadd.f32 %v682, %v690
        %693 = vset.pattern.permute.xlu0 22
        %694 = vperm.xlu0 %693, %v456
        %v695 = vpop.permute.xlu0 %694
        %v697 = vmul.f32 %v695, %v485
        %699 = vrot.lane.b32.xlu0 %v697, 104
        %v700 = vpop.permute.xlu0 %699
        %v702 = vadd.f32 %v692, %v700
        %703 = vset.pattern.permute.xlu0 23
        %704 = vperm.xlu0 %703, %v456
        %v705 = vpop.permute.xlu0 %704
        %v707 = vmul.f32 %v705, %v485
        %709 = vrot.lane.b32.xlu0 %v707, 100
        %v710 = vpop.permute.xlu0 %709
        %v712 = vadd.f32 %v702, %v710
        %713 = vset.pattern.permute.xlu0 24
        %714 = vperm.xlu0 %713, %v456
        %v715 = vpop.permute.xlu0 %714
        %v717 = vmul.f32 %v715, %v485
        %718 = vset.pattern.permute.xlu0 25
        %719 = vperm.xlu0 %718, %v456
        %v720 = vpop.permute.xlu0 %719
        %v722 = vmul.f32 %v720, %v485
        %724 = vrot.lane.b32.xlu0 %v722, 124
        %v725 = vpop.permute.xlu0 %724
        %v727 = vadd.f32 %v717, %v725
        %728 = vset.pattern.permute.xlu0 26
        %729 = vperm.xlu0 %728, %v456
        %v730 = vpop.permute.xlu0 %729
        %v732 = vmul.f32 %v730, %v485
        %734 = vrot.lane.b32.xlu0 %v732, 120
        %v735 = vpop.permute.xlu0 %734
        %v737 = vadd.f32 %v727, %v735
        %738 = vset.pattern.permute.xlu0 27
        %739 = vperm.xlu0 %738, %v456
        %v740 = vpop.permute.xlu0 %739
        %v742 = vmul.f32 %v740, %v485
        %744 = vrot.lane.b32.xlu0 %v742, 116
        %v745 = vpop.permute.xlu0 %744
        %v747 = vadd.f32 %v737, %v745
        %748 = vset.pattern.permute.xlu0 28
        %749 = vperm.xlu0 %748, %v456
        %v750 = vpop.permute.xlu0 %749
        %v752 = vmul.f32 %v750, %v485
        %754 = vrot.lane.b32.xlu0 %v752, 112
        %v755 = vpop.permute.xlu0 %754
        %v757 = vadd.f32 %v747, %v755
        %758 = vset.pattern.permute.xlu0 29
        %759 = vperm.xlu0 %758, %v456
        %v760 = vpop.permute.xlu0 %759
        %v762 = vmul.f32 %v760, %v485
        %764 = vrot.lane.b32.xlu0 %v762, 108
        %v765 = vpop.permute.xlu0 %764
        %v767 = vadd.f32 %v757, %v765
        %768 = vset.pattern.permute.xlu0 30
        %769 = vperm.xlu0 %768, %v456
        %v770 = vpop.permute.xlu0 %769
        %v772 = vmul.f32 %v770, %v485
        %774 = vrot.lane.b32.xlu0 %v772, 104
        %v775 = vpop.permute.xlu0 %774
        %v777 = vadd.f32 %v767, %v775
        %778 = vset.pattern.permute.xlu0 31
        %779 = vperm.xlu0 %778, %v456
        %v780 = vpop.permute.xlu0 %779
        %v782 = vmul.f32 %v780, %v485
        %784 = vrot.lane.b32.xlu0 %v782, 100
        %v785 = vpop.permute.xlu0 %784
        %v787 = vadd.f32 %v777, %v785
        %788 = vset.pattern.permute.xlu0 32
        %789 = vperm.xlu0 %788, %v456
        %v790 = vpop.permute.xlu0 %789
        %v792 = vmul.f32 %v790, %v485
        %793 = vset.pattern.permute.xlu0 33
        %794 = vperm.xlu0 %793, %v456
        %v795 = vpop.permute.xlu0 %794
        %v797 = vmul.f32 %v795, %v485
        %799 = vrot.lane.b32.xlu0 %v797, 124
        %v800 = vpop.permute.xlu0 %799
        %v802 = vadd.f32 %v792, %v800
        %803 = vset.pattern.permute.xlu0 34
        %804 = vperm.xlu0 %803, %v456
        %v805 = vpop.permute.xlu0 %804
        %v807 = vmul.f32 %v805, %v485
        %809 = vrot.lane.b32.xlu0 %v807, 120
        %v810 = vpop.permute.xlu0 %809
        %v812 = vadd.f32 %v802, %v810
        %813 = vset.pattern.permute.xlu0 35
        %814 = vperm.xlu0 %813, %v456
        %v815 = vpop.permute.xlu0 %814
        %v817 = vmul.f32 %v815, %v485
        %819 = vrot.lane.b32.xlu0 %v817, 116
        %v820 = vpop.permute.xlu0 %819
        %v822 = vadd.f32 %v812, %v820
        %823 = vset.pattern.permute.xlu0 36
        %824 = vperm.xlu0 %823, %v456
        %v825 = vpop.permute.xlu0 %824
        %v827 = vmul.f32 %v825, %v485
        %829 = vrot.lane.b32.xlu0 %v827, 112
        %v830 = vpop.permute.xlu0 %829
        %v832 = vadd.f32 %v822, %v830
        %833 = vset.pattern.permute.xlu0 37
        %834 = vperm.xlu0 %833, %v456
        %v835 = vpop.permute.xlu0 %834
        %v837 = vmul.f32 %v835, %v485
        %839 = vrot.lane.b32.xlu0 %v837, 108
        %v840 = vpop.permute.xlu0 %839
        %v842 = vadd.f32 %v832, %v840
        %843 = vset.pattern.permute.xlu0 38
        %844 = vperm.xlu0 %843, %v456
        %v845 = vpop.permute.xlu0 %844
        %v847 = vmul.f32 %v845, %v485
        %849 = vrot.lane.b32.xlu0 %v847, 104
        %v850 = vpop.permute.xlu0 %849
        %v852 = vadd.f32 %v842, %v850
        %853 = vset.pattern.permute.xlu0 39
        %854 = vperm.xlu0 %853, %v456
        %v855 = vpop.permute.xlu0 %854
        %v857 = vmul.f32 %v855, %v485
        %859 = vrot.lane.b32.xlu0 %v857, 100
        %v860 = vpop.permute.xlu0 %859
        %v862 = vadd.f32 %v852, %v860
        %863 = vset.pattern.permute.xlu0 40
        %864 = vperm.xlu0 %863, %v456
        %v865 = vpop.permute.xlu0 %864
        %v867 = vmul.f32 %v865, %v485
        %868 = vset.pattern.permute.xlu0 41
        %869 = vperm.xlu0 %868, %v456
        %v870 = vpop.permute.xlu0 %869
        %v872 = vmul.f32 %v870, %v485
        %874 = vrot.lane.b32.xlu0 %v872, 124
        %v875 = vpop.permute.xlu0 %874
        %v877 = vadd.f32 %v867, %v875
        %878 = vset.pattern.permute.xlu0 42
        %879 = vperm.xlu0 %878, %v456
        %v880 = vpop.permute.xlu0 %879
        %v882 = vmul.f32 %v880, %v485
        %884 = vrot.lane.b32.xlu0 %v882, 120
        %v885 = vpop.permute.xlu0 %884
        %v887 = vadd.f32 %v877, %v885
        %888 = vset.pattern.permute.xlu0 43
        %889 = vperm.xlu0 %888, %v456
        %v890 = vpop.permute.xlu0 %889
        %v892 = vmul.f32 %v890, %v485
        %894 = vrot.lane.b32.xlu0 %v892, 116
        %v895 = vpop.permute.xlu0 %894
        %v897 = vadd.f32 %v887, %v895
        %898 = vset.pattern.permute.xlu0 44
        %899 = vperm.xlu0 %898, %v456
        %v900 = vpop.permute.xlu0 %899
        %v902 = vmul.f32 %v900, %v485
        %904 = vrot.lane.b32.xlu0 %v902, 112
        %v905 = vpop.permute.xlu0 %904
        %v907 = vadd.f32 %v897, %v905
        %908 = vset.pattern.permute.xlu0 45
        %909 = vperm.xlu0 %908, %v456
        %v910 = vpop.permute.xlu0 %909
        %v912 = vmul.f32 %v910, %v485
        %914 = vrot.lane.b32.xlu0 %v912, 108
        %v915 = vpop.permute.xlu0 %914
        %v917 = vadd.f32 %v907, %v915
        %918 = vset.pattern.permute.xlu0 46
        %919 = vperm.xlu0 %918, %v456
        %v920 = vpop.permute.xlu0 %919
        %v922 = vmul.f32 %v920, %v485
        %924 = vrot.lane.b32.xlu0 %v922, 104
        %v925 = vpop.permute.xlu0 %924
        %v927 = vadd.f32 %v917, %v925
        %928 = vset.pattern.permute.xlu0 47
        %929 = vperm.xlu0 %928, %v456
        %v930 = vpop.permute.xlu0 %929
        %v932 = vmul.f32 %v930, %v485
        %934 = vrot.lane.b32.xlu0 %v932, 100
        %v935 = vpop.permute.xlu0 %934
        %v937 = vadd.f32 %v927, %v935
        %938 = vset.pattern.permute.xlu0 48
        %939 = vperm.xlu0 %938, %v456
        %v940 = vpop.permute.xlu0 %939
        %v942 = vmul.f32 %v940, %v485
        %943 = vset.pattern.permute.xlu0 49
        %944 = vperm.xlu0 %943, %v456
        %v945 = vpop.permute.xlu0 %944
        %v947 = vmul.f32 %v945, %v485
        %949 = vrot.lane.b32.xlu0 %v947, 124
        %v950 = vpop.permute.xlu0 %949
        %v952 = vadd.f32 %v942, %v950
        %953 = vset.pattern.permute.xlu0 50
        %954 = vperm.xlu0 %953, %v456
        %v955 = vpop.permute.xlu0 %954
        %v957 = vmul.f32 %v955, %v485
        %959 = vrot.lane.b32.xlu0 %v957, 120
        %v960 = vpop.permute.xlu0 %959
        %v962 = vadd.f32 %v952, %v960
        %963 = vset.pattern.permute.xlu0 51
        %964 = vperm.xlu0 %963, %v456
        %v965 = vpop.permute.xlu0 %964
        %v967 = vmul.f32 %v965, %v485
        %969 = vrot.lane.b32.xlu0 %v967, 116
        %v970 = vpop.permute.xlu0 %969
        %v972 = vadd.f32 %v962, %v970
        %973 = vset.pattern.permute.xlu0 52
        %974 = vperm.xlu0 %973, %v456
        %v975 = vpop.permute.xlu0 %974
        %v977 = vmul.f32 %v975, %v485
        %979 = vrot.lane.b32.xlu0 %v977, 112
        %v980 = vpop.permute.xlu0 %979
        %v982 = vadd.f32 %v972, %v980
        %983 = vset.pattern.permute.xlu0 53
        %984 = vperm.xlu0 %983, %v456
        %v985 = vpop.permute.xlu0 %984
        %v987 = vmul.f32 %v985, %v485
        %989 = vrot.lane.b32.xlu0 %v987, 108
        %v990 = vpop.permute.xlu0 %989
        %v992 = vadd.f32 %v982, %v990
        %993 = vset.pattern.permute.xlu0 54
        %994 = vperm.xlu0 %993, %v456
        %v995 = vpop.permute.xlu0 %994
        %v997 = vmul.f32 %v995, %v485
        %999 = vrot.lane.b32.xlu0 %v997, 104
        %v1000 = vpop.permute.xlu0 %999
        %v1002 = vadd.f32 %v992, %v1000
        %1003 = vset.pattern.permute.xlu0 55
        %1004 = vperm.xlu0 %1003, %v456
        %v1005 = vpop.permute.xlu0 %1004
        %v1007 = vmul.f32 %v1005, %v485
        %1009 = vrot.lane.b32.xlu0 %v1007, 100
        %v1010 = vpop.permute.xlu0 %1009
        %v1012 = vadd.f32 %v1002, %v1010
        %1013 = vset.pattern.permute.xlu0 56
        %1014 = vperm.xlu0 %1013, %v456
        %v1015 = vpop.permute.xlu0 %1014
        %v1017 = vmul.f32 %v1015, %v485
        %1018 = vset.pattern.permute.xlu0 57
        %1019 = vperm.xlu0 %1018, %v456
        %v1020 = vpop.permute.xlu0 %1019
        %v1022 = vmul.f32 %v1020, %v485
        %1024 = vrot.lane.b32.xlu0 %v1022, 124
        %v1025 = vpop.permute.xlu0 %1024
        %v1027 = vadd.f32 %v1017, %v1025
        %1028 = vset.pattern.permute.xlu0 58
        %1029 = vperm.xlu0 %1028, %v456
        %v1030 = vpop.permute.xlu0 %1029
        %v1032 = vmul.f32 %v1030, %v485
        %1034 = vrot.lane.b32.xlu0 %v1032, 120
        %v1035 = vpop.permute.xlu0 %1034
        %v1037 = vadd.f32 %v1027, %v1035
        %1038 = vset.pattern.permute.xlu0 59
        %1039 = vperm.xlu0 %1038, %v456
        %v1040 = vpop.permute.xlu0 %1039
        %v1042 = vmul.f32 %v1040, %v485
        %1044 = vrot.lane.b32.xlu0 %v1042, 116
        %v1045 = vpop.permute.xlu0 %1044
        %v1047 = vadd.f32 %v1037, %v1045
        %1048 = vset.pattern.permute.xlu0 60
        %1049 = vperm.xlu0 %1048, %v456
        %v1050 = vpop.permute.xlu0 %1049
        %v1052 = vmul.f32 %v1050, %v485
        %1054 = vrot.lane.b32.xlu0 %v1052, 112
        %v1055 = vpop.permute.xlu0 %1054
        %v1057 = vadd.f32 %v1047, %v1055
        %1058 = vset.pattern.permute.xlu0 61
        %1059 = vperm.xlu0 %1058, %v456
        %v1060 = vpop.permute.xlu0 %1059
        %v1062 = vmul.f32 %v1060, %v485
        %1064 = vrot.lane.b32.xlu0 %v1062, 108
        %v1065 = vpop.permute.xlu0 %1064
        %v1067 = vadd.f32 %v1057, %v1065
        %1068 = vset.pattern.permute.xlu0 62
        %1069 = vperm.xlu0 %1068, %v456
        %v1070 = vpop.permute.xlu0 %1069
        %v1072 = vmul.f32 %v1070, %v485
        %1074 = vrot.lane.b32.xlu0 %v1072, 104
        %v1075 = vpop.permute.xlu0 %1074
        %v1077 = vadd.f32 %v1067, %v1075
        %1078 = vset.pattern.permute.xlu0 63
        %1079 = vperm.xlu0 %1078, %v456
        %v1080 = vpop.permute.xlu0 %1079
        %v1082 = vmul.f32 %v1080, %v485
        %1084 = vrot.lane.b32.xlu0 %v1082, 100
        %v1085 = vpop.permute.xlu0 %1084
        %v1087 = vadd.f32 %v1077, %v1085
        %1089 = vrot.lane.b32.xlu0 %v637, 4
        %v1090 = vpop.permute.xlu0 %1089
        %1093 = vrot.lane.b32.xlu0 %v712, 8
        %v1094 = vpop.permute.xlu0 %1093
        %1097 = vrot.lane.b32.xlu0 %v787, 12
        %v1098 = vpop.permute.xlu0 %1097
        %1101 = vrot.lane.b32.xlu0 %v862, 16
        %v1102 = vpop.permute.xlu0 %1101
        %1105 = vrot.lane.b32.xlu0 %v937, 20
        %v1106 = vpop.permute.xlu0 %1105
        %1109 = vrot.lane.b32.xlu0 %v1012, 24
        %v1110 = vpop.permute.xlu0 %1109
        %1113 = vrot.lane.b32.xlu0 %v1087, 28
        %v1114 = vpop.permute.xlu0 %1113
        %vm1116 = vcmask 31744
        %v1117 = vsel %vm1116, %v562, %v1090
        %v1118 = vsel %vm233, %v1117, %v1094
        %vm1119 = vcmask 97280
        %v1120 = vsel %vm1119, %v1118, %v1098
        %vm1121 = vcmask 130048
        %v1122 = vsel %vm1121, %v1120, %v1102
        %vm1123 = vcmask 162816
        %v1124 = vsel %vm1123, %v1122, %v1106
        %vm1125 = vcmask 195584
        %v1126 = vsel %vm1125, %v1124, %v1110
        %vm1127 = vcmask 228352
        %v1128 = vsel %vm1127, %v1126, %v1114
        %1129 = vst.msk [vmem:[%s218] sm:$0xff] %vm455, %v1128
        %s1130 = sand.u32 %s117, 1
        %s1131 = scalar_lea.sflag [#allocation4], %s1130
        %s1132 = sand.u32 %s117, 1
        %s1133 = smul.addr %s1132, 8
        %s1134 = scalar_lea.vmem [#allocation7], %s1133
        // Predicated region
        $region45: #{tpu_custom_call.1} parent=35 // pred_check
          %p1135 = pneg %p127
        $region46: #{tpu_custom_call.1} parent=35 // pred_check_branch
          %1137 = sbr.rel (%p1135) target = $region48
        $region47: #{tpu_custom_call.1} parent=35 // pred_region
          %1139 = vsyncadd %s1131, 0
          %s1140 = smul.addr %s20, 8
          %s1141 = scalar_lea.hbm %s4, %s1140
          %s1143 = sshll.u32 %s1134, 4
          %s1144 = int_to_ptr.vmem [resolvable:$true] %s1143
          %s1145 = sshll.u32 %s1141, 4
          %s1146 = int_to_ptr.hbm [resolvable:$true] %s1145
          %1148 = dma.vmem_to_hbm [thread:$0]  %s1144, 128, %s1146, %s1131
        $region48: #{tpu_custom_call.1} parent=35 // pred_fallthru
          _
      $region36: #{tpu_custom_call.1} parent=5 // pred_fallthru
        _
      %p1149 = scmp.le.s32.totalorder 2, %s15
      // Predicated region
      $region49: #{tpu_custom_call.1} parent=5 // pred_check
        %p1150 = pneg %p1149
      $region50: #{tpu_custom_call.1} parent=5 // pred_check_branch
        %1152 = sbr.rel (%p1150) target = $region52
      $region51: #{tpu_custom_call.1} parent=5 // pred_region
        %s1153 = ssub.s32 %s15, 2
        // Predicated region
        $region53: #{tpu_custom_call.1} parent=51 // pred_check
          %p1154 = pneg %p133
        $region54: #{tpu_custom_call.1} parent=51 // pred_check_branch
          %1156 = sbr.rel (%p1154) target = $region56
        $region55: #{tpu_custom_call.1} parent=51 // pred_region
          %s1157 = sand.u32 %s118, 1
          %s1158 = scalar_lea.sflag [#allocation4], %s1157
          %s1159 = sand.u32 %s118, 1
          %s1160 = smul.addr %s1159, 8
          %s1161 = scalar_lea.vmem [#allocation7], %s1160
          %1163 = dma.done %s1158, 128
        $region56: #{tpu_custom_call.1} parent=51 // pred_fallthru
          _
      $region52: #{tpu_custom_call.1} parent=5 // pred_fallthru
        _
    $region6: #{tpu_custom_call.1} parent=1 // loop_footer
      %s19 = sadd.s32 1, %s15
    $region7: #{tpu_custom_call.1} parent=1 // loop_footer_branch
      %14 = sbr.rel target = $region3
    $region8: #{tpu_custom_call.1} parent=1 // loop_exit
      _
    %1164 = vsyncpa [#allocation3], 1
    %s1165 = scalar_lea.sflag [#allocation3], 1
    %1166 = vsyncpa %s1165, 1
    %1167 = vsyncpa [#allocation6], 1
    %1168 = vsyncpa [#allocation4], 1
    %s1169 = scalar_lea.sflag [#allocation4], 1
    %1170 = vsyncpa %s1169, 1

// kernel: tpu_custom_call.1
$region0: #{tpu_custom_call.1}
  #allocation0 [shape = 'u32[]', space=smem, size = 0x4, offset = 0x4, fixed_abs, tag = 'smem constant byte address 0x4 - core index']
  #allocation1 [shape = 'u32[72,128]{1,0:T(1,128)}', space=vmem, size = 0x9000, scoped, tag = 'internal scratch']
  %s0 = inlined_call_operand.vmem [shape: s32[16,3], index: 0, kind: input, shape index: {}]
  %s1 = inlined_call_operand.hbm [shape: f32[8,16], index: 1, kind: input, shape index: {}]
  %s2 = inlined_call_operand.vmem [shape: f32[8,256], index: 2, kind: input, shape index: {}]
  %s3 = inlined_call_operand.hbm [shape: f32[8,32], index: 3, kind: input, shape index: {}]
  %s4 = inlined_call_operand.hbm [shape: f32[16,32], index: 4, kind: output, shape index: {}]
  %s5 = sld [smem:[#allocation0]]
  $region57: #{tpu_custom_call.1} parent=0
    _
  %s7 = ssub.s32 1, %s5
  %s8 = scalar_select 0, %s7, %s5
  $region1: #{tpu_custom_call.1} parent=0
    #allocation2 [shape = 'u8[4096]{0}', space=vmem, size = 0x1000, scoped, tag = 'input window, operand 1, single buffered']
    #allocation3 [shape = 's32[2]{0}', space=sflag, size = 0x8, scoped, tag = 'scoped memory for tpu_custom_call.1']
    #allocation4 [shape = 's32[2]{0}', space=sflag, size = 0x8, scoped, tag = 'scoped memory for tpu_custom_call.1']
    #allocation5 [shape = 'u8[4096]{0}', space=vmem, size = 0x1000, scoped, tag = 'input window, operand 3, single buffered']
    #allocation6 [shape = 's32[1]{0}', space=sflag, size = 0x4, scoped, tag = 'scoped memory for tpu_custom_call.1']
    #allocation7 [shape = 'u8[8192]{0}', space=vmem, size = 0x2000, scoped, tag = 'output window, operand 0']
    %9 = vsyncpa [#allocation3], 0
    %10 = vsyncpa [#allocation6], 0
    %11 = vsyncpa [#allocation4], 0
    %s12 = scalar_lea.sflag [#allocation4], 1
    %13 = vsyncpa %s12, 0
    loop: start=0, step=1, limit=4
    $region2: #{tpu_custom_call.1} parent=1 // loop_pre_header
      _
    $region3: #{tpu_custom_call.1} parent=1 // loop_header
      %s15 = sphi 0, %s19
      %p16 = scmp.ge.s32.totalorder %s15, 4
      %s25 = sphi 0, %s27
      %s28 = sphi 0, %s25
      %s29 = sphi 0, %s28
      %s45 = sphi 0, %s29
      %s49 = sphi 0, %s49
      %s51 = sphi 0, %s49
      %s52 = sphi 0, %s51
      %s66 = sphi 0, %s52
      %s70 = sphi 0, %s70
      %s72 = sphi 0, %s70
      %s73 = sphi 0, %s72
      %s87 = sphi 0, %s73
      %s91 = sphi 0, %s91
      %s93 = sphi 0, %s91
      %s94 = sphi 0, %s93
      %s108 = sphi 0, %s94
      %s114 = sphi 0, %s116
      %s117 = sphi 0, %s114
      %s118 = sphi 0, %s117
      %s134 = sphi 0, %s118
    $region4: #{tpu_custom_call.1} parent=1 // loop_header_branch
      %18 = sbr.rel (%p16) target = $region8
    $region5: #{tpu_custom_call.1} parent=1 // loop_body
      %s20 = ssub.s32 %s15, 1
      %s21 = ssub.s32 %s15, 2
      %s22 = sadd.s32 %s15, 1
      %s23 = ssub.s32 %s15, %s22
      %p24 = scmp.eq.s32.totalorder %s23, 0
      %s26 = sadd.s32 %s25, 1
      %s27 = scalar_select %p24, %s25, %s26
      %p30 = pneg %p24
      %p31 = scmp.eq.s32.totalorder %s15, 1
      %p32 = por %p30, %p31
      %p33 = scmp.ne.s32.totalorder %s25, %s28
      %p34 = scmp.eq.s32.totalorder %s15, 0
      %p35 = por %p33, %p34
      %p36 = scmp.ne.s32.totalorder %s25, %s28
      %p37 = scmp.eq.s32.totalorder %s20, 1
      %p38 = por %p36, %p37
      %p39 = scmp.ne.s32.totalorder %s28, %s29
      %p40 = scmp.eq.s32.totalorder %s20, 0
      %p41 = por %p39, %p40
      %p42 = scmp.ne.s32.totalorder %s28, %s29
      %p43 = scmp.eq.s32.totalorder %s21, 1
      %p44 = por %p42, %p43
      %p46 = scmp.ne.s32.totalorder %s29, %s45
      %p47 = scmp.eq.s32.totalorder %s21, 0
      %p48 = por %p46, %p47
      %s50 = sadd.s32 %s49, 1
      %p53 = scmp.eq.s32.totalorder %s15, 1
      %p54 = scmp.ne.s32.totalorder %s49, %s51
      %p55 = scmp.eq.s32.totalorder %s15, 0
      %p56 = por %p54, %p55
      %p57 = scmp.ne.s32.totalorder %s49, %s51
      %p58 = scmp.eq.s32.totalorder %s20, 1
      %p59 = por %p57, %p58
      %p60 = scmp.ne.s32.totalorder %s51, %s52
      %p61 = scmp.eq.s32.totalorder %s20, 0
      %p62 = por %p60, %p61
      %p63 = scmp.ne.s32.totalorder %s51, %s52
      %p64 = scmp.eq.s32.totalorder %s21, 1
      %p65 = por %p63, %p64
      %p67 = scmp.ne.s32.totalorder %s52, %s66
      %p68 = scmp.eq.s32.totalorder %s21, 0
      %p69 = por %p67, %p68
      %s71 = sadd.s32 %s70, 1
      %p74 = scmp.eq.s32.totalorder %s15, 1
      %p75 = scmp.ne.s32.totalorder %s70, %s72
      %p76 = scmp.eq.s32.totalorder %s15, 0
      %p77 = por %p75, %p76
      %p78 = scmp.ne.s32.totalorder %s70, %s72
      %p79 = scmp.eq.s32.totalorder %s20, 1
      %p80 = por %p78, %p79
      %p81 = scmp.ne.s32.totalorder %s72, %s73
      %p82 = scmp.eq.s32.totalorder %s20, 0
      %p83 = por %p81, %p82
      %p84 = scmp.ne.s32.totalorder %s72, %s73
      %p85 = scmp.eq.s32.totalorder %s21, 1
      %p86 = por %p84, %p85
      %p88 = scmp.ne.s32.totalorder %s73, %s87
      %p89 = scmp.eq.s32.totalorder %s21, 0
      %p90 = por %p88, %p89
      %s92 = sadd.s32 %s91, 1
      %p95 = scmp.eq.s32.totalorder %s15, 1
      %p96 = scmp.ne.s32.totalorder %s91, %s93
      %p97 = scmp.eq.s32.totalorder %s15, 0
      %p98 = por %p96, %p97
      %p99 = scmp.ne.s32.totalorder %s91, %s93
      %p100 = scmp.eq.s32.totalorder %s20, 1
      %p101 = por %p99, %p100
      %p102 = scmp.ne.s32.totalorder %s93, %s94
      %p103 = scmp.eq.s32.totalorder %s20, 0
      %p104 = por %p102, %p103
      %p105 = scmp.ne.s32.totalorder %s93, %s94
      %p106 = scmp.eq.s32.totalorder %s21, 1
      %p107 = por %p105, %p106
      %p109 = scmp.ne.s32.totalorder %s94, %s108
      %p110 = scmp.eq.s32.totalorder %s21, 0
      %p111 = por %p109, %p110
      %s112 = ssub.s32 %s15, %s22
      %p113 = scmp.eq.s32.totalorder %s112, 0
      %s115 = sadd.s32 %s114, 1
      %s116 = scalar_select %p113, %s114, %s115
      %p119 = pneg %p113
      %p120 = scmp.eq.s32.totalorder %s15, 1
      %p121 = por %p119, %p120
      %p122 = scmp.ne.s32.totalorder %s114, %s117
      %p123 = scmp.eq.s32.totalorder %s15, 0
      %p124 = por %p122, %p123
      %p125 = scmp.ne.s32.totalorder %s114, %s117
      %p126 = scmp.eq.s32.totalorder %s20, 1
      %p127 = por %p125, %p126
      %p128 = scmp.ne.s32.totalorder %s117, %s118
      %p129 = scmp.eq.s32.totalorder %s20, 0
      %p130 = por %p128, %p129
      %p131 = scmp.ne.s32.totalorder %s117, %s118
      %p132 = scmp.eq.s32.totalorder %s21, 1
      %p133 = por %p131, %p132
      %p135 = scmp.ne.s32.totalorder %s118, %s134
      %p136 = scmp.eq.s32.totalorder %s21, 0
      %p137 = por %p135, %p136
      %p138 = scmp.le.s32.totalorder 1, %s15
      %p139 = scmp.lt.s32.totalorder %s15, 3
      %p140 = pnand %p138, %p139
      %p141 = pneg %p140
      // Predicated region
      $region9: #{tpu_custom_call.1} parent=5 // pred_check
        _
      $region10: #{tpu_custom_call.1} parent=5 // pred_check_branch
        %143 = sbr.rel (%p140) target = $region12
      $region11: #{tpu_custom_call.1} parent=5 // pred_region
        %s144 = ssub.s32 %s15, 1
        // Predicated region
        $region13: #{tpu_custom_call.1} parent=11 // pred_check
          %p145 = pneg %p62
        $region14: #{tpu_custom_call.1} parent=11 // pred_check_branch
          %147 = sbr.rel (%p145) target = $region16
        $region15: #{tpu_custom_call.1} parent=11 // pred_region
          %149 = vsyncadd [#allocation3], 0
          %s151 = sshll.u32 %s1, 4
          %s152 = int_to_ptr.hbm [resolvable:$true] %s151
          %s153 = sshll.u32 [#allocation2], 4
          %s154 = int_to_ptr.vmem [resolvable:$true] %s153
          %156 = dma.hbm_to_vmem [thread:$0]  %s152, 128, %s154, [#allocation3]
        $region16: #{tpu_custom_call.1} parent=11 // pred_fallthru
          _
        // Predicated region
        $region17: #{tpu_custom_call.1} parent=11 // pred_check
          %p157 = pneg %p83
        $region18: #{tpu_custom_call.1} parent=11 // pred_check_branch
          %159 = sbr.rel (%p157) target = $region20
        $region19: #{tpu_custom_call.1} parent=11 // pred_region
          _
        $region20: #{tpu_custom_call.1} parent=11 // pred_fallthru
          _
        // Predicated region
        $region21: #{tpu_custom_call.1} parent=11 // pred_check
          %p160 = pneg %p104
        $region22: #{tpu_custom_call.1} parent=11 // pred_check_branch
          %162 = sbr.rel (%p160) target = $region24
        $region23: #{tpu_custom_call.1} parent=11 // pred_region
          %164 = vsyncadd [#allocation6], 0
          %s166 = sshll.u32 %s3, 4
          %s167 = int_to_ptr.hbm [resolvable:$true] %s166
          %s168 = sshll.u32 [#allocation5], 4
          %s169 = int_to_ptr.vmem [resolvable:$true] %s168
          %171 = dma.hbm_to_vmem [thread:$0]  %s167, 128, %s169, [#allocation6]
        $region24: #{tpu_custom_call.1} parent=11 // pred_fallthru
          _
      $region12: #{tpu_custom_call.1} parent=5 // pred_fallthru
        _
      %p172 = scmp.lt.s32.totalorder %s15, 2
      // Predicated region
      $region25: #{tpu_custom_call.1} parent=5 // pred_check
        %p173 = pneg %p172
      $region26: #{tpu_custom_call.1} parent=5 // pred_check_branch
        %175 = sbr.rel (%p173) target = $region28
      $region27: #{tpu_custom_call.1} parent=5 // pred_region
        // Predicated region
        $region29: #{tpu_custom_call.1} parent=27 // pred_check
          %p176 = pneg %p35
        $region30: #{tpu_custom_call.1} parent=27 // pred_check_branch
          %178 = sbr.rel (%p176) target = $region32
        $region31: #{tpu_custom_call.1} parent=27 // pred_region
          %p179 = scmp.lt.s32.totalorder %s15, 1
          %s180 = scalar_select %p179, %s15, 1
          %s181 = smul.addr %s180, 8
          %s182 = scalar_lea.vmem %s0, %s181
        $region32: #{tpu_custom_call.1} parent=27 // pred_fallthru
          _
      $region28: #{tpu_custom_call.1} parent=5 // pred_fallthru
        _
      %p183 = scmp.le.s32.totalorder 1, %s15
      %p184 = scmp.lt.s32.totalorder %s15, 3
      %p185 = pnand %p183, %p184
      %p186 = pneg %p185
      // Predicated region
      $region33: #{tpu_custom_call.1} parent=5 // pred_check
        _
      $region34: #{tpu_custom_call.1} parent=5 // pred_check_branch
        %188 = sbr.rel (%p185) target = $region36
      $region35: #{tpu_custom_call.1} parent=5 // pred_region
        %s189 = ssub.s32 %s15, 1
        // Predicated region
        $region37: #{tpu_custom_call.1} parent=35 // pred_check
          %p190 = pneg %p62
        $region38: #{tpu_custom_call.1} parent=35 // pred_check_branch
          %192 = sbr.rel (%p190) target = $region40
        $region39: #{tpu_custom_call.1} parent=35 // pred_region
          %194 = dma.done [#allocation3], 128
        $region40: #{tpu_custom_call.1} parent=35 // pred_fallthru
          _
        // Predicated region
        $region41: #{tpu_custom_call.1} parent=35 // pred_check
          %p195 = pneg %p104
        $region42: #{tpu_custom_call.1} parent=35 // pred_check_branch
          %197 = sbr.rel (%p195) target = $region44
        $region43: #{tpu_custom_call.1} parent=35 // pred_region
          %199 = dma.done [#allocation6], 128
        $region44: #{tpu_custom_call.1} parent=35 // pred_fallthru
          _
        %p200 = scmp.lt.s32.totalorder %s20, 1
        %s201 = scalar_select %p200, %s20, 1
        %s202 = smul.addr %s201, 8
        %s203 = scalar_lea.vmem %s0, %s202
        %p204 = pneg %p41
        %p205 = pneg %p38
        %p206 = pneg %p62
        %p207 = pneg %p59
        %p208 = pneg %p83
        %p209 = pneg %p80
        %p210 = pneg %p104
        %p211 = pneg %p101
        %p212 = pneg %p130
        %p213 = pneg %p127
        %s214 = sand.u32 %s117, 1
        %s215 = scalar_lea.sflag [#allocation4], %s214
        %s216 = sand.u32 %s117, 1
        %s217 = smul.addr %s216, 8
        %s218 = scalar_lea.vmem [#allocation7], %s217
        %p219 = scmp.lt.s32.totalorder %s20, 1
        %s220 = scalar_select %p219, %s20, 1
        %s221 = smul.addr %s220, 8
        %s222 = scalar_lea.vmem %s0, %s221
        %v223 = vld [vmem:[#allocation2] sm:$0xff]
        %v224 = vld [vmem:[%s222] sm:$0xff]
        %v225 = vlaneseq
        %v226 = vand.u32 %v225, 127
        %227 = vset.pattern.permute.xlu0 0
        %228 = vperm.xlu0 %227, %v224
        %v229 = vpop.permute.xlu0 %228
        %vm230 = vcmp.eq.s32.totalorder %v226, %v229
        %v231 = vsel %vm230, 1, 0
        %v232 = vcvt.s32.f32 %v231
        %vm233 = vcmask 64512
        %v235 = vsel %vm233, %v232, 0
        %237 = vmatpush.msra.mxu0 0.0
        %238 = vmatpush.msra.mxu0 0.0
        %239 = vmatpush.msra.mxu0 0.0
        %240 = vmatpush.msra.mxu0 0.0
        %241 = vmatpush.msra.mxu0 0.0
        %242 = vmatpush.msra.mxu0 0.0
        %243 = vmatpush.msra.mxu0 0.0
        %244 = vmatpush.msra.mxu0 0.0
        %245 = vmatpush.msra.mxu0 0.0
        %246 = vmatpush.msra.mxu0 0.0
        %247 = vmatpush.msra.mxu0 0.0
        %248 = vmatpush.msra.mxu0 0.0
        %249 = vmatpush.msra.mxu0 0.0
        %250 = vmatpush.msra.mxu0 0.0
        %251 = vmatpush.msra.mxu0 0.0
        %252 = vmatpush.msra.mxu0 %v223
        %253 = vmatmul.f32.gmra.mxu0 %v235
        %v254 = vpop.f32.mrf.mxu0
        %v255 = vadd.f32 0.0, %v254
        %256 = vdwg.mxu0
        %v257 = vld [vmem:[%s2] sm:$0xff]
        %v258 = vld [vmem:[%s2 + $0x8] sm:$0xff]
        %259 = vset.pattern.permute.xlu0 1
        %260 = vperm.xlu0 %259, %v224
        %v261 = vpop.permute.xlu0 %260
        %vm262 = vcmp.eq.s32.totalorder %v226, %v261
        %v263 = vsel %vm262, 1, 0
        %v264 = vcvt.s32.f32 %v263
        %v266 = vsel %vm233, %v264, 0
        %268 = vmatpush.msra.mxu0 0.0
        %269 = vmatpush.msra.mxu0 0.0
        %270 = vmatpush.msra.mxu0 0.0
        %271 = vmatpush.msra.mxu0 0.0
        %272 = vmatpush.msra.mxu0 0.0
        %273 = vmatpush.msra.mxu0 0.0
        %274 = vmatpush.msra.mxu0 0.0
        %275 = vmatpush.msra.mxu0 0.0
        %276 = vmatpush.msra.mxu0 0.0
        %277 = vmatpush.msra.mxu0 0.0
        %278 = vmatpush.msra.mxu0 0.0
        %279 = vmatpush.msra.mxu0 0.0
        %280 = vmatpush.msra.mxu0 0.0
        %281 = vmatpush.msra.mxu0 0.0
        %282 = vmatpush.msra.mxu0 0.0
        %283 = vmatpush.msra.mxu0 %v257
        %284 = vmatmul.f32.gmra.mxu0 %v266
        %v285 = vpop.f32.mrf.mxu0
        %v286 = vadd.f32 0.0, %v285
        %287 = vdwg.mxu0
        %288 = vmatpush.msra.mxu0 0.0
        %289 = vmatpush.msra.mxu0 0.0
        %290 = vmatpush.msra.mxu0 0.0
        %291 = vmatpush.msra.mxu0 0.0
        %292 = vmatpush.msra.mxu0 0.0
        %293 = vmatpush.msra.mxu0 0.0
        %294 = vmatpush.msra.mxu0 0.0
        %295 = vmatpush.msra.mxu0 0.0
        %296 = vmatpush.msra.mxu0 0.0
        %297 = vmatpush.msra.mxu0 0.0
        %298 = vmatpush.msra.mxu0 0.0
        %299 = vmatpush.msra.mxu0 0.0
        %300 = vmatpush.msra.mxu0 0.0
        %301 = vmatpush.msra.mxu0 0.0
        %302 = vmatpush.msra.mxu0 0.0
        %303 = vmatpush.msra.mxu0 %v258
        %304 = vmatmul.f32.gmra.mxu0 %v266
        %v305 = vpop.f32.mrf.mxu0
        %v306 = vadd.f32 0.0, %v305
        %307 = vdwg.mxu0
        %309 = vset.pattern.permute.xlu0 0
        %310 = vperm.xlu0 %309, %v255
        %v311 = vpop.permute.xlu0 %310
        %v313 = vmul.f32 %v311, %v286
        %314 = vset.pattern.permute.xlu0 1
        %315 = vperm.xlu0 %314, %v255
        %v316 = vpop.permute.xlu0 %315
        %v318 = vmul.f32 %v316, %v286
        %320 = vrot.lane.b32.xlu0 %v318, 96
        %v321 = vpop.permute.xlu0 %320
        %v323 = vadd.f32 %v313, %v321
        %324 = vset.pattern.permute.xlu0 2
        %325 = vperm.xlu0 %324, %v255
        %v326 = vpop.permute.xlu0 %325
        %v328 = vmul.f32 %v326, %v286
        %330 = vrot.lane.b32.xlu0 %v328, 64
        %v331 = vpop.permute.xlu0 %330
        %v333 = vadd.f32 %v323, %v331
        %334 = vset.pattern.permute.xlu0 3
        %335 = vperm.xlu0 %334, %v255
        %v336 = vpop.permute.xlu0 %335
        %v338 = vmul.f32 %v336, %v286
        %340 = vrot.lane.b32.xlu0 %v338, 32
        %v341 = vpop.permute.xlu0 %340
        %v343 = vadd.f32 %v333, %v341
        %344 = vset.pattern.permute.xlu0 4
        %345 = vperm.xlu0 %344, %v255
        %v346 = vpop.permute.xlu0 %345
        %v348 = vmul.f32 %v346, %v306
        %v349 = vadd.f32 %v343, %v348
        %350 = vset.pattern.permute.xlu0 5
        %351 = vperm.xlu0 %350, %v255
        %v352 = vpop.permute.xlu0 %351
        %v354 = vmul.f32 %v352, %v306
        %356 = vrot.lane.b32.xlu0 %v354, 96
        %v357 = vpop.permute.xlu0 %356
        %v359 = vadd.f32 %v349, %v357
        %360 = vset.pattern.permute.xlu0 6
        %361 = vperm.xlu0 %360, %v255
        %v362 = vpop.permute.xlu0 %361
        %v364 = vmul.f32 %v362, %v306
        %366 = vrot.lane.b32.xlu0 %v364, 64
        %v367 = vpop.permute.xlu0 %366
        %v369 = vadd.f32 %v359, %v367
        %370 = vset.pattern.permute.xlu0 7
        %371 = vperm.xlu0 %370, %v255
        %v372 = vpop.permute.xlu0 %371
        %v374 = vmul.f32 %v372, %v306
        %376 = vrot.lane.b32.xlu0 %v374, 32
        %v377 = vpop.permute.xlu0 %376
        %v379 = vadd.f32 %v369, %v377
        %380 = vset.pattern.permute.xlu0 8
        %381 = vperm.xlu0 %380, %v255
        %v382 = vpop.permute.xlu0 %381
        %v384 = vmul.f32 %v382, %v286
        %385 = vset.pattern.permute.xlu0 9
        %386 = vperm.xlu0 %385, %v255
        %v387 = vpop.permute.xlu0 %386
        %v389 = vmul.f32 %v387, %v286
        %391 = vrot.lane.b32.xlu0 %v389, 96
        %v392 = vpop.permute.xlu0 %391
        %v394 = vadd.f32 %v384, %v392
        %395 = vset.pattern.permute.xlu0 10
        %396 = vperm.xlu0 %395, %v255
        %v397 = vpop.permute.xlu0 %396
        %v399 = vmul.f32 %v397, %v286
        %401 = vrot.lane.b32.xlu0 %v399, 64
        %v402 = vpop.permute.xlu0 %401
        %v404 = vadd.f32 %v394, %v402
        %405 = vset.pattern.permute.xlu0 11
        %406 = vperm.xlu0 %405, %v255
        %v407 = vpop.permute.xlu0 %406
        %v409 = vmul.f32 %v407, %v286
        %411 = vrot.lane.b32.xlu0 %v409, 32
        %v412 = vpop.permute.xlu0 %411
        %v414 = vadd.f32 %v404, %v412
        %415 = vset.pattern.permute.xlu0 12
        %416 = vperm.xlu0 %415, %v255
        %v417 = vpop.permute.xlu0 %416
        %v419 = vmul.f32 %v417, %v306
        %v420 = vadd.f32 %v414, %v419
        %421 = vset.pattern.permute.xlu0 13
        %422 = vperm.xlu0 %421, %v255
        %v423 = vpop.permute.xlu0 %422
        %v425 = vmul.f32 %v423, %v306
        %427 = vrot.lane.b32.xlu0 %v425, 96
        %v428 = vpop.permute.xlu0 %427
        %v430 = vadd.f32 %v420, %v428
        %431 = vset.pattern.permute.xlu0 14
        %432 = vperm.xlu0 %431, %v255
        %v433 = vpop.permute.xlu0 %432
        %v435 = vmul.f32 %v433, %v306
        %437 = vrot.lane.b32.xlu0 %v435, 64
        %v438 = vpop.permute.xlu0 %437
        %v440 = vadd.f32 %v430, %v438
        %441 = vset.pattern.permute.xlu0 15
        %442 = vperm.xlu0 %441, %v255
        %v443 = vpop.permute.xlu0 %442
        %v445 = vmul.f32 %v443, %v306
        %447 = vrot.lane.b32.xlu0 %v445, 32
        %v448 = vpop.permute.xlu0 %447
        %v450 = vadd.f32 %v440, %v448
        %452 = vrot.lane.b32.xlu0 %v450, 32
        %v453 = vpop.permute.xlu0 %452
        %vm455 = vcmask 261120
        %v456 = vsel %vm455, %v379, %v453
        %v457 = vld [vmem:[#allocation5] sm:$0xff]
        %458 = vset.pattern.permute.xlu0 2
        %459 = vperm.xlu0 %458, %v224
        %v460 = vpop.permute.xlu0 %459
        %vm461 = vcmp.eq.s32.totalorder %v226, %v460
        %v462 = vsel %vm461, 1, 0
        %v463 = vcvt.s32.f32 %v462
        %v465 = vsel %vm233, %v463, 0
        %467 = vmatpush.msra.mxu0 0.0
        %468 = vmatpush.msra.mxu0 0.0
        %469 = vmatpush.msra.mxu0 0.0
        %470 = vmatpush.msra.mxu0 0.0
        %471 = vmatpush.msra.mxu0 0.0
        %472 = vmatpush.msra.mxu0 0.0
        %473 = vmatpush.msra.mxu0 0.0
        %474 = vmatpush.msra.mxu0 0.0
        %475 = vmatpush.msra.mxu0 0.0
        %476 = vmatpush.msra.mxu0 0.0
        %477 = vmatpush.msra.mxu0 0.0
        %478 = vmatpush.msra.mxu0 0.0
        %479 = vmatpush.msra.mxu0 0.0
        %480 = vmatpush.msra.mxu0 0.0
        %481 = vmatpush.msra.mxu0 0.0
        %482 = vmatpush.msra.mxu0 %v457
        %483 = vmatmul.f32.gmra.mxu0 %v465
        %v484 = vpop.f32.mrf.mxu0
        %v485 = vadd.f32 0.0, %v484
        %486 = vdwg.mxu0
        %488 = vset.pattern.permute.xlu0 0
        %489 = vperm.xlu0 %488, %v456
        %v490 = vpop.permute.xlu0 %489
        %v492 = vmul.f32 %v490, %v485
        %493 = vset.pattern.permute.xlu0 1
        %494 = vperm.xlu0 %493, %v456
        %v495 = vpop.permute.xlu0 %494
        %v497 = vmul.f32 %v495, %v485
        %499 = vrot.lane.b32.xlu0 %v497, 124
        %v500 = vpop.permute.xlu0 %499
        %v502 = vadd.f32 %v492, %v500
        %503 = vset.pattern.permute.xlu0 2
        %504 = vperm.xlu0 %503, %v456
        %v505 = vpop.permute.xlu0 %504
        %v507 = vmul.f32 %v505, %v485
        %509 = vrot.lane.b32.xlu0 %v507, 120
        %v510 = vpop.permute.xlu0 %509
        %v512 = vadd.f32 %v502, %v510
        %513 = vset.pattern.permute.xlu0 3
        %514 = vperm.xlu0 %513, %v456
        %v515 = vpop.permute.xlu0 %514
        %v517 = vmul.f32 %v515, %v485
        %519 = vrot.lane.b32.xlu0 %v517, 116
        %v520 = vpop.permute.xlu0 %519
        %v522 = vadd.f32 %v512, %v520
        %523 = vset.pattern.permute.xlu0 4
        %524 = vperm.xlu0 %523, %v456
        %v525 = vpop.permute.xlu0 %524
        %v527 = vmul.f32 %v525, %v485
        %529 = vrot.lane.b32.xlu0 %v527, 112
        %v530 = vpop.permute.xlu0 %529
        %v532 = vadd.f32 %v522, %v530
        %533 = vset.pattern.permute.xlu0 5
        %534 = vperm.xlu0 %533, %v456
        %v535 = vpop.permute.xlu0 %534
        %v537 = vmul.f32 %v535, %v485
        %539 = vrot.lane.b32.xlu0 %v537, 108
        %v540 = vpop.permute.xlu0 %539
        %v542 = vadd.f32 %v532, %v540
        %543 = vset.pattern.permute.xlu0 6
        %544 = vperm.xlu0 %543, %v456
        %v545 = vpop.permute.xlu0 %544
        %v547 = vmul.f32 %v545, %v485
        %549 = vrot.lane.b32.xlu0 %v547, 104
        %v550 = vpop.permute.xlu0 %549
        %v552 = vadd.f32 %v542, %v550
        %553 = vset.pattern.permute.xlu0 7
        %554 = vperm.xlu0 %553, %v456
        %v555 = vpop.permute.xlu0 %554
        %v557 = vmul.f32 %v555, %v485
        %559 = vrot.lane.b32.xlu0 %v557, 100
        %v560 = vpop.permute.xlu0 %559
        %v562 = vadd.f32 %v552, %v560
        %563 = vset.pattern.permute.xlu0 8
        %564 = vperm.xlu0 %563, %v456
        %v565 = vpop.permute.xlu0 %564
        %v567 = vmul.f32 %v565, %v485
        %568 = vset.pattern.permute.xlu0 9
        %569 = vperm.xlu0 %568, %v456
        %v570 = vpop.permute.xlu0 %569
        %v572 = vmul.f32 %v570, %v485
        %574 = vrot.lane.b32.xlu0 %v572, 124
        %v575 = vpop.permute.xlu0 %574
        %v577 = vadd.f32 %v567, %v575
        %578 = vset.pattern.permute.xlu0 10
        %579 = vperm.xlu0 %578, %v456
        %v580 = vpop.permute.xlu0 %579
        %v582 = vmul.f32 %v580, %v485
        %584 = vrot.lane.b32.xlu0 %v582, 120
        %v585 = vpop.permute.xlu0 %584
        %v587 = vadd.f32 %v577, %v585
        %588 = vset.pattern.permute.xlu0 11
        %589 = vperm.xlu0 %588, %v456
        %v590 = vpop.permute.xlu0 %589
        %v592 = vmul.f32 %v590, %v485
        %594 = vrot.lane.b32.xlu0 %v592, 116
        %v595 = vpop.permute.xlu0 %594
        %v597 = vadd.f32 %v587, %v595
        %598 = vset.pattern.permute.xlu0 12
        %599 = vperm.xlu0 %598, %v456
        %v600 = vpop.permute.xlu0 %599
        %v602 = vmul.f32 %v600, %v485
        %604 = vrot.lane.b32.xlu0 %v602, 112
        %v605 = vpop.permute.xlu0 %604
        %v607 = vadd.f32 %v597, %v605
        %608 = vset.pattern.permute.xlu0 13
        %609 = vperm.xlu0 %608, %v456
        %v610 = vpop.permute.xlu0 %609
        %v612 = vmul.f32 %v610, %v485
        %614 = vrot.lane.b32.xlu0 %v612, 108
        %v615 = vpop.permute.xlu0 %614
        %v617 = vadd.f32 %v607, %v615
        %618 = vset.pattern.permute.xlu0 14
        %619 = vperm.xlu0 %618, %v456
        %v620 = vpop.permute.xlu0 %619
        %v622 = vmul.f32 %v620, %v485
        %624 = vrot.lane.b32.xlu0 %v622, 104
        %v625 = vpop.permute.xlu0 %624
        %v627 = vadd.f32 %v617, %v625
        %628 = vset.pattern.permute.xlu0 15
        %629 = vperm.xlu0 %628, %v456
        %v630 = vpop.permute.xlu0 %629
        %v632 = vmul.f32 %v630, %v485
        %634 = vrot.lane.b32.xlu0 %v632, 100
        %v635 = vpop.permute.xlu0 %634
        %v637 = vadd.f32 %v627, %v635
        %638 = vset.pattern.permute.xlu0 16
        %639 = vperm.xlu0 %638, %v456
        %v640 = vpop.permute.xlu0 %639
        %v642 = vmul.f32 %v640, %v485
        %643 = vset.pattern.permute.xlu0 17
        %644 = vperm.xlu0 %643, %v456
        %v645 = vpop.permute.xlu0 %644
        %v647 = vmul.f32 %v645, %v485
        %649 = vrot.lane.b32.xlu0 %v647, 124
        %v650 = vpop.permute.xlu0 %649
        %v652 = vadd.f32 %v642, %v650
        %653 = vset.pattern.permute.xlu0 18
        %654 = vperm.xlu0 %653, %v456
        %v655 = vpop.permute.xlu0 %654
        %v657 = vmul.f32 %v655, %v485
        %659 = vrot.lane.b32.xlu0 %v657, 120
        %v660 = vpop.permute.xlu0 %659
        %v662 = vadd.f32 %v652, %v660
        %663 = vset.pattern.permute.xlu0 19
        %664 = vperm.xlu0 %663, %v456
        %v665 = vpop.permute.xlu0 %664
        %v667 = vmul.f32 %v665, %v485
        %669 = vrot.lane.b32.xlu0 %v667, 116
        %v670 = vpop.permute.xlu0 %669
        %v672 = vadd.f32 %v662, %v670
        %673 = vset.pattern.permute.xlu0 20
        %674 = vperm.xlu0 %673, %v456
        %v675 = vpop.permute.xlu0 %674
        %v677 = vmul.f32 %v675, %v485
        %679 = vrot.lane.b32.xlu0 %v677, 112
        %v680 = vpop.permute.xlu0 %679
        %v682 = vadd.f32 %v672, %v680
        %683 = vset.pattern.permute.xlu0 21
        %684 = vperm.xlu0 %683, %v456
        %v685 = vpop.permute.xlu0 %684
        %v687 = vmul.f32 %v685, %v485
        %689 = vrot.lane.b32.xlu0 %v687, 108
        %v690 = vpop.permute.xlu0 %689
        %v692 = vadd.f32 %v682, %v690
        %693 = vset.pattern.permute.xlu0 22
        %694 = vperm.xlu0 %693, %v456
        %v695 = vpop.permute.xlu0 %694
        %v697 = vmul.f32 %v695, %v485
        %699 = vrot.lane.b32.xlu0 %v697, 104
        %v700 = vpop.permute.xlu0 %699
        %v702 = vadd.f32 %v692, %v700
        %703 = vset.pattern.permute.xlu0 23
        %704 = vperm.xlu0 %703, %v456
        %v705 = vpop.permute.xlu0 %704
        %v707 = vmul.f32 %v705, %v485
        %709 = vrot.lane.b32.xlu0 %v707, 100
        %v710 = vpop.permute.xlu0 %709
        %v712 = vadd.f32 %v702, %v710
        %713 = vset.pattern.permute.xlu0 24
        %714 = vperm.xlu0 %713, %v456
        %v715 = vpop.permute.xlu0 %714
        %v717 = vmul.f32 %v715, %v485
        %718 = vset.pattern.permute.xlu0 25
        %719 = vperm.xlu0 %718, %v456
        %v720 = vpop.permute.xlu0 %719
        %v722 = vmul.f32 %v720, %v485
        %724 = vrot.lane.b32.xlu0 %v722, 124
        %v725 = vpop.permute.xlu0 %724
        %v727 = vadd.f32 %v717, %v725
        %728 = vset.pattern.permute.xlu0 26
        %729 = vperm.xlu0 %728, %v456
        %v730 = vpop.permute.xlu0 %729
        %v732 = vmul.f32 %v730, %v485
        %734 = vrot.lane.b32.xlu0 %v732, 120
        %v735 = vpop.permute.xlu0 %734
        %v737 = vadd.f32 %v727, %v735
        %738 = vset.pattern.permute.xlu0 27
        %739 = vperm.xlu0 %738, %v456
        %v740 = vpop.permute.xlu0 %739
        %v742 = vmul.f32 %v740, %v485
        %744 = vrot.lane.b32.xlu0 %v742, 116
        %v745 = vpop.permute.xlu0 %744
        %v747 = vadd.f32 %v737, %v745
        %748 = vset.pattern.permute.xlu0 28
        %749 = vperm.xlu0 %748, %v456
        %v750 = vpop.permute.xlu0 %749
        %v752 = vmul.f32 %v750, %v485
        %754 = vrot.lane.b32.xlu0 %v752, 112
        %v755 = vpop.permute.xlu0 %754
        %v757 = vadd.f32 %v747, %v755
        %758 = vset.pattern.permute.xlu0 29
        %759 = vperm.xlu0 %758, %v456
        %v760 = vpop.permute.xlu0 %759
        %v762 = vmul.f32 %v760, %v485
        %764 = vrot.lane.b32.xlu0 %v762, 108
        %v765 = vpop.permute.xlu0 %764
        %v767 = vadd.f32 %v757, %v765
        %768 = vset.pattern.permute.xlu0 30
        %769 = vperm.xlu0 %768, %v456
        %v770 = vpop.permute.xlu0 %769
        %v772 = vmul.f32 %v770, %v485
        %774 = vrot.lane.b32.xlu0 %v772, 104
        %v775 = vpop.permute.xlu0 %774
        %v777 = vadd.f32 %v767, %v775
        %778 = vset.pattern.permute.xlu0 31
        %779 = vperm.xlu0 %778, %v456
        %v780 = vpop.permute.xlu0 %779
        %v782 = vmul.f32 %v780, %v485
        %784 = vrot.lane.b32.xlu0 %v782, 100
        %v785 = vpop.permute.xlu0 %784
        %v787 = vadd.f32 %v777, %v785
        %788 = vset.pattern.permute.xlu0 32
        %789 = vperm.xlu0 %788, %v456
        %v790 = vpop.permute.xlu0 %789
        %v792 = vmul.f32 %v790, %v485
        %793 = vset.pattern.permute.xlu0 33
        %794 = vperm.xlu0 %793, %v456
        %v795 = vpop.permute.xlu0 %794
        %v797 = vmul.f32 %v795, %v485
        %799 = vrot.lane.b32.xlu0 %v797, 124
        %v800 = vpop.permute.xlu0 %799
        %v802 = vadd.f32 %v792, %v800
        %803 = vset.pattern.permute.xlu0 34
        %804 = vperm.xlu0 %803, %v456
        %v805 = vpop.permute.xlu0 %804
        %v807 = vmul.f32 %v805, %v485
        %809 = vrot.lane.b32.xlu0 %v807, 120
        %v810 = vpop.permute.xlu0 %809
        %v812 = vadd.f32 %v802, %v810
        %813 = vset.pattern.permute.xlu0 35
        %814 = vperm.xlu0 %813, %v456
        %v815 = vpop.permute.xlu0 %814
        %v817 = vmul.f32 %v815, %v485
        %819 = vrot.lane.b32.xlu0 %v817, 116
        %v820 = vpop.permute.xlu0 %819
        %v822 = vadd.f32 %v812, %v820
        %823 = vset.pattern.permute.xlu0 36
        %824 = vperm.xlu0 %823, %v456
        %v825 = vpop.permute.xlu0 %824
        %v827 = vmul.f32 %v825, %v485
        %829 = vrot.lane.b32.xlu0 %v827, 112
        %v830 = vpop.permute.xlu0 %829
        %v832 = vadd.f32 %v822, %v830
        %833 = vset.pattern.permute.xlu0 37
        %834 = vperm.xlu0 %833, %v456
        %v835 = vpop.permute.xlu0 %834
        %v837 = vmul.f32 %v835, %v485
        %839 = vrot.lane.b32.xlu0 %v837, 108
        %v840 = vpop.permute.xlu0 %839
        %v842 = vadd.f32 %v832, %v840
        %843 = vset.pattern.permute.xlu0 38
        %844 = vperm.xlu0 %843, %v456
        %v845 = vpop.permute.xlu0 %844
        %v847 = vmul.f32 %v845, %v485
        %849 = vrot.lane.b32.xlu0 %v847, 104
        %v850 = vpop.permute.xlu0 %849
        %v852 = vadd.f32 %v842, %v850
        %853 = vset.pattern.permute.xlu0 39
        %854 = vperm.xlu0 %853, %v456
        %v855 = vpop.permute.xlu0 %854
        %v857 = vmul.f32 %v855, %v485
        %859 = vrot.lane.b32.xlu0 %v857, 100
        %v860 = vpop.permute.xlu0 %859
        %v862 = vadd.f32 %v852, %v860
        %863 = vset.pattern.permute.xlu0 40
        %864 = vperm.xlu0 %863, %v456
        %v865 = vpop.permute.xlu0 %864
        %v867 = vmul.f32 %v865, %v485
        %868 = vset.pattern.permute.xlu0 41
        %869 = vperm.xlu0 %868, %v456
        %v870 = vpop.permute.xlu0 %869
        %v872 = vmul.f32 %v870, %v485
        %874 = vrot.lane.b32.xlu0 %v872, 124
        %v875 = vpop.permute.xlu0 %874
        %v877 = vadd.f32 %v867, %v875
        %878 = vset.pattern.permute.xlu0 42
        %879 = vperm.xlu0 %878, %v456
        %v880 = vpop.permute.xlu0 %879
        %v882 = vmul.f32 %v880, %v485
        %884 = vrot.lane.b32.xlu0 %v882, 120
        %v885 = vpop.permute.xlu0 %884
        %v887 = vadd.f32 %v877, %v885
        %888 = vset.pattern.permute.xlu0 43
        %889 = vperm.xlu0 %888, %v456
        %v890 = vpop.permute.xlu0 %889
        %v892 = vmul.f32 %v890, %v485
        %894 = vrot.lane.b32.xlu0 %v892, 116
        %v895 = vpop.permute.xlu0 %894
        %v897 = vadd.f32 %v887, %v895
        %898 = vset.pattern.permute.xlu0 44
        %899 = vperm.xlu0 %898, %v456
        %v900 = vpop.permute.xlu0 %899
        %v902 = vmul.f32 %v900, %v485
        %904 = vrot.lane.b32.xlu0 %v902, 112
        %v905 = vpop.permute.xlu0 %904
        %v907 = vadd.f32 %v897, %v905
        %908 = vset.pattern.permute.xlu0 45
        %909 = vperm.xlu0 %908, %v456
        %v910 = vpop.permute.xlu0 %909
        %v912 = vmul.f32 %v910, %v485
        %914 = vrot.lane.b32.xlu0 %v912, 108
        %v915 = vpop.permute.xlu0 %914
        %v917 = vadd.f32 %v907, %v915
        %918 = vset.pattern.permute.xlu0 46
        %919 = vperm.xlu0 %918, %v456
        %v920 = vpop.permute.xlu0 %919
        %v922 = vmul.f32 %v920, %v485
        %924 = vrot.lane.b32.xlu0 %v922, 104
        %v925 = vpop.permute.xlu0 %924
        %v927 = vadd.f32 %v917, %v925
        %928 = vset.pattern.permute.xlu0 47
        %929 = vperm.xlu0 %928, %v456
        %v930 = vpop.permute.xlu0 %929
        %v932 = vmul.f32 %v930, %v485
        %934 = vrot.lane.b32.xlu0 %v932, 100
        %v935 = vpop.permute.xlu0 %934
        %v937 = vadd.f32 %v927, %v935
        %938 = vset.pattern.permute.xlu0 48
        %939 = vperm.xlu0 %938, %v456
        %v940 = vpop.permute.xlu0 %939
        %v942 = vmul.f32 %v940, %v485
        %943 = vset.pattern.permute.xlu0 49
        %944 = vperm.xlu0 %943, %v456
        %v945 = vpop.permute.xlu0 %944
        %v947 = vmul.f32 %v945, %v485
        %949 = vrot.lane.b32.xlu0 %v947, 124
        %v950 = vpop.permute.xlu0 %949
        %v952 = vadd.f32 %v942, %v950
        %953 = vset.pattern.permute.xlu0 50
        %954 = vperm.xlu0 %953, %v456
        %v955 = vpop.permute.xlu0 %954
        %v957 = vmul.f32 %v955, %v485
        %959 = vrot.lane.b32.xlu0 %v957, 120
        %v960 = vpop.permute.xlu0 %959
        %v962 = vadd.f32 %v952, %v960
        %963 = vset.pattern.permute.xlu0 51
        %964 = vperm.xlu0 %963, %v456
        %v965 = vpop.permute.xlu0 %964
        %v967 = vmul.f32 %v965, %v485
        %969 = vrot.lane.b32.xlu0 %v967, 116
        %v970 = vpop.permute.xlu0 %969
        %v972 = vadd.f32 %v962, %v970
        %973 = vset.pattern.permute.xlu0 52
        %974 = vperm.xlu0 %973, %v456
        %v975 = vpop.permute.xlu0 %974
        %v977 = vmul.f32 %v975, %v485
        %979 = vrot.lane.b32.xlu0 %v977, 112
        %v980 = vpop.permute.xlu0 %979
        %v982 = vadd.f32 %v972, %v980
        %983 = vset.pattern.permute.xlu0 53
        %984 = vperm.xlu0 %983, %v456
        %v985 = vpop.permute.xlu0 %984
        %v987 = vmul.f32 %v985, %v485
        %989 = vrot.lane.b32.xlu0 %v987, 108
        %v990 = vpop.permute.xlu0 %989
        %v992 = vadd.f32 %v982, %v990
        %993 = vset.pattern.permute.xlu0 54
        %994 = vperm.xlu0 %993, %v456
        %v995 = vpop.permute.xlu0 %994
        %v997 = vmul.f32 %v995, %v485
        %999 = vrot.lane.b32.xlu0 %v997, 104
        %v1000 = vpop.permute.xlu0 %999
        %v1002 = vadd.f32 %v992, %v1000
        %1003 = vset.pattern.permute.xlu0 55
        %1004 = vperm.xlu0 %1003, %v456
        %v1005 = vpop.permute.xlu0 %1004
        %v1007 = vmul.f32 %v1005, %v485
        %1009 = vrot.lane.b32.xlu0 %v1007, 100
        %v1010 = vpop.permute.xlu0 %1009
        %v1012 = vadd.f32 %v1002, %v1010
        %1013 = vset.pattern.permute.xlu0 56
        %1014 = vperm.xlu0 %1013, %v456
        %v1015 = vpop.permute.xlu0 %1014
        %v1017 = vmul.f32 %v1015, %v485
        %1018 = vset.pattern.permute.xlu0 57
        %1019 = vperm.xlu0 %1018, %v456
        %v1020 = vpop.permute.xlu0 %1019
        %v1022 = vmul.f32 %v1020, %v485
        %1024 = vrot.lane.b32.xlu0 %v1022, 124
        %v1025 = vpop.permute.xlu0 %1024
        %v1027 = vadd.f32 %v1017, %v1025
        %1028 = vset.pattern.permute.xlu0 58
        %1029 = vperm.xlu0 %1028, %v456
        %v1030 = vpop.permute.xlu0 %1029
        %v1032 = vmul.f32 %v1030, %v485
        %1034 = vrot.lane.b32.xlu0 %v1032, 120
        %v1035 = vpop.permute.xlu0 %1034
        %v1037 = vadd.f32 %v1027, %v1035
        %1038 = vset.pattern.permute.xlu0 59
        %1039 = vperm.xlu0 %1038, %v456
        %v1040 = vpop.permute.xlu0 %1039
        %v1042 = vmul.f32 %v1040, %v485
        %1044 = vrot.lane.b32.xlu0 %v1042, 116
        %v1045 = vpop.permute.xlu0 %1044
        %v1047 = vadd.f32 %v1037, %v1045
        %1048 = vset.pattern.permute.xlu0 60
        %1049 = vperm.xlu0 %1048, %v456
        %v1050 = vpop.permute.xlu0 %1049
        %v1052 = vmul.f32 %v1050, %v485
        %1054 = vrot.lane.b32.xlu0 %v1052, 112
        %v1055 = vpop.permute.xlu0 %1054
        %v1057 = vadd.f32 %v1047, %v1055
        %1058 = vset.pattern.permute.xlu0 61
        %1059 = vperm.xlu0 %1058, %v456
        %v1060 = vpop.permute.xlu0 %1059
        %v1062 = vmul.f32 %v1060, %v485
        %1064 = vrot.lane.b32.xlu0 %v1062, 108
        %v1065 = vpop.permute.xlu0 %1064
        %v1067 = vadd.f32 %v1057, %v1065
        %1068 = vset.pattern.permute.xlu0 62
        %1069 = vperm.xlu0 %1068, %v456
        %v1070 = vpop.permute.xlu0 %1069
        %v1072 = vmul.f32 %v1070, %v485
        %1074 = vrot.lane.b32.xlu0 %v1072, 104
        %v1075 = vpop.permute.xlu0 %1074
        %v1077 = vadd.f32 %v1067, %v1075
        %1078 = vset.pattern.permute.xlu0 63
        %1079 = vperm.xlu0 %1078, %v456
        %v1080 = vpop.permute.xlu0 %1079
        %v1082 = vmul.f32 %v1080, %v485
        %1084 = vrot.lane.b32.xlu0 %v1082, 100
        %v1085 = vpop.permute.xlu0 %1084
        %v1087 = vadd.f32 %v1077, %v1085
        %1089 = vrot.lane.b32.xlu0 %v637, 4
        %v1090 = vpop.permute.xlu0 %1089
        %1093 = vrot.lane.b32.xlu0 %v712, 8
        %v1094 = vpop.permute.xlu0 %1093
        %1097 = vrot.lane.b32.xlu0 %v787, 12
        %v1098 = vpop.permute.xlu0 %1097
        %1101 = vrot.lane.b32.xlu0 %v862, 16
        %v1102 = vpop.permute.xlu0 %1101
        %1105 = vrot.lane.b32.xlu0 %v937, 20
        %v1106 = vpop.permute.xlu0 %1105
        %1109 = vrot.lane.b32.xlu0 %v1012, 24
        %v1110 = vpop.permute.xlu0 %1109
        %1113 = vrot.lane.b32.xlu0 %v1087, 28
        %v1114 = vpop.permute.xlu0 %1113
        %vm1116 = vcmask 31744
        %v1117 = vsel %vm1116, %v562, %v1090
        %v1118 = vsel %vm233, %v1117, %v1094
        %vm1119 = vcmask 97280
        %v1120 = vsel %vm1119, %v1118, %v1098
        %vm1121 = vcmask 130048
        %v1122 = vsel %vm1121, %v1120, %v1102
        %vm1123 = vcmask 162816
        %v1124 = vsel %vm1123, %v1122, %v1106
        %vm1125 = vcmask 195584
        %v1126 = vsel %vm1125, %v1124, %v1110
        %vm1127 = vcmask 228352
        %v1128 = vsel %vm1127, %v1126, %v1114
        %1129 = vst.msk [vmem:[%s218] sm:$0xff] %vm455, %v1128
        %s1130 = sand.u32 %s117, 1
        %s1131 = scalar_lea.sflag [#allocation4], %s1130
        %s1132 = sand.u32 %s117, 1
        %s1133 = smul.addr %s1132, 8
        %s1134 = scalar_lea.vmem [#allocation7], %s1133
        // Predicated region
        $region45: #{tpu_custom_call.1} parent=35 // pred_check
          %p1135 = pneg %p127
        $region46: #{tpu_custom_call.1} parent=35 // pred_check_branch
          %1137 = sbr.rel (%p1135) target = $region48
        $region47: #{tpu_custom_call.1} parent=35 // pred_region
          %1139 = vsyncadd %s1131, 0
          %s1140 = smul.addr %s20, 8
          %s1141 = scalar_lea.hbm %s4, %s1140
          %s1143 = sshll.u32 %s1134, 4
          %s1144 = int_to_ptr.vmem [resolvable:$true] %s1143
          %s1145 = sshll.u32 %s1141, 4
          %s1146 = int_to_ptr.hbm [resolvable:$true] %s1145
          %1148 = dma.vmem_to_hbm [thread:$0]  %s1144, 128, %s1146, %s1131
        $region48: #{tpu_custom_call.1} parent=35 // pred_fallthru
          _
      $region36: #{tpu_custom_call.1} parent=5 // pred_fallthru
        _
      %p1149 = scmp.le.s32.totalorder 2, %s15
      // Predicated region
      $region49: #{tpu_custom_call.1} parent=5 // pred_check
        %p1150 = pneg %p1149
      $region50: #{tpu_custom_call.1} parent=5 // pred_check_branch
        %1152 = sbr.rel (%p1150) target = $region52
      $region51: #{tpu_custom_call.1} parent=5 // pred_region
        %s1153 = ssub.s32 %s15, 2
        // Predicated region
        $region53: #{tpu_custom_call.1} parent=51 // pred_check
          %p1154 = pneg %p133
        $region54: #{tpu_custom_call.1} parent=51 // pred_check_branch
          %1156 = sbr.rel (%p1154) target = $region56
        $region55: #{tpu_custom_call.1} parent=51 // pred_region
          %s1157 = sand.u32 %s118, 1
          %s1158 = scalar_lea.sflag [#allocation4], %s1157
          %s1159 = sand.u32 %s118, 1
          %s1160 = smul.addr %s1159, 8
          %s1161 = scalar_lea.vmem [#allocation7], %s1160
          %1163 = dma.done %s1158, 128
        $region56: #{tpu_custom_call.1} parent=51 // pred_fallthru
          _
      $region52: #{tpu_custom_call.1} parent=5 // pred_fallthru
        _
    $region6: #{tpu_custom_call.1} parent=1 // loop_footer
      %s19 = sadd.s32 1, %s15
    $region7: #{tpu_custom_call.1} parent=1 // loop_footer_branch
      %14 = sbr.rel target = $region3
    $region8: #{tpu_custom_call.1} parent=1 // loop_exit
      _
    %1164 = vsyncpa [#allocation3], 1
    %s1165 = scalar_lea.sflag [#allocation3], 1
    %1166 = vsyncpa %s1165, 1
    %1167 = vsyncpa [#allocation6], 1
    %1168 = vsyncpa [#allocation4], 1
    %s1169 = scalar_lea.sflag [#allocation4], 1
    %1170 = vsyncpa %s1169, 1

</llo_original>
